<compile_context>
chip_gen: v6e
topology: v6e:2x2x1
jax: 0.10.0
libtpu: 0.0.40
codegen_flags: <defaults>
</compile_context>

<pallas_src>
import functools
import math

import jax
import jax.numpy as jnp
from jax.experimental import pallas as pl
from jax.experimental.pallas import tpu as pltpu


def _norm_conv_block_kernel(x_ref, w_ref, b_ref, o_ref, *, K, eps, neg_slope):
    # x_ref: (1, C, Hp, Wp)  one zero-padded batch sample (VMEM)
    # w_ref: (O*C*K*K,)      pre-scaled conv weights (SMEM, scalar reads)
    # b_ref: (O,)            wscale bias (SMEM)
    # o_ref: (1, O, Ho, Wo)  output sample (VMEM)
    _, C, Hp, Wp = x_ref.shape
    _, O, Ho, Wo = o_ref.shape

    x = x_ref[0].astype(jnp.float32)                       # (C, Hp, Wp)

    # PixelNormLayer: x / sqrt(mean(x**2, dim=channel) + 1e-8)
    # (channel axis is the leading axis -> cheap vector adds, lanes stay on W)
    mean_sq = jnp.mean(x * x, axis=0, keepdims=True)       # (1, Hp, Wp)
    xn = x * jax.lax.rsqrt(mean_sq + eps)                  # (C, Hp, Wp)

    # Pre-slice the K*K shifted windows of every channel once; reuse across out-channels.
    win = [[[xn[c, kh:kh + Ho, kw:kw + Wo] for kw in range(K)]
            for kh in range(K)]
           for c in range(C)]

    # KxK conv (no bias) as VPU broadcast-FMAs with scalar weights from SMEM,
    # then fused WScale bias + LeakyReLU(0.2).
    for o in range(O):
        acc = jnp.zeros((Ho, Wo), jnp.float32)
        for c in range(C):
            for kh in range(K):
                for kw in range(K):
                    wv = w_ref[((o * C + c) * K + kh) * K + kw]
                    acc = acc + wv * win[c][kh][kw]
        acc = acc + b_ref[o]
        acc = jnp.where(acc >= 0.0, acc, neg_slope * acc)   # LeakyReLU(0.2)
        o_ref[0, o] = acc.astype(o_ref.dtype)


def norm_conv_block(x, conv_weight, wscale_bias, *, kernel_size, padding, gain=None):
    """x: (N, C, H, W). conv_weight: (O, C, K, K). wscale_bias: (O,)."""
    N, C, H, W = x.shape
    O = conv_weight.shape[0]
    K, P = kernel_size, padding
    Ho, Wo = H + 2 * P - K + 1, W + 2 * P - K + 1

    if gain is None:
        gain = math.sqrt(2.0) / K          # NormConvBlock: gain = sqrt(2) / kernel_size
    scale = gain / math.sqrt(C)            # WScaleLayer: scale = gain / sqrt(fan_in)

    # Semantic conv zero padding (one tiny pass; NOT tile padding). Pixel-norm of the
    # padded zeros is still zero, so normalising inside the kernel stays exact.
    xp = jnp.pad(x, ((0, 0), (0, 0), (P, P), (P, P))) if P > 0 else x
    Hp, Wp = H + 2 * P, W + 2 * P

    # Fold the WScale scale into the weights on the host (conv is linear).
    w_flat = (conv_weight.astype(jnp.float32) * scale).reshape(O * C * K * K)
    b = wscale_bias.astype(jnp.float32)

    kernel = functools.partial(_norm_conv_block_kernel,
                               K=K, eps=1e-8, neg_slope=0.2)

    return pl.pallas_call(
        kernel,
        out_shape=jax.ShapeDtypeStruct((N, O, Ho, Wo), x.dtype),
        grid_spec=pltpu.PrefetchScalarGridSpec(
            num_scalar_prefetch=0,
            grid=(N,),                                      # >= 2 steps -> both v7x TCs busy
            in_specs=[
                pl.BlockSpec((1, C, Hp, Wp), lambda n: (n, 0, 0, 0)),
                pl.BlockSpec(memory_space=pltpu.MemorySpace.SMEM),   # weights (scalars)
                pl.BlockSpec(memory_space=pltpu.MemorySpace.SMEM),   # bias (scalars)
            ],
            out_specs=pl.BlockSpec((1, O, Ho, Wo), lambda n: (n, 0, 0, 0)),
        ),
        compiler_params=pltpu.CompilerParams(
            dimension_semantics=("parallel",)),
    )(xp, w_flat, b)


def _reference(x, conv_weight, wscale_bias, *, kernel_size, padding, gain=None):
    # Pure-JAX reference of the PyTorch NormConvBlock.forward
    N, C, H, W = x.shape
    if gain is None:
        gain = math.sqrt(2.0) / kernel_size
    scale = gain / math.sqrt(C)
    x = x.astype(jnp.float32)
    xn = x / jnp.sqrt(jnp.mean(x * x, axis=1, keepdims=True) + 1e-8)
    y = jax.lax.conv_general_dilated(
        xn, conv_weight.astype(jnp.float32),
        window_strides=(1, 1),
        padding=[(padding, padding), (padding, padding)],
        dimension_numbers=("NCHW", "OIHW", "NCHW"))
    y = y * scale + wscale_bias.reshape(1, -1, 1, 1)
    return jnp.where(y >= 0, y, 0.2 * y)                    # LeakyReLU(0.2)


if __name__ == "__main__":
    key = jax.random.PRNGKey(0)
    k_x, k_w, k_b = jax.random.split(key, 3)

    N, C, H, W = 2, 4, 16, 16
    O, K, P = 4, 3, 1
    x = jax.random.normal(k_x, (N, C, H, W), dtype=jnp.float32)
    conv_weight = jax.random.normal(k_w, (O, C, K, K), dtype=jnp.float32) * 0.1
    wscale_bias = jax.random.normal(k_b, (O,), dtype=jnp.float32)

    out = norm_conv_block(x, conv_weight, wscale_bias, kernel_size=K, padding=P)
    out = jax.block_until_ready(out)

    ref = _reference(x, conv_weight, wscale_bias, kernel_size=K, padding=P)
    assert out.shape == (N, O, H, W), out.shape
    assert jnp.allclose(out, ref, atol=1e-4, rtol=1e-4), "mismatch vs reference"

    print("KERNEL_OK")
</pallas_src>

<mosaic_0001>
module attributes {stable_mosaic.version = 11 : i64} {
  func.func @_norm_conv_block_kernel(%arg0: i32, %arg1: memref<1x4x18x18xf32, #tpu.memory_space<vmem>>, %arg2: memref<144xf32, #tpu.memory_space<smem>>, %arg3: memref<4xf32, #tpu.memory_space<smem>>, %arg4: memref<1x4x16x16xf32, #tpu.memory_space<vmem>>) attributes {dimension_semantics = [#tpu.dimension_semantics<parallel>], iteration_bounds = array<i64: 2>, scalar_prefetch = 0 : i64, scratch_operands = 0 : i64, tpu.core_type = #tpu.core_type<tc>, window_params = [{transform_indices = @transform_0, window_bounds = array<i64: 1, 4, 18, 18>}, {transform_indices = @transform_1, window_bounds = array<i64: 144>}, {transform_indices = @transform_2, window_bounds = array<i64: 4>}, {transform_indices = @transform_3, window_bounds = array<i64: 1, 4, 16, 16>}]} {
    %c0 = arith.constant 0 : index
    %c0_0 = arith.constant 0 : index
    %c0_1 = arith.constant 0 : index
    %c0_2 = arith.constant 0 : index
    %0 = vector.load %arg1[%c0, %c0_0, %c0_1, %c0_2] : memref<1x4x18x18xf32, #tpu.memory_space<vmem>>, vector<1x4x18x18xf32>
    %1 = vector.shape_cast %0 : vector<1x4x18x18xf32> to vector<4x18x18xf32>
    %2 = arith.mulf %1, %1 : vector<4x18x18xf32>
    %cst = arith.constant dense<0.000000e+00> : vector<18x18xf32>
    %3 = vector.multi_reduction <add>, %2, %cst [0] : vector<4x18x18xf32> to vector<18x18xf32>
    %4 = vector.shape_cast %3 : vector<18x18xf32> to vector<1x18x18xf32>
    %cst_3 = arith.constant 4.000000e+00 : f32
    %5 = vector.broadcast %cst_3 : f32 to vector<1x18x18xf32>
    %6 = arith.divf %4, %5 : vector<1x18x18xf32>
    %cst_4 = arith.constant 9.99999993E-9 : f32
    %7 = vector.broadcast %cst_4 : f32 to vector<1x18x18xf32>
    %8 = arith.addf %6, %7 : vector<1x18x18xf32>
    %9 = math.rsqrt %8 : vector<1x18x18xf32>
    %10 = vector.broadcast %9 : vector<1x18x18xf32> to vector<4x18x18xf32>
    %11 = arith.mulf %1, %10 : vector<4x18x18xf32>
    %12 = vector.extract_strided_slice %11 {offsets = [0, 0, 0], sizes = [1, 16, 16], strides = [1, 1, 1]} : vector<4x18x18xf32> to vector<1x16x16xf32>
    %13 = vector.shape_cast %12 : vector<1x16x16xf32> to vector<16x16xf32>
    %14 = vector.extract_strided_slice %11 {offsets = [0, 0, 1], sizes = [1, 16, 16], strides = [1, 1, 1]} : vector<4x18x18xf32> to vector<1x16x16xf32>
    %15 = vector.shape_cast %14 : vector<1x16x16xf32> to vector<16x16xf32>
    %16 = vector.extract_strided_slice %11 {offsets = [0, 0, 2], sizes = [1, 16, 16], strides = [1, 1, 1]} : vector<4x18x18xf32> to vector<1x16x16xf32>
    %17 = vector.shape_cast %16 : vector<1x16x16xf32> to vector<16x16xf32>
    %18 = vector.extract_strided_slice %11 {offsets = [0, 1, 0], sizes = [1, 16, 16], strides = [1, 1, 1]} : vector<4x18x18xf32> to vector<1x16x16xf32>
    %19 = vector.shape_cast %18 : vector<1x16x16xf32> to vector<16x16xf32>
    %20 = vector.extract_strided_slice %11 {offsets = [0, 1, 1], sizes = [1, 16, 16], strides = [1, 1, 1]} : vector<4x18x18xf32> to vector<1x16x16xf32>
    %21 = vector.shape_cast %20 : vector<1x16x16xf32> to vector<16x16xf32>
    %22 = vector.extract_strided_slice %11 {offsets = [0, 1, 2], sizes = [1, 16, 16], strides = [1, 1, 1]} : vector<4x18x18xf32> to vector<1x16x16xf32>
    %23 = vector.shape_cast %22 : vector<1x16x16xf32> to vector<16x16xf32>
    %24 = vector.extract_strided_slice %11 {offsets = [0, 2, 0], sizes = [1, 16, 16], strides = [1, 1, 1]} : vector<4x18x18xf32> to vector<1x16x16xf32>
    %25 = vector.shape_cast %24 : vector<1x16x16xf32> to vector<16x16xf32>
    %26 = vector.extract_strided_slice %11 {offsets = [0, 2, 1], sizes = [1, 16, 16], strides = [1, 1, 1]} : vector<4x18x18xf32> to vector<1x16x16xf32>
    %27 = vector.shape_cast %26 : vector<1x16x16xf32> to vector<16x16xf32>
    %28 = vector.extract_strided_slice %11 {offsets = [0, 2, 2], sizes = [1, 16, 16], strides = [1, 1, 1]} : vector<4x18x18xf32> to vector<1x16x16xf32>
    %29 = vector.shape_cast %28 : vector<1x16x16xf32> to vector<16x16xf32>
    %30 = vector.extract_strided_slice %11 {offsets = [1, 0, 0], sizes = [1, 16, 16], strides = [1, 1, 1]} : vector<4x18x18xf32> to vector<1x16x16xf32>
    %31 = vector.shape_cast %30 : vector<1x16x16xf32> to vector<16x16xf32>
    %32 = vector.extract_strided_slice %11 {offsets = [1, 0, 1], sizes = [1, 16, 16], strides = [1, 1, 1]} : vector<4x18x18xf32> to vector<1x16x16xf32>
    %33 = vector.shape_cast %32 : vector<1x16x16xf32> to vector<16x16xf32>
    %34 = vector.extract_strided_slice %11 {offsets = [1, 0, 2], sizes = [1, 16, 16], strides = [1, 1, 1]} : vector<4x18x18xf32> to vector<1x16x16xf32>
    %35 = vector.shape_cast %34 : vector<1x16x16xf32> to vector<16x16xf32>
    %36 = vector.extract_strided_slice %11 {offsets = [1, 1, 0], sizes = [1, 16, 16], strides = [1, 1, 1]} : vector<4x18x18xf32> to vector<1x16x16xf32>
    %37 = vector.shape_cast %36 : vector<1x16x16xf32> to vector<16x16xf32>
    %38 = vector.extract_strided_slice %11 {offsets = [1, 1, 1], sizes = [1, 16, 16], strides = [1, 1, 1]} : vector<4x18x18xf32> to vector<1x16x16xf32>
    %39 = vector.shape_cast %38 : vector<1x16x16xf32> to vector<16x16xf32>
    %40 = vector.extract_strided_slice %11 {offsets = [1, 1, 2], sizes = [1, 16, 16], strides = [1, 1, 1]} : vector<4x18x18xf32> to vector<1x16x16xf32>
    %41 = vector.shape_cast %40 : vector<1x16x16xf32> to vector<16x16xf32>
    %42 = vector.extract_strided_slice %11 {offsets = [1, 2, 0], sizes = [1, 16, 16], strides = [1, 1, 1]} : vector<4x18x18xf32> to vector<1x16x16xf32>
    %43 = vector.shape_cast %42 : vector<1x16x16xf32> to vector<16x16xf32>
    %44 = vector.extract_strided_slice %11 {offsets = [1, 2, 1], sizes = [1, 16, 16], strides = [1, 1, 1]} : vector<4x18x18xf32> to vector<1x16x16xf32>
    %45 = vector.shape_cast %44 : vector<1x16x16xf32> to vector<16x16xf32>
    %46 = vector.extract_strided_slice %11 {offsets = [1, 2, 2], sizes = [1, 16, 16], strides = [1, 1, 1]} : vector<4x18x18xf32> to vector<1x16x16xf32>
    %47 = vector.shape_cast %46 : vector<1x16x16xf32> to vector<16x16xf32>
    %48 = vector.extract_strided_slice %11 {offsets = [2, 0, 0], sizes = [1, 16, 16], strides = [1, 1, 1]} : vector<4x18x18xf32> to vector<1x16x16xf32>
    %49 = vector.shape_cast %48 : vector<1x16x16xf32> to vector<16x16xf32>
    %50 = vector.extract_strided_slice %11 {offsets = [2, 0, 1], sizes = [1, 16, 16], strides = [1, 1, 1]} : vector<4x18x18xf32> to vector<1x16x16xf32>
    %51 = vector.shape_cast %50 : vector<1x16x16xf32> to vector<16x16xf32>
    %52 = vector.extract_strided_slice %11 {offsets = [2, 0, 2], sizes = [1, 16, 16], strides = [1, 1, 1]} : vector<4x18x18xf32> to vector<1x16x16xf32>
    %53 = vector.shape_cast %52 : vector<1x16x16xf32> to vector<16x16xf32>
    %54 = vector.extract_strided_slice %11 {offsets = [2, 1, 0], sizes = [1, 16, 16], strides = [1, 1, 1]} : vector<4x18x18xf32> to vector<1x16x16xf32>
    %55 = vector.shape_cast %54 : vector<1x16x16xf32> to vector<16x16xf32>
    %56 = vector.extract_strided_slice %11 {offsets = [2, 1, 1], sizes = [1, 16, 16], strides = [1, 1, 1]} : vector<4x18x18xf32> to vector<1x16x16xf32>
    %57 = vector.shape_cast %56 : vector<1x16x16xf32> to vector<16x16xf32>
    %58 = vector.extract_strided_slice %11 {offsets = [2, 1, 2], sizes = [1, 16, 16], strides = [1, 1, 1]} : vector<4x18x18xf32> to vector<1x16x16xf32>
    %59 = vector.shape_cast %58 : vector<1x16x16xf32> to vector<16x16xf32>
    %60 = vector.extract_strided_slice %11 {offsets = [2, 2, 0], sizes = [1, 16, 16], strides = [1, 1, 1]} : vector<4x18x18xf32> to vector<1x16x16xf32>
    %61 = vector.shape_cast %60 : vector<1x16x16xf32> to vector<16x16xf32>
    %62 = vector.extract_strided_slice %11 {offsets = [2, 2, 1], sizes = [1, 16, 16], strides = [1, 1, 1]} : vector<4x18x18xf32> to vector<1x16x16xf32>
    %63 = vector.shape_cast %62 : vector<1x16x16xf32> to vector<16x16xf32>
    %64 = vector.extract_strided_slice %11 {offsets = [2, 2, 2], sizes = [1, 16, 16], strides = [1, 1, 1]} : vector<4x18x18xf32> to vector<1x16x16xf32>
    %65 = vector.shape_cast %64 : vector<1x16x16xf32> to vector<16x16xf32>
    %66 = vector.extract_strided_slice %11 {offsets = [3, 0, 0], sizes = [1, 16, 16], strides = [1, 1, 1]} : vector<4x18x18xf32> to vector<1x16x16xf32>
    %67 = vector.shape_cast %66 : vector<1x16x16xf32> to vector<16x16xf32>
    %68 = vector.extract_strided_slice %11 {offsets = [3, 0, 1], sizes = [1, 16, 16], strides = [1, 1, 1]} : vector<4x18x18xf32> to vector<1x16x16xf32>
    %69 = vector.shape_cast %68 : vector<1x16x16xf32> to vector<16x16xf32>
    %70 = vector.extract_strided_slice %11 {offsets = [3, 0, 2], sizes = [1, 16, 16], strides = [1, 1, 1]} : vector<4x18x18xf32> to vector<1x16x16xf32>
    %71 = vector.shape_cast %70 : vector<1x16x16xf32> to vector<16x16xf32>
    %72 = vector.extract_strided_slice %11 {offsets = [3, 1, 0], sizes = [1, 16, 16], strides = [1, 1, 1]} : vector<4x18x18xf32> to vector<1x16x16xf32>
    %73 = vector.shape_cast %72 : vector<1x16x16xf32> to vector<16x16xf32>
    %74 = vector.extract_strided_slice %11 {offsets = [3, 1, 1], sizes = [1, 16, 16], strides = [1, 1, 1]} : vector<4x18x18xf32> to vector<1x16x16xf32>
    %75 = vector.shape_cast %74 : vector<1x16x16xf32> to vector<16x16xf32>
    %76 = vector.extract_strided_slice %11 {offsets = [3, 1, 2], sizes = [1, 16, 16], strides = [1, 1, 1]} : vector<4x18x18xf32> to vector<1x16x16xf32>
    %77 = vector.shape_cast %76 : vector<1x16x16xf32> to vector<16x16xf32>
    %78 = vector.extract_strided_slice %11 {offsets = [3, 2, 0], sizes = [1, 16, 16], strides = [1, 1, 1]} : vector<4x18x18xf32> to vector<1x16x16xf32>
    %79 = vector.shape_cast %78 : vector<1x16x16xf32> to vector<16x16xf32>
    %80 = vector.extract_strided_slice %11 {offsets = [3, 2, 1], sizes = [1, 16, 16], strides = [1, 1, 1]} : vector<4x18x18xf32> to vector<1x16x16xf32>
    %81 = vector.shape_cast %80 : vector<1x16x16xf32> to vector<16x16xf32>
    %82 = vector.extract_strided_slice %11 {offsets = [3, 2, 2], sizes = [1, 16, 16], strides = [1, 1, 1]} : vector<4x18x18xf32> to vector<1x16x16xf32>
    %83 = vector.shape_cast %82 : vector<1x16x16xf32> to vector<16x16xf32>
    %cst_5 = arith.constant 0.000000e+00 : f32
    %84 = vector.broadcast %cst_5 : f32 to vector<16x16xf32>
    %c0_6 = arith.constant 0 : index
    %85 = memref.load %arg2[%c0_6] : memref<144xf32, #tpu.memory_space<smem>>
    %86 = vector.broadcast %85 : f32 to vector<16x16xf32>
    %87 = arith.mulf %86, %13 : vector<16x16xf32>
    %88 = arith.addf %84, %87 : vector<16x16xf32>
    %c1 = arith.constant 1 : index
    %89 = memref.load %arg2[%c1] : memref<144xf32, #tpu.memory_space<smem>>
    %90 = vector.broadcast %89 : f32 to vector<16x16xf32>
    %91 = arith.mulf %90, %15 : vector<16x16xf32>
    %92 = arith.addf %88, %91 : vector<16x16xf32>
    %c2 = arith.constant 2 : index
    %93 = memref.load %arg2[%c2] : memref<144xf32, #tpu.memory_space<smem>>
    %94 = vector.broadcast %93 : f32 to vector<16x16xf32>
    %95 = arith.mulf %94, %17 : vector<16x16xf32>
    %96 = arith.addf %92, %95 : vector<16x16xf32>
    %c3 = arith.constant 3 : index
    %97 = memref.load %arg2[%c3] : memref<144xf32, #tpu.memory_space<smem>>
    %98 = vector.broadcast %97 : f32 to vector<16x16xf32>
    %99 = arith.mulf %98, %19 : vector<16x16xf32>
    %100 = arith.addf %96, %99 : vector<16x16xf32>
    %c4 = arith.constant 4 : index
    %101 = memref.load %arg2[%c4] : memref<144xf32, #tpu.memory_space<smem>>
    %102 = vector.broadcast %101 : f32 to vector<16x16xf32>
    %103 = arith.mulf %102, %21 : vector<16x16xf32>
    %104 = arith.addf %100, %103 : vector<16x16xf32>
    %c5 = arith.constant 5 : index
    %105 = memref.load %arg2[%c5] : memref<144xf32, #tpu.memory_space<smem>>
    %106 = vector.broadcast %105 : f32 to vector<16x16xf32>
    %107 = arith.mulf %106, %23 : vector<16x16xf32>
    %108 = arith.addf %104, %107 : vector<16x16xf32>
    %c6 = arith.constant 6 : index
    %109 = memref.load %arg2[%c6] : memref<144xf32, #tpu.memory_space<smem>>
    %110 = vector.broadcast %109 : f32 to vector<16x16xf32>
    %111 = arith.mulf %110, %25 : vector<16x16xf32>
    %112 = arith.addf %108, %111 : vector<16x16xf32>
    %c7 = arith.constant 7 : index
    %113 = memref.load %arg2[%c7] : memref<144xf32, #tpu.memory_space<smem>>
    %114 = vector.broadcast %113 : f32 to vector<16x16xf32>
    %115 = arith.mulf %114, %27 : vector<16x16xf32>
    %116 = arith.addf %112, %115 : vector<16x16xf32>
    %c8 = arith.constant 8 : index
    %117 = memref.load %arg2[%c8] : memref<144xf32, #tpu.memory_space<smem>>
    %118 = vector.broadcast %117 : f32 to vector<16x16xf32>
    %119 = arith.mulf %118, %29 : vector<16x16xf32>
    %120 = arith.addf %116, %119 : vector<16x16xf32>
    %c9 = arith.constant 9 : index
    %121 = memref.load %arg2[%c9] : memref<144xf32, #tpu.memory_space<smem>>
    %122 = vector.broadcast %121 : f32 to vector<16x16xf32>
    %123 = arith.mulf %122, %31 : vector<16x16xf32>
    %124 = arith.addf %120, %123 : vector<16x16xf32>
    %c10 = arith.constant 10 : index
    %125 = memref.load %arg2[%c10] : memref<144xf32, #tpu.memory_space<smem>>
    %126 = vector.broadcast %125 : f32 to vector<16x16xf32>
    %127 = arith.mulf %126, %33 : vector<16x16xf32>
    %128 = arith.addf %124, %127 : vector<16x16xf32>
    %c11 = arith.constant 11 : index
    %129 = memref.load %arg2[%c11] : memref<144xf32, #tpu.memory_space<smem>>
    %130 = vector.broadcast %129 : f32 to vector<16x16xf32>
    %131 = arith.mulf %130, %35 : vector<16x16xf32>
    %132 = arith.addf %128, %131 : vector<16x16xf32>
    %c12 = arith.constant 12 : index
    %133 = memref.load %arg2[%c12] : memref<144xf32, #tpu.memory_space<smem>>
    %134 = vector.broadcast %133 : f32 to vector<16x16xf32>
    %135 = arith.mulf %134, %37 : vector<16x16xf32>
    %136 = arith.addf %132, %135 : vector<16x16xf32>
    %c13 = arith.constant 13 : index
    %137 = memref.load %arg2[%c13] : memref<144xf32, #tpu.memory_space<smem>>
    %138 = vector.broadcast %137 : f32 to vector<16x16xf32>
    %139 = arith.mulf %138, %39 : vector<16x16xf32>
    %140 = arith.addf %136, %139 : vector<16x16xf32>
    %c14 = arith.constant 14 : index
    %141 = memref.load %arg2[%c14] : memref<144xf32, #tpu.memory_space<smem>>
    %142 = vector.broadcast %141 : f32 to vector<16x16xf32>
    %143 = arith.mulf %142, %41 : vector<16x16xf32>
    %144 = arith.addf %140, %143 : vector<16x16xf32>
    %c15 = arith.constant 15 : index
    %145 = memref.load %arg2[%c15] : memref<144xf32, #tpu.memory_space<smem>>
    %146 = vector.broadcast %145 : f32 to vector<16x16xf32>
    %147 = arith.mulf %146, %43 : vector<16x16xf32>
    %148 = arith.addf %144, %147 : vector<16x16xf32>
    %c16 = arith.constant 16 : index
    %149 = memref.load %arg2[%c16] : memref<144xf32, #tpu.memory_space<smem>>
    %150 = vector.broadcast %149 : f32 to vector<16x16xf32>
    %151 = arith.mulf %150, %45 : vector<16x16xf32>
    %152 = arith.addf %148, %151 : vector<16x16xf32>
    %c17 = arith.constant 17 : index
    %153 = memref.load %arg2[%c17] : memref<144xf32, #tpu.memory_space<smem>>
    %154 = vector.broadcast %153 : f32 to vector<16x16xf32>
    %155 = arith.mulf %154, %47 : vector<16x16xf32>
    %156 = arith.addf %152, %155 : vector<16x16xf32>
    %c18 = arith.constant 18 : index
    %157 = memref.load %arg2[%c18] : memref<144xf32, #tpu.memory_space<smem>>
    %158 = vector.broadcast %157 : f32 to vector<16x16xf32>
    %159 = arith.mulf %158, %49 : vector<16x16xf32>
    %160 = arith.addf %156, %159 : vector<16x16xf32>
    %c19 = arith.constant 19 : index
    %161 = memref.load %arg2[%c19] : memref<144xf32, #tpu.memory_space<smem>>
    %162 = vector.broadcast %161 : f32 to vector<16x16xf32>
    %163 = arith.mulf %162, %51 : vector<16x16xf32>
    %164 = arith.addf %160, %163 : vector<16x16xf32>
    %c20 = arith.constant 20 : index
    %165 = memref.load %arg2[%c20] : memref<144xf32, #tpu.memory_space<smem>>
    %166 = vector.broadcast %165 : f32 to vector<16x16xf32>
    %167 = arith.mulf %166, %53 : vector<16x16xf32>
    %168 = arith.addf %164, %167 : vector<16x16xf32>
    %c21 = arith.constant 21 : index
    %169 = memref.load %arg2[%c21] : memref<144xf32, #tpu.memory_space<smem>>
    %170 = vector.broadcast %169 : f32 to vector<16x16xf32>
    %171 = arith.mulf %170, %55 : vector<16x16xf32>
    %172 = arith.addf %168, %171 : vector<16x16xf32>
    %c22 = arith.constant 22 : index
    %173 = memref.load %arg2[%c22] : memref<144xf32, #tpu.memory_space<smem>>
    %174 = vector.broadcast %173 : f32 to vector<16x16xf32>
    %175 = arith.mulf %174, %57 : vector<16x16xf32>
    %176 = arith.addf %172, %175 : vector<16x16xf32>
    %c23 = arith.constant 23 : index
    %177 = memref.load %arg2[%c23] : memref<144xf32, #tpu.memory_space<smem>>
    %178 = vector.broadcast %177 : f32 to vector<16x16xf32>
    %179 = arith.mulf %178, %59 : vector<16x16xf32>
    %180 = arith.addf %176, %179 : vector<16x16xf32>
    %c24 = arith.constant 24 : index
    %181 = memref.load %arg2[%c24] : memref<144xf32, #tpu.memory_space<smem>>
    %182 = vector.broadcast %181 : f32 to vector<16x16xf32>
    %183 = arith.mulf %182, %61 : vector<16x16xf32>
    %184 = arith.addf %180, %183 : vector<16x16xf32>
    %c25 = arith.constant 25 : index
    %185 = memref.load %arg2[%c25] : memref<144xf32, #tpu.memory_space<smem>>
    %186 = vector.broadcast %185 : f32 to vector<16x16xf32>
    %187 = arith.mulf %186, %63 : vector<16x16xf32>
    %188 = arith.addf %184, %187 : vector<16x16xf32>
    %c26 = arith.constant 26 : index
    %189 = memref.load %arg2[%c26] : memref<144xf32, #tpu.memory_space<smem>>
    %190 = vector.broadcast %189 : f32 to vector<16x16xf32>
    %191 = arith.mulf %190, %65 : vector<16x16xf32>
    %192 = arith.addf %188, %191 : vector<16x16xf32>
    %c27 = arith.constant 27 : index
    %193 = memref.load %arg2[%c27] : memref<144xf32, #tpu.memory_space<smem>>
    %194 = vector.broadcast %193 : f32 to vector<16x16xf32>
    %195 = arith.mulf %194, %67 : vector<16x16xf32>
    %196 = arith.addf %192, %195 : vector<16x16xf32>
    %c28 = arith.constant 28 : index
    %197 = memref.load %arg2[%c28] : memref<144xf32, #tpu.memory_space<smem>>
    %198 = vector.broadcast %197 : f32 to vector<16x16xf32>
    %199 = arith.mulf %198, %69 : vector<16x16xf32>
    %200 = arith.addf %196, %199 : vector<16x16xf32>
    %c29 = arith.constant 29 : index
    %201 = memref.load %arg2[%c29] : memref<144xf32, #tpu.memory_space<smem>>
    %202 = vector.broadcast %201 : f32 to vector<16x16xf32>
    %203 = arith.mulf %202, %71 : vector<16x16xf32>
    %204 = arith.addf %200, %203 : vector<16x16xf32>
    %c30 = arith.constant 30 : index
    %205 = memref.load %arg2[%c30] : memref<144xf32, #tpu.memory_space<smem>>
    %206 = vector.broadcast %205 : f32 to vector<16x16xf32>
    %207 = arith.mulf %206, %73 : vector<16x16xf32>
    %208 = arith.addf %204, %207 : vector<16x16xf32>
    %c31 = arith.constant 31 : index
    %209 = memref.load %arg2[%c31] : memref<144xf32, #tpu.memory_space<smem>>
    %210 = vector.broadcast %209 : f32 to vector<16x16xf32>
    %211 = arith.mulf %210, %75 : vector<16x16xf32>
    %212 = arith.addf %208, %211 : vector<16x16xf32>
    %c32 = arith.constant 32 : index
    %213 = memref.load %arg2[%c32] : memref<144xf32, #tpu.memory_space<smem>>
    %214 = vector.broadcast %213 : f32 to vector<16x16xf32>
    %215 = arith.mulf %214, %77 : vector<16x16xf32>
    %216 = arith.addf %212, %215 : vector<16x16xf32>
    %c33 = arith.constant 33 : index
    %217 = memref.load %arg2[%c33] : memref<144xf32, #tpu.memory_space<smem>>
    %218 = vector.broadcast %217 : f32 to vector<16x16xf32>
    %219 = arith.mulf %218, %79 : vector<16x16xf32>
    %220 = arith.addf %216, %219 : vector<16x16xf32>
    %c34 = arith.constant 34 : index
    %221 = memref.load %arg2[%c34] : memref<144xf32, #tpu.memory_space<smem>>
    %222 = vector.broadcast %221 : f32 to vector<16x16xf32>
    %223 = arith.mulf %222, %81 : vector<16x16xf32>
    %224 = arith.addf %220, %223 : vector<16x16xf32>
    %c35 = arith.constant 35 : index
    %225 = memref.load %arg2[%c35] : memref<144xf32, #tpu.memory_space<smem>>
    %226 = vector.broadcast %225 : f32 to vector<16x16xf32>
    %227 = arith.mulf %226, %83 : vector<16x16xf32>
    %228 = arith.addf %224, %227 : vector<16x16xf32>
    %c0_7 = arith.constant 0 : index
    %229 = memref.load %arg3[%c0_7] : memref<4xf32, #tpu.memory_space<smem>>
    %230 = vector.broadcast %229 : f32 to vector<16x16xf32>
    %231 = arith.addf %228, %230 : vector<16x16xf32>
    %cst_8 = arith.constant 0.000000e+00 : f32
    %232 = vector.broadcast %cst_8 : f32 to vector<16x16xf32>
    %233 = arith.cmpf oge, %231, %232 : vector<16x16xf32>
    %cst_9 = arith.constant 2.000000e-01 : f32
    %234 = vector.broadcast %cst_9 : f32 to vector<16x16xf32>
    %235 = arith.mulf %234, %231 : vector<16x16xf32>
    %236 = arith.select %233, %231, %235 : vector<16x16xi1>, vector<16x16xf32>
    %c0_10 = arith.constant 0 : index
    %c0_11 = arith.constant 0 : index
    %c0_12 = arith.constant 0 : index
    %c0_13 = arith.constant 0 : index
    %237 = vector.load %arg4[%c0_10, %c0_11, %c0_12, %c0_13] : memref<1x4x16x16xf32, #tpu.memory_space<vmem>>, vector<1x1x16x16xf32>
    %238 = vector.shape_cast %237 : vector<1x1x16x16xf32> to vector<16x16xf32>
    %239 = vector.shape_cast %236 : vector<16x16xf32> to vector<1x1x16x16xf32>
    tpu.vector_store %arg4[%c0_10, %c0_11, %c0_12, %c0_13], %239 {strides = array<i32>} : memref<1x4x16x16xf32, #tpu.memory_space<vmem>>, vector<1x1x16x16xf32>,
    %cst_14 = arith.constant 0.000000e+00 : f32
    %240 = vector.broadcast %cst_14 : f32 to vector<16x16xf32>
    %c36 = arith.constant 36 : index
    %241 = memref.load %arg2[%c36] : memref<144xf32, #tpu.memory_space<smem>>
    %242 = vector.broadcast %241 : f32 to vector<16x16xf32>
    %243 = arith.mulf %242, %13 : vector<16x16xf32>
    %244 = arith.addf %240, %243 : vector<16x16xf32>
    %c37 = arith.constant 37 : index
    %245 = memref.load %arg2[%c37] : memref<144xf32, #tpu.memory_space<smem>>
    %246 = vector.broadcast %245 : f32 to vector<16x16xf32>
    %247 = arith.mulf %246, %15 : vector<16x16xf32>
    %248 = arith.addf %244, %247 : vector<16x16xf32>
    %c38 = arith.constant 38 : index
    %249 = memref.load %arg2[%c38] : memref<144xf32, #tpu.memory_space<smem>>
    %250 = vector.broadcast %249 : f32 to vector<16x16xf32>
    %251 = arith.mulf %250, %17 : vector<16x16xf32>
    %252 = arith.addf %248, %251 : vector<16x16xf32>
    %c39 = arith.constant 39 : index
    %253 = memref.load %arg2[%c39] : memref<144xf32, #tpu.memory_space<smem>>
    %254 = vector.broadcast %253 : f32 to vector<16x16xf32>
    %255 = arith.mulf %254, %19 : vector<16x16xf32>
    %256 = arith.addf %252, %255 : vector<16x16xf32>
    %c40 = arith.constant 40 : index
    %257 = memref.load %arg2[%c40] : memref<144xf32, #tpu.memory_space<smem>>
    %258 = vector.broadcast %257 : f32 to vector<16x16xf32>
    %259 = arith.mulf %258, %21 : vector<16x16xf32>
    %260 = arith.addf %256, %259 : vector<16x16xf32>
    %c41 = arith.constant 41 : index
    %261 = memref.load %arg2[%c41] : memref<144xf32, #tpu.memory_space<smem>>
    %262 = vector.broadcast %261 : f32 to vector<16x16xf32>
    %263 = arith.mulf %262, %23 : vector<16x16xf32>
    %264 = arith.addf %260, %263 : vector<16x16xf32>
    %c42 = arith.constant 42 : index
    %265 = memref.load %arg2[%c42] : memref<144xf32, #tpu.memory_space<smem>>
    %266 = vector.broadcast %265 : f32 to vector<16x16xf32>
    %267 = arith.mulf %266, %25 : vector<16x16xf32>
    %268 = arith.addf %264, %267 : vector<16x16xf32>
    %c43 = arith.constant 43 : index
    %269 = memref.load %arg2[%c43] : memref<144xf32, #tpu.memory_space<smem>>
    %270 = vector.broadcast %269 : f32 to vector<16x16xf32>
    %271 = arith.mulf %270, %27 : vector<16x16xf32>
    %272 = arith.addf %268, %271 : vector<16x16xf32>
    %c44 = arith.constant 44 : index
    %273 = memref.load %arg2[%c44] : memref<144xf32, #tpu.memory_space<smem>>
    %274 = vector.broadcast %273 : f32 to vector<16x16xf32>
    %275 = arith.mulf %274, %29 : vector<16x16xf32>
    %276 = arith.addf %272, %275 : vector<16x16xf32>
    %c45 = arith.constant 45 : index
    %277 = memref.load %arg2[%c45] : memref<144xf32, #tpu.memory_space<smem>>
    %278 = vector.broadcast %277 : f32 to vector<16x16xf32>
    %279 = arith.mulf %278, %31 : vector<16x16xf32>
    %280 = arith.addf %276, %279 : vector<16x16xf32>
    %c46 = arith.constant 46 : index
    %281 = memref.load %arg2[%c46] : memref<144xf32, #tpu.memory_space<smem>>
    %282 = vector.broadcast %281 : f32 to vector<16x16xf32>
    %283 = arith.mulf %282, %33 : vector<16x16xf32>
    %284 = arith.addf %280, %283 : vector<16x16xf32>
    %c47 = arith.constant 47 : index
    %285 = memref.load %arg2[%c47] : memref<144xf32, #tpu.memory_space<smem>>
    %286 = vector.broadcast %285 : f32 to vector<16x16xf32>
    %287 = arith.mulf %286, %35 : vector<16x16xf32>
    %288 = arith.addf %284, %287 : vector<16x16xf32>
    %c48 = arith.constant 48 : index
    %289 = memref.load %arg2[%c48] : memref<144xf32, #tpu.memory_space<smem>>
    %290 = vector.broadcast %289 : f32 to vector<16x16xf32>
    %291 = arith.mulf %290, %37 : vector<16x16xf32>
    %292 = arith.addf %288, %291 : vector<16x16xf32>
    %c49 = arith.constant 49 : index
    %293 = memref.load %arg2[%c49] : memref<144xf32, #tpu.memory_space<smem>>
    %294 = vector.broadcast %293 : f32 to vector<16x16xf32>
    %295 = arith.mulf %294, %39 : vector<16x16xf32>
    %296 = arith.addf %292, %295 : vector<16x16xf32>
    %c50 = arith.constant 50 : index
    %297 = memref.load %arg2[%c50] : memref<144xf32, #tpu.memory_space<smem>>
    %298 = vector.broadcast %297 : f32 to vector<16x16xf32>
    %299 = arith.mulf %298, %41 : vector<16x16xf32>
    %300 = arith.addf %296, %299 : vector<16x16xf32>
    %c51 = arith.constant 51 : index
    %301 = memref.load %arg2[%c51] : memref<144xf32, #tpu.memory_space<smem>>
    %302 = vector.broadcast %301 : f32 to vector<16x16xf32>
    %303 = arith.mulf %302, %43 : vector<16x16xf32>
    %304 = arith.addf %300, %303 : vector<16x16xf32>
    %c52 = arith.constant 52 : index
    %305 = memref.load %arg2[%c52] : memref<144xf32, #tpu.memory_space<smem>>
    %306 = vector.broadcast %305 : f32 to vector<16x16xf32>
    %307 = arith.mulf %306, %45 : vector<16x16xf32>
    %308 = arith.addf %304, %307 : vector<16x16xf32>
    %c53 = arith.constant 53 : index
    %309 = memref.load %arg2[%c53] : memref<144xf32, #tpu.memory_space<smem>>
    %310 = vector.broadcast %309 : f32 to vector<16x16xf32>
    %311 = arith.mulf %310, %47 : vector<16x16xf32>
    %312 = arith.addf %308, %311 : vector<16x16xf32>
    %c54 = arith.constant 54 : index
    %313 = memref.load %arg2[%c54] : memref<144xf32, #tpu.memory_space<smem>>
    %314 = vector.broadcast %313 : f32 to vector<16x16xf32>
    %315 = arith.mulf %314, %49 : vector<16x16xf32>
    %316 = arith.addf %312, %315 : vector<16x16xf32>
    %c55 = arith.constant 55 : index
    %317 = memref.load %arg2[%c55] : memref<144xf32, #tpu.memory_space<smem>>
    %318 = vector.broadcast %317 : f32 to vector<16x16xf32>
    %319 = arith.mulf %318, %51 : vector<16x16xf32>
    %320 = arith.addf %316, %319 : vector<16x16xf32>
    %c56 = arith.constant 56 : index
    %321 = memref.load %arg2[%c56] : memref<144xf32, #tpu.memory_space<smem>>
    %322 = vector.broadcast %321 : f32 to vector<16x16xf32>
    %323 = arith.mulf %322, %53 : vector<16x16xf32>
    %324 = arith.addf %320, %323 : vector<16x16xf32>
    %c57 = arith.constant 57 : index
    %325 = memref.load %arg2[%c57] : memref<144xf32, #tpu.memory_space<smem>>
    %326 = vector.broadcast %325 : f32 to vector<16x16xf32>
    %327 = arith.mulf %326, %55 : vector<16x16xf32>
    %328 = arith.addf %324, %327 : vector<16x16xf32>
    %c58 = arith.constant 58 : index
    %329 = memref.load %arg2[%c58] : memref<144xf32, #tpu.memory_space<smem>>
    %330 = vector.broadcast %329 : f32 to vector<16x16xf32>
    %331 = arith.mulf %330, %57 : vector<16x16xf32>
    %332 = arith.addf %328, %331 : vector<16x16xf32>
    %c59 = arith.constant 59 : index
    %333 = memref.load %arg2[%c59] : memref<144xf32, #tpu.memory_space<smem>>
    %334 = vector.broadcast %333 : f32 to vector<16x16xf32>
    %335 = arith.mulf %334, %59 : vector<16x16xf32>
    %336 = arith.addf %332, %335 : vector<16x16xf32>
    %c60 = arith.constant 60 : index
    %337 = memref.load %arg2[%c60] : memref<144xf32, #tpu.memory_space<smem>>
    %338 = vector.broadcast %337 : f32 to vector<16x16xf32>
    %339 = arith.mulf %338, %61 : vector<16x16xf32>
    %340 = arith.addf %336, %339 : vector<16x16xf32>
    %c61 = arith.constant 61 : index
    %341 = memref.load %arg2[%c61] : memref<144xf32, #tpu.memory_space<smem>>
    %342 = vector.broadcast %341 : f32 to vector<16x16xf32>
    %343 = arith.mulf %342, %63 : vector<16x16xf32>
    %344 = arith.addf %340, %343 : vector<16x16xf32>
    %c62 = arith.constant 62 : index
    %345 = memref.load %arg2[%c62] : memref<144xf32, #tpu.memory_space<smem>>
    %346 = vector.broadcast %345 : f32 to vector<16x16xf32>
    %347 = arith.mulf %346, %65 : vector<16x16xf32>
    %348 = arith.addf %344, %347 : vector<16x16xf32>
    %c63 = arith.constant 63 : index
    %349 = memref.load %arg2[%c63] : memref<144xf32, #tpu.memory_space<smem>>
    %350 = vector.broadcast %349 : f32 to vector<16x16xf32>
    %351 = arith.mulf %350, %67 : vector<16x16xf32>
    %352 = arith.addf %348, %351 : vector<16x16xf32>
    %c64 = arith.constant 64 : index
    %353 = memref.load %arg2[%c64] : memref<144xf32, #tpu.memory_space<smem>>
    %354 = vector.broadcast %353 : f32 to vector<16x16xf32>
    %355 = arith.mulf %354, %69 : vector<16x16xf32>
    %356 = arith.addf %352, %355 : vector<16x16xf32>
    %c65 = arith.constant 65 : index
    %357 = memref.load %arg2[%c65] : memref<144xf32, #tpu.memory_space<smem>>
    %358 = vector.broadcast %357 : f32 to vector<16x16xf32>
    %359 = arith.mulf %358, %71 : vector<16x16xf32>
    %360 = arith.addf %356, %359 : vector<16x16xf32>
    %c66 = arith.constant 66 : index
    %361 = memref.load %arg2[%c66] : memref<144xf32, #tpu.memory_space<smem>>
    %362 = vector.broadcast %361 : f32 to vector<16x16xf32>
    %363 = arith.mulf %362, %73 : vector<16x16xf32>
    %364 = arith.addf %360, %363 : vector<16x16xf32>
    %c67 = arith.constant 67 : index
    %365 = memref.load %arg2[%c67] : memref<144xf32, #tpu.memory_space<smem>>
    %366 = vector.broadcast %365 : f32 to vector<16x16xf32>
    %367 = arith.mulf %366, %75 : vector<16x16xf32>
    %368 = arith.addf %364, %367 : vector<16x16xf32>
    %c68 = arith.constant 68 : index
    %369 = memref.load %arg2[%c68] : memref<144xf32, #tpu.memory_space<smem>>
    %370 = vector.broadcast %369 : f32 to vector<16x16xf32>
    %371 = arith.mulf %370, %77 : vector<16x16xf32>
    %372 = arith.addf %368, %371 : vector<16x16xf32>
    %c69 = arith.constant 69 : index
    %373 = memref.load %arg2[%c69] : memref<144xf32, #tpu.memory_space<smem>>
    %374 = vector.broadcast %373 : f32 to vector<16x16xf32>
    %375 = arith.mulf %374, %79 : vector<16x16xf32>
    %376 = arith.addf %372, %375 : vector<16x16xf32>
    %c70 = arith.constant 70 : index
    %377 = memref.load %arg2[%c70] : memref<144xf32, #tpu.memory_space<smem>>
    %378 = vector.broadcast %377 : f32 to vector<16x16xf32>
    %379 = arith.mulf %378, %81 : vector<16x16xf32>
    %380 = arith.addf %376, %379 : vector<16x16xf32>
    %c71 = arith.constant 71 : index
    %381 = memref.load %arg2[%c71] : memref<144xf32, #tpu.memory_space<smem>>
    %382 = vector.broadcast %381 : f32 to vector<16x16xf32>
    %383 = arith.mulf %382, %83 : vector<16x16xf32>
    %384 = arith.addf %380, %383 : vector<16x16xf32>
    %c1_15 = arith.constant 1 : index
    %385 = memref.load %arg3[%c1_15] : memref<4xf32, #tpu.memory_space<smem>>
    %386 = vector.broadcast %385 : f32 to vector<16x16xf32>
    %387 = arith.addf %384, %386 : vector<16x16xf32>
    %cst_16 = arith.constant 0.000000e+00 : f32
    %388 = vector.broadcast %cst_16 : f32 to vector<16x16xf32>
    %389 = arith.cmpf oge, %387, %388 : vector<16x16xf32>
    %cst_17 = arith.constant 2.000000e-01 : f32
    %390 = vector.broadcast %cst_17 : f32 to vector<16x16xf32>
    %391 = arith.mulf %390, %387 : vector<16x16xf32>
    %392 = arith.select %389, %387, %391 : vector<16x16xi1>, vector<16x16xf32>
    %c0_18 = arith.constant 0 : index
    %c1_19 = arith.constant 1 : index
    %c0_20 = arith.constant 0 : index
    %c0_21 = arith.constant 0 : index
    %393 = vector.load %arg4[%c0_18, %c1_19, %c0_20, %c0_21] : memref<1x4x16x16xf32, #tpu.memory_space<vmem>>, vector<1x1x16x16xf32>
    %394 = vector.shape_cast %393 : vector<1x1x16x16xf32> to vector<16x16xf32>
    %395 = vector.shape_cast %392 : vector<16x16xf32> to vector<1x1x16x16xf32>
    tpu.vector_store %arg4[%c0_18, %c1_19, %c0_20, %c0_21], %395 {strides = array<i32>} : memref<1x4x16x16xf32, #tpu.memory_space<vmem>>, vector<1x1x16x16xf32>,
    %cst_22 = arith.constant 0.000000e+00 : f32
    %396 = vector.broadcast %cst_22 : f32 to vector<16x16xf32>
    %c72 = arith.constant 72 : index
    %397 = memref.load %arg2[%c72] : memref<144xf32, #tpu.memory_space<smem>>
    %398 = vector.broadcast %397 : f32 to vector<16x16xf32>
    %399 = arith.mulf %398, %13 : vector<16x16xf32>
    %400 = arith.addf %396, %399 : vector<16x16xf32>
    %c73 = arith.constant 73 : index
    %401 = memref.load %arg2[%c73] : memref<144xf32, #tpu.memory_space<smem>>
    %402 = vector.broadcast %401 : f32 to vector<16x16xf32>
    %403 = arith.mulf %402, %15 : vector<16x16xf32>
    %404 = arith.addf %400, %403 : vector<16x16xf32>
    %c74 = arith.constant 74 : index
    %405 = memref.load %arg2[%c74] : memref<144xf32, #tpu.memory_space<smem>>
    %406 = vector.broadcast %405 : f32 to vector<16x16xf32>
    %407 = arith.mulf %406, %17 : vector<16x16xf32>
    %408 = arith.addf %404, %407 : vector<16x16xf32>
    %c75 = arith.constant 75 : index
    %409 = memref.load %arg2[%c75] : memref<144xf32, #tpu.memory_space<smem>>
    %410 = vector.broadcast %409 : f32 to vector<16x16xf32>
    %411 = arith.mulf %410, %19 : vector<16x16xf32>
    %412 = arith.addf %408, %411 : vector<16x16xf32>
    %c76 = arith.constant 76 : index
    %413 = memref.load %arg2[%c76] : memref<144xf32, #tpu.memory_space<smem>>
    %414 = vector.broadcast %413 : f32 to vector<16x16xf32>
    %415 = arith.mulf %414, %21 : vector<16x16xf32>
    %416 = arith.addf %412, %415 : vector<16x16xf32>
    %c77 = arith.constant 77 : index
    %417 = memref.load %arg2[%c77] : memref<144xf32, #tpu.memory_space<smem>>
    %418 = vector.broadcast %417 : f32 to vector<16x16xf32>
    %419 = arith.mulf %418, %23 : vector<16x16xf32>
    %420 = arith.addf %416, %419 : vector<16x16xf32>
    %c78 = arith.constant 78 : index
    %421 = memref.load %arg2[%c78] : memref<144xf32, #tpu.memory_space<smem>>
    %422 = vector.broadcast %421 : f32 to vector<16x16xf32>
    %423 = arith.mulf %422, %25 : vector<16x16xf32>
    %424 = arith.addf %420, %423 : vector<16x16xf32>
    %c79 = arith.constant 79 : index
    %425 = memref.load %arg2[%c79] : memref<144xf32, #tpu.memory_space<smem>>
    %426 = vector.broadcast %425 : f32 to vector<16x16xf32>
    %427 = arith.mulf %426, %27 : vector<16x16xf32>
    %428 = arith.addf %424, %427 : vector<16x16xf32>
    %c80 = arith.constant 80 : index
    %429 = memref.load %arg2[%c80] : memref<144xf32, #tpu.memory_space<smem>>
    %430 = vector.broadcast %429 : f32 to vector<16x16xf32>
    %431 = arith.mulf %430, %29 : vector<16x16xf32>
    %432 = arith.addf %428, %431 : vector<16x16xf32>
    %c81 = arith.constant 81 : index
    %433 = memref.load %arg2[%c81] : memref<144xf32, #tpu.memory_space<smem>>
    %434 = vector.broadcast %433 : f32 to vector<16x16xf32>
    %435 = arith.mulf %434, %31 : vector<16x16xf32>
    %436 = arith.addf %432, %435 : vector<16x16xf32>
    %c82 = arith.constant 82 : index
    %437 = memref.load %arg2[%c82] : memref<144xf32, #tpu.memory_space<smem>>
    %438 = vector.broadcast %437 : f32 to vector<16x16xf32>
    %439 = arith.mulf %438, %33 : vector<16x16xf32>
    %440 = arith.addf %436, %439 : vector<16x16xf32>
    %c83 = arith.constant 83 : index
    %441 = memref.load %arg2[%c83] : memref<144xf32, #tpu.memory_space<smem>>
    %442 = vector.broadcast %441 : f32 to vector<16x16xf32>
    %443 = arith.mulf %442, %35 : vector<16x16xf32>
    %444 = arith.addf %440, %443 : vector<16x16xf32>
    %c84 = arith.constant 84 : index
    %445 = memref.load %arg2[%c84] : memref<144xf32, #tpu.memory_space<smem>>
    %446 = vector.broadcast %445 : f32 to vector<16x16xf32>
    %447 = arith.mulf %446, %37 : vector<16x16xf32>
    %448 = arith.addf %444, %447 : vector<16x16xf32>
    %c85 = arith.constant 85 : index
    %449 = memref.load %arg2[%c85] : memref<144xf32, #tpu.memory_space<smem>>
    %450 = vector.broadcast %449 : f32 to vector<16x16xf32>
    %451 = arith.mulf %450, %39 : vector<16x16xf32>
    %452 = arith.addf %448, %451 : vector<16x16xf32>
    %c86 = arith.constant 86 : index
    %453 = memref.load %arg2[%c86] : memref<144xf32, #tpu.memory_space<smem>>
    %454 = vector.broadcast %453 : f32 to vector<16x16xf32>
    %455 = arith.mulf %454, %41 : vector<16x16xf32>
    %456 = arith.addf %452, %455 : vector<16x16xf32>
    %c87 = arith.constant 87 : index
    %457 = memref.load %arg2[%c87] : memref<144xf32, #tpu.memory_space<smem>>
    %458 = vector.broadcast %457 : f32 to vector<16x16xf32>
    %459 = arith.mulf %458, %43 : vector<16x16xf32>
    %460 = arith.addf %456, %459 : vector<16x16xf32>
    %c88 = arith.constant 88 : index
    %461 = memref.load %arg2[%c88] : memref<144xf32, #tpu.memory_space<smem>>
    %462 = vector.broadcast %461 : f32 to vector<16x16xf32>
    %463 = arith.mulf %462, %45 : vector<16x16xf32>
    %464 = arith.addf %460, %463 : vector<16x16xf32>
    %c89 = arith.constant 89 : index
    %465 = memref.load %arg2[%c89] : memref<144xf32, #tpu.memory_space<smem>>
    %466 = vector.broadcast %465 : f32 to vector<16x16xf32>
    %467 = arith.mulf %466, %47 : vector<16x16xf32>
    %468 = arith.addf %464, %467 : vector<16x16xf32>
    %c90 = arith.constant 90 : index
    %469 = memref.load %arg2[%c90] : memref<144xf32, #tpu.memory_space<smem>>
    %470 = vector.broadcast %469 : f32 to vector<16x16xf32>
    %471 = arith.mulf %470, %49 : vector<16x16xf32>
    %472 = arith.addf %468, %471 : vector<16x16xf32>
    %c91 = arith.constant 91 : index
    %473 = memref.load %arg2[%c91] : memref<144xf32, #tpu.memory_space<smem>>
    %474 = vector.broadcast %473 : f32 to vector<16x16xf32>
    %475 = arith.mulf %474, %51 : vector<16x16xf32>
    %476 = arith.addf %472, %475 : vector<16x16xf32>
    %c92 = arith.constant 92 : index
    %477 = memref.load %arg2[%c92] : memref<144xf32, #tpu.memory_space<smem>>
    %478 = vector.broadcast %477 : f32 to vector<16x16xf32>
    %479 = arith.mulf %478, %53 : vector<16x16xf32>
    %480 = arith.addf %476, %479 : vector<16x16xf32>
    %c93 = arith.constant 93 : index
    %481 = memref.load %arg2[%c93] : memref<144xf32, #tpu.memory_space<smem>>
    %482 = vector.broadcast %481 : f32 to vector<16x16xf32>
    %483 = arith.mulf %482, %55 : vector<16x16xf32>
    %484 = arith.addf %480, %483 : vector<16x16xf32>
    %c94 = arith.constant 94 : index
    %485 = memref.load %arg2[%c94] : memref<144xf32, #tpu.memory_space<smem>>
    %486 = vector.broadcast %485 : f32 to vector<16x16xf32>
    %487 = arith.mulf %486, %57 : vector<16x16xf32>
    %488 = arith.addf %484, %487 : vector<16x16xf32>
    %c95 = arith.constant 95 : index
    %489 = memref.load %arg2[%c95] : memref<144xf32, #tpu.memory_space<smem>>
    %490 = vector.broadcast %489 : f32 to vector<16x16xf32>
    %491 = arith.mulf %490, %59 : vector<16x16xf32>
    %492 = arith.addf %488, %491 : vector<16x16xf32>
    %c96 = arith.constant 96 : index
    %493 = memref.load %arg2[%c96] : memref<144xf32, #tpu.memory_space<smem>>
    %494 = vector.broadcast %493 : f32 to vector<16x16xf32>
    %495 = arith.mulf %494, %61 : vector<16x16xf32>
    %496 = arith.addf %492, %495 : vector<16x16xf32>
    %c97 = arith.constant 97 : index
    %497 = memref.load %arg2[%c97] : memref<144xf32, #tpu.memory_space<smem>>
    %498 = vector.broadcast %497 : f32 to vector<16x16xf32>
    %499 = arith.mulf %498, %63 : vector<16x16xf32>
    %500 = arith.addf %496, %499 : vector<16x16xf32>
    %c98 = arith.constant 98 : index
    %501 = memref.load %arg2[%c98] : memref<144xf32, #tpu.memory_space<smem>>
    %502 = vector.broadcast %501 : f32 to vector<16x16xf32>
    %503 = arith.mulf %502, %65 : vector<16x16xf32>
    %504 = arith.addf %500, %503 : vector<16x16xf32>
    %c99 = arith.constant 99 : index
    %505 = memref.load %arg2[%c99] : memref<144xf32, #tpu.memory_space<smem>>
    %506 = vector.broadcast %505 : f32 to vector<16x16xf32>
    %507 = arith.mulf %506, %67 : vector<16x16xf32>
    %508 = arith.addf %504, %507 : vector<16x16xf32>
    %c100 = arith.constant 100 : index
    %509 = memref.load %arg2[%c100] : memref<144xf32, #tpu.memory_space<smem>>
    %510 = vector.broadcast %509 : f32 to vector<16x16xf32>
    %511 = arith.mulf %510, %69 : vector<16x16xf32>
    %512 = arith.addf %508, %511 : vector<16x16xf32>
    %c101 = arith.constant 101 : index
    %513 = memref.load %arg2[%c101] : memref<144xf32, #tpu.memory_space<smem>>
    %514 = vector.broadcast %513 : f32 to vector<16x16xf32>
    %515 = arith.mulf %514, %71 : vector<16x16xf32>
    %516 = arith.addf %512, %515 : vector<16x16xf32>
    %c102 = arith.constant 102 : index
    %517 = memref.load %arg2[%c102] : memref<144xf32, #tpu.memory_space<smem>>
    %518 = vector.broadcast %517 : f32 to vector<16x16xf32>
    %519 = arith.mulf %518, %73 : vector<16x16xf32>
    %520 = arith.addf %516, %519 : vector<16x16xf32>
    %c103 = arith.constant 103 : index
    %521 = memref.load %arg2[%c103] : memref<144xf32, #tpu.memory_space<smem>>
    %522 = vector.broadcast %521 : f32 to vector<16x16xf32>
    %523 = arith.mulf %522, %75 : vector<16x16xf32>
    %524 = arith.addf %520, %523 : vector<16x16xf32>
    %c104 = arith.constant 104 : index
    %525 = memref.load %arg2[%c104] : memref<144xf32, #tpu.memory_space<smem>>
    %526 = vector.broadcast %525 : f32 to vector<16x16xf32>
    %527 = arith.mulf %526, %77 : vector<16x16xf32>
    %528 = arith.addf %524, %527 : vector<16x16xf32>
    %c105 = arith.constant 105 : index
    %529 = memref.load %arg2[%c105] : memref<144xf32, #tpu.memory_space<smem>>
    %530 = vector.broadcast %529 : f32 to vector<16x16xf32>
    %531 = arith.mulf %530, %79 : vector<16x16xf32>
    %532 = arith.addf %528, %531 : vector<16x16xf32>
    %c106 = arith.constant 106 : index
    %533 = memref.load %arg2[%c106] : memref<144xf32, #tpu.memory_space<smem>>
    %534 = vector.broadcast %533 : f32 to vector<16x16xf32>
    %535 = arith.mulf %534, %81 : vector<16x16xf32>
    %536 = arith.addf %532, %535 : vector<16x16xf32>
    %c107 = arith.constant 107 : index
    %537 = memref.load %arg2[%c107] : memref<144xf32, #tpu.memory_space<smem>>
    %538 = vector.broadcast %537 : f32 to vector<16x16xf32>
    %539 = arith.mulf %538, %83 : vector<16x16xf32>
    %540 = arith.addf %536, %539 : vector<16x16xf32>
    %c2_23 = arith.constant 2 : index
    %541 = memref.load %arg3[%c2_23] : memref<4xf32, #tpu.memory_space<smem>>
    %542 = vector.broadcast %541 : f32 to vector<16x16xf32>
    %543 = arith.addf %540, %542 : vector<16x16xf32>
    %cst_24 = arith.constant 0.000000e+00 : f32
    %544 = vector.broadcast %cst_24 : f32 to vector<16x16xf32>
    %545 = arith.cmpf oge, %543, %544 : vector<16x16xf32>
    %cst_25 = arith.constant 2.000000e-01 : f32
    %546 = vector.broadcast %cst_25 : f32 to vector<16x16xf32>
    %547 = arith.mulf %546, %543 : vector<16x16xf32>
    %548 = arith.select %545, %543, %547 : vector<16x16xi1>, vector<16x16xf32>
    %c0_26 = arith.constant 0 : index
    %c2_27 = arith.constant 2 : index
    %c0_28 = arith.constant 0 : index
    %c0_29 = arith.constant 0 : index
    %549 = vector.load %arg4[%c0_26, %c2_27, %c0_28, %c0_29] : memref<1x4x16x16xf32, #tpu.memory_space<vmem>>, vector<1x1x16x16xf32>
    %550 = vector.shape_cast %549 : vector<1x1x16x16xf32> to vector<16x16xf32>
    %551 = vector.shape_cast %548 : vector<16x16xf32> to vector<1x1x16x16xf32>
    tpu.vector_store %arg4[%c0_26, %c2_27, %c0_28, %c0_29], %551 {strides = array<i32>} : memref<1x4x16x16xf32, #tpu.memory_space<vmem>>, vector<1x1x16x16xf32>,
    %cst_30 = arith.constant 0.000000e+00 : f32
    %552 = vector.broadcast %cst_30 : f32 to vector<16x16xf32>
    %c108 = arith.constant 108 : index
    %553 = memref.load %arg2[%c108] : memref<144xf32, #tpu.memory_space<smem>>
    %554 = vector.broadcast %553 : f32 to vector<16x16xf32>
    %555 = arith.mulf %554, %13 : vector<16x16xf32>
    %556 = arith.addf %552, %555 : vector<16x16xf32>
    %c109 = arith.constant 109 : index
    %557 = memref.load %arg2[%c109] : memref<144xf32, #tpu.memory_space<smem>>
    %558 = vector.broadcast %557 : f32 to vector<16x16xf32>
    %559 = arith.mulf %558, %15 : vector<16x16xf32>
    %560 = arith.addf %556, %559 : vector<16x16xf32>
    %c110 = arith.constant 110 : index
    %561 = memref.load %arg2[%c110] : memref<144xf32, #tpu.memory_space<smem>>
    %562 = vector.broadcast %561 : f32 to vector<16x16xf32>
    %563 = arith.mulf %562, %17 : vector<16x16xf32>
    %564 = arith.addf %560, %563 : vector<16x16xf32>
    %c111 = arith.constant 111 : index
    %565 = memref.load %arg2[%c111] : memref<144xf32, #tpu.memory_space<smem>>
    %566 = vector.broadcast %565 : f32 to vector<16x16xf32>
    %567 = arith.mulf %566, %19 : vector<16x16xf32>
    %568 = arith.addf %564, %567 : vector<16x16xf32>
    %c112 = arith.constant 112 : index
    %569 = memref.load %arg2[%c112] : memref<144xf32, #tpu.memory_space<smem>>
    %570 = vector.broadcast %569 : f32 to vector<16x16xf32>
    %571 = arith.mulf %570, %21 : vector<16x16xf32>
    %572 = arith.addf %568, %571 : vector<16x16xf32>
    %c113 = arith.constant 113 : index
    %573 = memref.load %arg2[%c113] : memref<144xf32, #tpu.memory_space<smem>>
    %574 = vector.broadcast %573 : f32 to vector<16x16xf32>
    %575 = arith.mulf %574, %23 : vector<16x16xf32>
    %576 = arith.addf %572, %575 : vector<16x16xf32>
    %c114 = arith.constant 114 : index
    %577 = memref.load %arg2[%c114] : memref<144xf32, #tpu.memory_space<smem>>
    %578 = vector.broadcast %577 : f32 to vector<16x16xf32>
    %579 = arith.mulf %578, %25 : vector<16x16xf32>
    %580 = arith.addf %576, %579 : vector<16x16xf32>
    %c115 = arith.constant 115 : index
    %581 = memref.load %arg2[%c115] : memref<144xf32, #tpu.memory_space<smem>>
    %582 = vector.broadcast %581 : f32 to vector<16x16xf32>
    %583 = arith.mulf %582, %27 : vector<16x16xf32>
    %584 = arith.addf %580, %583 : vector<16x16xf32>
    %c116 = arith.constant 116 : index
    %585 = memref.load %arg2[%c116] : memref<144xf32, #tpu.memory_space<smem>>
    %586 = vector.broadcast %585 : f32 to vector<16x16xf32>
    %587 = arith.mulf %586, %29 : vector<16x16xf32>
    %588 = arith.addf %584, %587 : vector<16x16xf32>
    %c117 = arith.constant 117 : index
    %589 = memref.load %arg2[%c117] : memref<144xf32, #tpu.memory_space<smem>>
    %590 = vector.broadcast %589 : f32 to vector<16x16xf32>
    %591 = arith.mulf %590, %31 : vector<16x16xf32>
    %592 = arith.addf %588, %591 : vector<16x16xf32>
    %c118 = arith.constant 118 : index
    %593 = memref.load %arg2[%c118] : memref<144xf32, #tpu.memory_space<smem>>
    %594 = vector.broadcast %593 : f32 to vector<16x16xf32>
    %595 = arith.mulf %594, %33 : vector<16x16xf32>
    %596 = arith.addf %592, %595 : vector<16x16xf32>
    %c119 = arith.constant 119 : index
    %597 = memref.load %arg2[%c119] : memref<144xf32, #tpu.memory_space<smem>>
    %598 = vector.broadcast %597 : f32 to vector<16x16xf32>
    %599 = arith.mulf %598, %35 : vector<16x16xf32>
    %600 = arith.addf %596, %599 : vector<16x16xf32>
    %c120 = arith.constant 120 : index
    %601 = memref.load %arg2[%c120] : memref<144xf32, #tpu.memory_space<smem>>
    %602 = vector.broadcast %601 : f32 to vector<16x16xf32>
    %603 = arith.mulf %602, %37 : vector<16x16xf32>
    %604 = arith.addf %600, %603 : vector<16x16xf32>
    %c121 = arith.constant 121 : index
    %605 = memref.load %arg2[%c121] : memref<144xf32, #tpu.memory_space<smem>>
    %606 = vector.broadcast %605 : f32 to vector<16x16xf32>
    %607 = arith.mulf %606, %39 : vector<16x16xf32>
    %608 = arith.addf %604, %607 : vector<16x16xf32>
    %c122 = arith.constant 122 : index
    %609 = memref.load %arg2[%c122] : memref<144xf32, #tpu.memory_space<smem>>
    %610 = vector.broadcast %609 : f32 to vector<16x16xf32>
    %611 = arith.mulf %610, %41 : vector<16x16xf32>
    %612 = arith.addf %608, %611 : vector<16x16xf32>
    %c123 = arith.constant 123 : index
    %613 = memref.load %arg2[%c123] : memref<144xf32, #tpu.memory_space<smem>>
    %614 = vector.broadcast %613 : f32 to vector<16x16xf32>
    %615 = arith.mulf %614, %43 : vector<16x16xf32>
    %616 = arith.addf %612, %615 : vector<16x16xf32>
    %c124 = arith.constant 124 : index
    %617 = memref.load %arg2[%c124] : memref<144xf32, #tpu.memory_space<smem>>
    %618 = vector.broadcast %617 : f32 to vector<16x16xf32>
    %619 = arith.mulf %618, %45 : vector<16x16xf32>
    %620 = arith.addf %616, %619 : vector<16x16xf32>
    %c125 = arith.constant 125 : index
    %621 = memref.load %arg2[%c125] : memref<144xf32, #tpu.memory_space<smem>>
    %622 = vector.broadcast %621 : f32 to vector<16x16xf32>
    %623 = arith.mulf %622, %47 : vector<16x16xf32>
    %624 = arith.addf %620, %623 : vector<16x16xf32>
    %c126 = arith.constant 126 : index
    %625 = memref.load %arg2[%c126] : memref<144xf32, #tpu.memory_space<smem>>
    %626 = vector.broadcast %625 : f32 to vector<16x16xf32>
    %627 = arith.mulf %626, %49 : vector<16x16xf32>
    %628 = arith.addf %624, %627 : vector<16x16xf32>
    %c127 = arith.constant 127 : index
    %629 = memref.load %arg2[%c127] : memref<144xf32, #tpu.memory_space<smem>>
    %630 = vector.broadcast %629 : f32 to vector<16x16xf32>
    %631 = arith.mulf %630, %51 : vector<16x16xf32>
    %632 = arith.addf %628, %631 : vector<16x16xf32>
    %c128 = arith.constant 128 : index
    %633 = memref.load %arg2[%c128] : memref<144xf32, #tpu.memory_space<smem>>
    %634 = vector.broadcast %633 : f32 to vector<16x16xf32>
    %635 = arith.mulf %634, %53 : vector<16x16xf32>
    %636 = arith.addf %632, %635 : vector<16x16xf32>
    %c129 = arith.constant 129 : index
    %637 = memref.load %arg2[%c129] : memref<144xf32, #tpu.memory_space<smem>>
    %638 = vector.broadcast %637 : f32 to vector<16x16xf32>
    %639 = arith.mulf %638, %55 : vector<16x16xf32>
    %640 = arith.addf %636, %639 : vector<16x16xf32>
    %c130 = arith.constant 130 : index
    %641 = memref.load %arg2[%c130] : memref<144xf32, #tpu.memory_space<smem>>
    %642 = vector.broadcast %641 : f32 to vector<16x16xf32>
    %643 = arith.mulf %642, %57 : vector<16x16xf32>
    %644 = arith.addf %640, %643 : vector<16x16xf32>
    %c131 = arith.constant 131 : index
    %645 = memref.load %arg2[%c131] : memref<144xf32, #tpu.memory_space<smem>>
    %646 = vector.broadcast %645 : f32 to vector<16x16xf32>
    %647 = arith.mulf %646, %59 : vector<16x16xf32>
    %648 = arith.addf %644, %647 : vector<16x16xf32>
    %c132 = arith.constant 132 : index
    %649 = memref.load %arg2[%c132] : memref<144xf32, #tpu.memory_space<smem>>
    %650 = vector.broadcast %649 : f32 to vector<16x16xf32>
    %651 = arith.mulf %650, %61 : vector<16x16xf32>
    %652 = arith.addf %648, %651 : vector<16x16xf32>
    %c133 = arith.constant 133 : index
    %653 = memref.load %arg2[%c133] : memref<144xf32, #tpu.memory_space<smem>>
    %654 = vector.broadcast %653 : f32 to vector<16x16xf32>
    %655 = arith.mulf %654, %63 : vector<16x16xf32>
    %656 = arith.addf %652, %655 : vector<16x16xf32>
    %c134 = arith.constant 134 : index
    %657 = memref.load %arg2[%c134] : memref<144xf32, #tpu.memory_space<smem>>
    %658 = vector.broadcast %657 : f32 to vector<16x16xf32>
    %659 = arith.mulf %658, %65 : vector<16x16xf32>
    %660 = arith.addf %656, %659 : vector<16x16xf32>
    %c135 = arith.constant 135 : index
    %661 = memref.load %arg2[%c135] : memref<144xf32, #tpu.memory_space<smem>>
    %662 = vector.broadcast %661 : f32 to vector<16x16xf32>
    %663 = arith.mulf %662, %67 : vector<16x16xf32>
    %664 = arith.addf %660, %663 : vector<16x16xf32>
    %c136 = arith.constant 136 : index
    %665 = memref.load %arg2[%c136] : memref<144xf32, #tpu.memory_space<smem>>
    %666 = vector.broadcast %665 : f32 to vector<16x16xf32>
    %667 = arith.mulf %666, %69 : vector<16x16xf32>
    %668 = arith.addf %664, %667 : vector<16x16xf32>
    %c137 = arith.constant 137 : index
    %669 = memref.load %arg2[%c137] : memref<144xf32, #tpu.memory_space<smem>>
    %670 = vector.broadcast %669 : f32 to vector<16x16xf32>
    %671 = arith.mulf %670, %71 : vector<16x16xf32>
    %672 = arith.addf %668, %671 : vector<16x16xf32>
    %c138 = arith.constant 138 : index
    %673 = memref.load %arg2[%c138] : memref<144xf32, #tpu.memory_space<smem>>
    %674 = vector.broadcast %673 : f32 to vector<16x16xf32>
    %675 = arith.mulf %674, %73 : vector<16x16xf32>
    %676 = arith.addf %672, %675 : vector<16x16xf32>
    %c139 = arith.constant 139 : index
    %677 = memref.load %arg2[%c139] : memref<144xf32, #tpu.memory_space<smem>>
    %678 = vector.broadcast %677 : f32 to vector<16x16xf32>
    %679 = arith.mulf %678, %75 : vector<16x16xf32>
    %680 = arith.addf %676, %679 : vector<16x16xf32>
    %c140 = arith.constant 140 : index
    %681 = memref.load %arg2[%c140] : memref<144xf32, #tpu.memory_space<smem>>
    %682 = vector.broadcast %681 : f32 to vector<16x16xf32>
    %683 = arith.mulf %682, %77 : vector<16x16xf32>
    %684 = arith.addf %680, %683 : vector<16x16xf32>
    %c141 = arith.constant 141 : index
    %685 = memref.load %arg2[%c141] : memref<144xf32, #tpu.memory_space<smem>>
    %686 = vector.broadcast %685 : f32 to vector<16x16xf32>
    %687 = arith.mulf %686, %79 : vector<16x16xf32>
    %688 = arith.addf %684, %687 : vector<16x16xf32>
    %c142 = arith.constant 142 : index
    %689 = memref.load %arg2[%c142] : memref<144xf32, #tpu.memory_space<smem>>
    %690 = vector.broadcast %689 : f32 to vector<16x16xf32>
    %691 = arith.mulf %690, %81 : vector<16x16xf32>
    %692 = arith.addf %688, %691 : vector<16x16xf32>
    %c143 = arith.constant 143 : index
    %693 = memref.load %arg2[%c143] : memref<144xf32, #tpu.memory_space<smem>>
    %694 = vector.broadcast %693 : f32 to vector<16x16xf32>
    %695 = arith.mulf %694, %83 : vector<16x16xf32>
    %696 = arith.addf %692, %695 : vector<16x16xf32>
    %c3_31 = arith.constant 3 : index
    %697 = memref.load %arg3[%c3_31] : memref<4xf32, #tpu.memory_space<smem>>
    %698 = vector.broadcast %697 : f32 to vector<16x16xf32>
    %699 = arith.addf %696, %698 : vector<16x16xf32>
    %cst_32 = arith.constant 0.000000e+00 : f32
    %700 = vector.broadcast %cst_32 : f32 to vector<16x16xf32>
    %701 = arith.cmpf oge, %699, %700 : vector<16x16xf32>
    %cst_33 = arith.constant 2.000000e-01 : f32
    %702 = vector.broadcast %cst_33 : f32 to vector<16x16xf32>
    %703 = arith.mulf %702, %699 : vector<16x16xf32>
    %704 = arith.select %701, %699, %703 : vector<16x16xi1>, vector<16x16xf32>
    %c0_34 = arith.constant 0 : index
    %c3_35 = arith.constant 3 : index
    %c0_36 = arith.constant 0 : index
    %c0_37 = arith.constant 0 : index
    %705 = vector.load %arg4[%c0_34, %c3_35, %c0_36, %c0_37] : memref<1x4x16x16xf32, #tpu.memory_space<vmem>>, vector<1x1x16x16xf32>
    %706 = vector.shape_cast %705 : vector<1x1x16x16xf32> to vector<16x16xf32>
    %707 = vector.shape_cast %704 : vector<16x16xf32> to vector<1x1x16x16xf32>
    tpu.vector_store %arg4[%c0_34, %c3_35, %c0_36, %c0_37], %707 {strides = array<i32>} : memref<1x4x16x16xf32, #tpu.memory_space<vmem>>, vector<1x1x16x16xf32>,
    return
  }
  func.func @transform_0(%arg0: i32) -> (i32, i32, i32, i32) {
    %c0_i32 = arith.constant 0 : i32
    %c0_i32_0 = arith.constant 0 : i32
    %c0_i32_1 = arith.constant 0 : i32
    %c0_i32_2 = arith.constant 0 : i32
    return %arg0, %c0_i32, %c0_i32_0, %c0_i32_1 : i32, i32, i32, i32
  }
  func.func @transform_1(%arg0: i32) -> i32 {
    %c0_i32 = arith.constant 0 : i32
    %c0_i32_0 = arith.constant 0 : i32
    return %c0_i32 : i32
  }
  func.func @transform_2(%arg0: i32) -> i32 {
    %c0_i32 = arith.constant 0 : i32
    %c0_i32_0 = arith.constant 0 : i32
    return %c0_i32 : i32
  }
  func.func @transform_3(%arg0: i32) -> (i32, i32, i32, i32) {
    %c0_i32 = arith.constant 0 : i32
    %c0_i32_0 = arith.constant 0 : i32
    %c0_i32_1 = arith.constant 0 : i32
    %c0_i32_2 = arith.constant 0 : i32
    return %arg0, %c0_i32, %c0_i32_0, %c0_i32_1 : i32, i32, i32, i32
  }
}

</mosaic_0001>

<llo_original>
// kernel: tpu_custom_call.1
$region0: #{tpu_custom_call.1}
  #allocation0 [shape = 'u32[]', space=smem, size = 0x4, offset = 0x4, fixed_abs, tag = 'smem constant byte address 0x4 - core index']
  #allocation1 [shape = 'u32[144,128]{1,0:T(1,128)}', space=vmem, size = 0x12000, scoped, tag = 'internal scratch']
  %s0 = inlined_call_operand.vmem [shape: f32[2,4,18,18], index: 0, kind: input, shape index: {}]
  %s1 = inlined_call_operand.vmem [shape: f32[144], index: 1, kind: input, shape index: {}]
  %s2 = inlined_call_operand.vmem [shape: f32[4], index: 2, kind: input, shape index: {}]
  %s3 = inlined_call_operand.hbm [shape: f32[2,4,16,16], index: 3, kind: output, shape index: {}]
  %s4 = sld [smem:[#allocation0]]
  $region53: #{tpu_custom_call.1} parent=0
    _
  %s6 = ssub.s32 1, %s4
  %s7 = scalar_select 0, %s6, %s4
  $region1: #{tpu_custom_call.1} parent=0
    #allocation2 [shape = 'u8[1024]{0}', space=smem, size = 0x400, scoped, tag = 'input window, operand 1, single buffered']
    #allocation3 [shape = 's32[2]{0}', space=sflag, size = 0x8, scoped, tag = 'scoped memory for tpu_custom_call.1']
    #allocation4 [shape = 's32[2]{0}', space=sflag, size = 0x8, scoped, tag = 'scoped memory for tpu_custom_call.1']
    #allocation5 [shape = 'u8[512]{0}', space=smem, size = 0x200, scoped, tag = 'input window, operand 2, single buffered']
    #allocation6 [shape = 's32[1]{0}', space=sflag, size = 0x4, scoped, tag = 'scoped memory for tpu_custom_call.1']
    #allocation7 [shape = 'u8[65536]{0}', space=vmem, size = 0x10000, scoped, tag = 'output window, operand 0']
    %8 = vsyncpa [#allocation4], 0
    %9 = vsyncpa [#allocation6], 0
    %10 = vsyncpa [#allocation3], 0
    %s11 = scalar_lea.sflag [#allocation3], 1
    %12 = vsyncpa %s11, 0
    loop: start=0, step=1, limit=4
    $region2: #{tpu_custom_call.1} parent=1 // loop_pre_header
      _
    $region3: #{tpu_custom_call.1} parent=1 // loop_header
      %s14 = sphi 0, %s18
      %p15 = scmp.ge.s32.totalorder %s14, 4
      %s24 = sphi 0, %s26
      %s27 = sphi 0, %s24
      %s28 = sphi 0, %s27
      %s44 = sphi 0, %s28
      %s48 = sphi 0, %s48
      %s50 = sphi 0, %s48
      %s51 = sphi 0, %s50
      %s65 = sphi 0, %s51
      %s69 = sphi 0, %s69
      %s71 = sphi 0, %s69
      %s72 = sphi 0, %s71
      %s86 = sphi 0, %s72
      %s92 = sphi 0, %s94
      %s95 = sphi 0, %s92
      %s96 = sphi 0, %s95
      %s112 = sphi 0, %s96
    $region4: #{tpu_custom_call.1} parent=1 // loop_header_branch
      %17 = sbr.rel (%p15) target = $region8
    $region5: #{tpu_custom_call.1} parent=1 // loop_body
      %s19 = ssub.s32 %s14, 1
      %s20 = ssub.s32 %s14, 2
      %s21 = sadd.s32 %s14, 1
      %s22 = ssub.s32 %s14, %s21
      %p23 = scmp.eq.s32.totalorder %s22, 0
      %s25 = sadd.s32 %s24, 1
      %s26 = scalar_select %p23, %s24, %s25
      %p29 = pneg %p23
      %p30 = scmp.eq.s32.totalorder %s14, 1
      %p31 = por %p29, %p30
      %p32 = scmp.ne.s32.totalorder %s24, %s27
      %p33 = scmp.eq.s32.totalorder %s14, 0
      %p34 = por %p32, %p33
      %p35 = scmp.ne.s32.totalorder %s24, %s27
      %p36 = scmp.eq.s32.totalorder %s19, 1
      %p37 = por %p35, %p36
      %p38 = scmp.ne.s32.totalorder %s27, %s28
      %p39 = scmp.eq.s32.totalorder %s19, 0
      %p40 = por %p38, %p39
      %p41 = scmp.ne.s32.totalorder %s27, %s28
      %p42 = scmp.eq.s32.totalorder %s20, 1
      %p43 = por %p41, %p42
      %p45 = scmp.ne.s32.totalorder %s28, %s44
      %p46 = scmp.eq.s32.totalorder %s20, 0
      %p47 = por %p45, %p46
      %s49 = sadd.s32 %s48, 1
      %p52 = scmp.eq.s32.totalorder %s14, 1
      %p53 = scmp.ne.s32.totalorder %s48, %s50
      %p54 = scmp.eq.s32.totalorder %s14, 0
      %p55 = por %p53, %p54
      %p56 = scmp.ne.s32.totalorder %s48, %s50
      %p57 = scmp.eq.s32.totalorder %s19, 1
      %p58 = por %p56, %p57
      %p59 = scmp.ne.s32.totalorder %s50, %s51
      %p60 = scmp.eq.s32.totalorder %s19, 0
      %p61 = por %p59, %p60
      %p62 = scmp.ne.s32.totalorder %s50, %s51
      %p63 = scmp.eq.s32.totalorder %s20, 1
      %p64 = por %p62, %p63
      %p66 = scmp.ne.s32.totalorder %s51, %s65
      %p67 = scmp.eq.s32.totalorder %s20, 0
      %p68 = por %p66, %p67
      %s70 = sadd.s32 %s69, 1
      %p73 = scmp.eq.s32.totalorder %s14, 1
      %p74 = scmp.ne.s32.totalorder %s69, %s71
      %p75 = scmp.eq.s32.totalorder %s14, 0
      %p76 = por %p74, %p75
      %p77 = scmp.ne.s32.totalorder %s69, %s71
      %p78 = scmp.eq.s32.totalorder %s19, 1
      %p79 = por %p77, %p78
      %p80 = scmp.ne.s32.totalorder %s71, %s72
      %p81 = scmp.eq.s32.totalorder %s19, 0
      %p82 = por %p80, %p81
      %p83 = scmp.ne.s32.totalorder %s71, %s72
      %p84 = scmp.eq.s32.totalorder %s20, 1
      %p85 = por %p83, %p84
      %p87 = scmp.ne.s32.totalorder %s72, %s86
      %p88 = scmp.eq.s32.totalorder %s20, 0
      %p89 = por %p87, %p88
      %s90 = ssub.s32 %s14, %s21
      %p91 = scmp.eq.s32.totalorder %s90, 0
      %s93 = sadd.s32 %s92, 1
      %s94 = scalar_select %p91, %s92, %s93
      %p97 = pneg %p91
      %p98 = scmp.eq.s32.totalorder %s14, 1
      %p99 = por %p97, %p98
      %p100 = scmp.ne.s32.totalorder %s92, %s95
      %p101 = scmp.eq.s32.totalorder %s14, 0
      %p102 = por %p100, %p101
      %p103 = scmp.ne.s32.totalorder %s92, %s95
      %p104 = scmp.eq.s32.totalorder %s19, 1
      %p105 = por %p103, %p104
      %p106 = scmp.ne.s32.totalorder %s95, %s96
      %p107 = scmp.eq.s32.totalorder %s19, 0
      %p108 = por %p106, %p107
      %p109 = scmp.ne.s32.totalorder %s95, %s96
      %p110 = scmp.eq.s32.totalorder %s20, 1
      %p111 = por %p109, %p110
      %p113 = scmp.ne.s32.totalorder %s96, %s112
      %p114 = scmp.eq.s32.totalorder %s20, 0
      %p115 = por %p113, %p114
      %p116 = scmp.le.s32.totalorder 1, %s14
      %p117 = scmp.lt.s32.totalorder %s14, 3
      %p118 = pnand %p116, %p117
      %p119 = pneg %p118
      // Predicated region
      $region9: #{tpu_custom_call.1} parent=5 // pred_check
        _
      $region10: #{tpu_custom_call.1} parent=5 // pred_check_branch
        %121 = sbr.rel (%p118) target = $region12
      $region11: #{tpu_custom_call.1} parent=5 // pred_region
        %s122 = ssub.s32 %s14, 1
        // Predicated region
        $region13: #{tpu_custom_call.1} parent=11 // pred_check
          %p123 = pneg %p61
        $region14: #{tpu_custom_call.1} parent=11 // pred_check_branch
          %125 = sbr.rel (%p123) target = $region16
        $region15: #{tpu_custom_call.1} parent=11 // pred_region
          %s127 = ssub.s32 32, 32
          %128 = vsyncadd [#allocation4], %s127
          %s130 = sshll.u32 %s1, 4
          %s131 = int_to_ptr.vmem [resolvable:$true] %s130
          %133 = dma.vmem_to_smem %s131, 32, [#allocation2], [#allocation4]
        $region16: #{tpu_custom_call.1} parent=11 // pred_fallthru
          _
        // Predicated region
        $region17: #{tpu_custom_call.1} parent=11 // pred_check
          %p134 = pneg %p82
        $region18: #{tpu_custom_call.1} parent=11 // pred_check_branch
          %136 = sbr.rel (%p134) target = $region20
        $region19: #{tpu_custom_call.1} parent=11 // pred_region
          %s138 = ssub.s32 16, 16
          %139 = vsyncadd [#allocation6], %s138
          %s141 = sshll.u32 %s2, 4
          %s142 = int_to_ptr.vmem [resolvable:$true] %s141
          %144 = dma.vmem_to_smem %s142, 16, [#allocation5], [#allocation6]
        $region20: #{tpu_custom_call.1} parent=11 // pred_fallthru
          _
      $region12: #{tpu_custom_call.1} parent=5 // pred_fallthru
        _
      %p145 = scmp.lt.s32.totalorder %s14, 2
      // Predicated region
      $region21: #{tpu_custom_call.1} parent=5 // pred_check
        %p146 = pneg %p145
      $region22: #{tpu_custom_call.1} parent=5 // pred_check_branch
        %148 = sbr.rel (%p146) target = $region24
      $region23: #{tpu_custom_call.1} parent=5 // pred_region
        // Predicated region
        $region25: #{tpu_custom_call.1} parent=23 // pred_check
          %p149 = pneg %p34
        $region26: #{tpu_custom_call.1} parent=23 // pred_check_branch
          %151 = sbr.rel (%p149) target = $region28
        $region27: #{tpu_custom_call.1} parent=23 // pred_region
          %p152 = scmp.lt.s32.totalorder %s14, 1
          %s153 = scalar_select %p152, %s14, 1
          %s154 = smul.addr %s153, 12
          %s155 = smul.addr %s154, 8
          %s156 = scalar_lea.vmem %s0, %s155
        $region28: #{tpu_custom_call.1} parent=23 // pred_fallthru
          _
      $region24: #{tpu_custom_call.1} parent=5 // pred_fallthru
        _
      %p157 = scmp.le.s32.totalorder 1, %s14
      %p158 = scmp.lt.s32.totalorder %s14, 3
      %p159 = pnand %p157, %p158
      %p160 = pneg %p159
      // Predicated region
      $region29: #{tpu_custom_call.1} parent=5 // pred_check
        _
      $region30: #{tpu_custom_call.1} parent=5 // pred_check_branch
        %162 = sbr.rel (%p159) target = $region32
      $region31: #{tpu_custom_call.1} parent=5 // pred_region
        %s163 = ssub.s32 %s14, 1
        // Predicated region
        $region33: #{tpu_custom_call.1} parent=31 // pred_check
          %p164 = pneg %p61
        $region34: #{tpu_custom_call.1} parent=31 // pred_check_branch
          %166 = sbr.rel (%p164) target = $region36
        $region35: #{tpu_custom_call.1} parent=31 // pred_region
          %167 = dma.done [#allocation4], 32
        $region36: #{tpu_custom_call.1} parent=31 // pred_fallthru
          _
        // Predicated region
        $region37: #{tpu_custom_call.1} parent=31 // pred_check
          %p168 = pneg %p82
        $region38: #{tpu_custom_call.1} parent=31 // pred_check_branch
          %170 = sbr.rel (%p168) target = $region40
        $region39: #{tpu_custom_call.1} parent=31 // pred_region
          %171 = dma.done [#allocation6], 16
        $region40: #{tpu_custom_call.1} parent=31 // pred_fallthru
          _
        %172 = sfence
        %p173 = scmp.lt.s32.totalorder %s19, 1
        %s174 = scalar_select %p173, %s19, 1
        %s175 = smul.addr %s174, 12
        %s176 = smul.addr %s175, 8
        %s177 = scalar_lea.vmem %s0, %s176
        %p178 = pneg %p40
        %p179 = pneg %p37
        %p180 = pneg %p61
        %p181 = pneg %p58
        %p182 = pneg %p82
        %p183 = pneg %p79
        %p184 = pneg %p108
        %p185 = pneg %p105
        %s186 = sand.u32 %s95, 1
        %s187 = scalar_lea.sflag [#allocation3], %s186
        %s188 = sand.u32 %s95, 1
        %s189 = smul.addr %s188, 64
        %s190 = scalar_lea.vmem [#allocation7], %s189
        %p191 = scmp.lt.s32.totalorder %s19, 1
        %s192 = scalar_select %p191, %s19, 1
        %s193 = smul.addr %s192, 12
        %s194 = smul.addr %s193, 8
        %s195 = scalar_lea.vmem %s0, %s194
        %v196 = vld [vmem:[%s195] sm:$0xff]
        %v197 = vld [vmem:[%s195 + $0x8] sm:$0xff]
        %v198 = vld [vmem:[%s195 + $0x10] sm:$0x3]
        %v199 = vld [vmem:[%s195 + $0x18] sm:$0xff]
        %v200 = vld [vmem:[%s195 + $0x20] sm:$0xff]
        %v201 = vld [vmem:[%s195 + $0x28] sm:$0x3]
        %v202 = vld [vmem:[%s195 + $0x30] sm:$0xff]
        %v203 = vld [vmem:[%s195 + $0x38] sm:$0xff]
        %v204 = vld [vmem:[%s195 + $0x40] sm:$0x3]
        %v205 = vld [vmem:[%s195 + $0x48] sm:$0xff]
        %v206 = vld [vmem:[%s195 + $0x50] sm:$0xff]
        %v207 = vld [vmem:[%s195 + $0x58] sm:$0x3]
        %v208 = vmul.f32 %v196, %v196
        %v209 = vmul.f32 %v197, %v197
        %v210 = vmul.f32 %v198, %v198
        %v211 = vmul.f32 %v199, %v199
        %v212 = vmul.f32 %v200, %v200
        %v213 = vmul.f32 %v201, %v201
        %v214 = vmul.f32 %v202, %v202
        %v215 = vmul.f32 %v203, %v203
        %v216 = vmul.f32 %v204, %v204
        %v217 = vmul.f32 %v205, %v205
        %v218 = vmul.f32 %v206, %v206
        %v219 = vmul.f32 %v207, %v207
        %vm220 = vcmask 146432
        %v221 = vsel %vm220, %v208, 0.0
        %v222 = vsel %vm220, %v211, 0.0
        %v223 = vadd.f32 %v221, %v222
        %v224 = vsel %vm220, %v214, 0.0
        %v225 = vadd.f32 %v223, %v224
        %v226 = vsel %vm220, %v217, 0.0
        %v227 = vadd.f32 %v225, %v226
        %v228 = vsel %vm220, %v209, 0.0
        %v229 = vsel %vm220, %v212, 0.0
        %v230 = vadd.f32 %v228, %v229
        %v231 = vsel %vm220, %v215, 0.0
        %v232 = vadd.f32 %v230, %v231
        %v233 = vsel %vm220, %v218, 0.0
        %v234 = vadd.f32 %v232, %v233
        %vm235 = vcmask 140288
        %v236 = vsel %vm235, %v210, 0.0
        %v237 = vsel %vm235, %v213, 0.0
        %v238 = vadd.f32 %v236, %v237
        %v239 = vsel %vm235, %v216, 0.0
        %v240 = vadd.f32 %v238, %v239
        %v241 = vsel %vm235, %v219, 0.0
        %v242 = vadd.f32 %v240, %v241
        %v243 = vrcp.pop 4.0
        %v244 = vmul.f32 %v227, %v243
        %v245 = vmul.f32 %v234, %v243
        %v246 = vmul.f32 %v242, %v243
        %v247 = vadd.f32 %v244, 1e-08
        %v248 = vadd.f32 %v245, 1e-08
        %v249 = vadd.f32 %v246, 1e-08
        %v250 = vrsqrt.pop %v247
        %v251 = vrsqrt.pop %v248
        %v252 = vrsqrt.pop %v249
        %v253 = vmul.f32 %v196, %v250
        %v254 = vmul.f32 %v197, %v251
        %v255 = vmul.f32 %v198, %v252
        %v256 = vmul.f32 %v199, %v250
        %v257 = vmul.f32 %v200, %v251
        %v258 = vmul.f32 %v201, %v252
        %v259 = vmul.f32 %v202, %v250
        %v260 = vmul.f32 %v203, %v251
        %v261 = vmul.f32 %v204, %v252
        %v262 = vmul.f32 %v205, %v250
        %v263 = vmul.f32 %v206, %v251
        %v264 = vmul.f32 %v207, %v252
        %s265 = sld [smem:[#allocation2]]
        %v266 = vstv %s265
        %v267 = vmul.f32 %v266, %v253
        %v268 = vmul.f32 %v266, %v254
        %v269 = vadd.f32 %v267, 0.0
        %v270 = vadd.f32 %v268, 0.0
        %s271 = sld [smem:[#allocation2 + $0x1]]
        %v272 = vstv %s271
        %v273 = vmul.f32 %v272, %v253
        %v274 = vmul.f32 %v272, %v254
        %277 = vrot.lane.b32.xlu0 %v273, 127
        %v278 = vpop.permute.xlu0 %277
        %279 = vrot.lane.b32.xlu0 %v274, 127
        %v280 = vpop.permute.xlu0 %279
        %v283 = vadd.f32 %v269, %v278
        %v284 = vadd.f32 %v270, %v280
        %s285 = sld [smem:[#allocation2 + $0x2]]
        %v286 = vstv %s285
        %v287 = vmul.f32 %v286, %v253
        %v288 = vmul.f32 %v286, %v254
        %291 = vrot.lane.b32.xlu0 %v287, 126
        %v292 = vpop.permute.xlu0 %291
        %293 = vrot.lane.b32.xlu0 %v288, 126
        %v294 = vpop.permute.xlu0 %293
        %v297 = vadd.f32 %v283, %v292
        %v298 = vadd.f32 %v284, %v294
        %s299 = sld [smem:[#allocation2 + $0x3]]
        %v300 = vstv %s299
        %v301 = vmul.f32 %v300, %v253
        %v302 = vmul.f32 %v300, %v254
        %v303 = vmul.f32 %v300, %v255
        %vm307 = vcmask 1046528
        %v308 = vrot.slane %v301, 1
        %v309 = vrot.slane %v302, 1
        %v310 = vsel %vm307, %v308, %v309
        %v311 = vrot.slane %v303, 1
        %v312 = vsel %vm307, %v309, %v311
        %v315 = vadd.f32 %v297, %v310
        %v316 = vadd.f32 %v298, %v312
        %s317 = sld [smem:[#allocation2 + $0x4]]
        %v318 = vstv %s317
        %v319 = vmul.f32 %v318, %v253
        %v320 = vmul.f32 %v318, %v254
        %v321 = vmul.f32 %v318, %v255
        %v325 = vrot.slane %v319, 1
        %v326 = vrot.slane %v320, 1
        %v327 = vsel %vm307, %v325, %v326
        %v328 = vrot.slane %v321, 1
        %v329 = vsel %vm307, %v326, %v328
        %330 = vrot.lane.b32.xlu0 %v327, 127
        %v331 = vpop.permute.xlu0 %330
        %332 = vrot.lane.b32.xlu0 %v329, 127
        %v333 = vpop.permute.xlu0 %332
        %v336 = vadd.f32 %v315, %v331
        %v337 = vadd.f32 %v316, %v333
        %s338 = sld [smem:[#allocation2 + $0x5]]
        %v339 = vstv %s338
        %v340 = vmul.f32 %v339, %v253
        %v341 = vmul.f32 %v339, %v254
        %v342 = vmul.f32 %v339, %v255
        %v346 = vrot.slane %v340, 1
        %v347 = vrot.slane %v341, 1
        %v348 = vsel %vm307, %v346, %v347
        %v349 = vrot.slane %v342, 1
        %v350 = vsel %vm307, %v347, %v349
        %351 = vrot.lane.b32.xlu0 %v348, 126
        %v352 = vpop.permute.xlu0 %351
        %353 = vrot.lane.b32.xlu0 %v350, 126
        %v354 = vpop.permute.xlu0 %353
        %v357 = vadd.f32 %v336, %v352
        %v358 = vadd.f32 %v337, %v354
        %s359 = sld [smem:[#allocation2 + $0x6]]
        %v360 = vstv %s359
        %v361 = vmul.f32 %v360, %v253
        %v362 = vmul.f32 %v360, %v254
        %v363 = vmul.f32 %v360, %v255
        %vm367 = vcmask 1045504
        %v368 = vrot.slane %v361, 2
        %v369 = vrot.slane %v362, 2
        %v370 = vsel %vm367, %v368, %v369
        %v371 = vrot.slane %v363, 2
        %v372 = vsel %vm367, %v369, %v371
        %v375 = vadd.f32 %v357, %v370
        %v376 = vadd.f32 %v358, %v372
        %s377 = sld [smem:[#allocation2 + $0x7]]
        %v378 = vstv %s377
        %v379 = vmul.f32 %v378, %v253
        %v380 = vmul.f32 %v378, %v254
        %v381 = vmul.f32 %v378, %v255
        %v385 = vrot.slane %v379, 2
        %v386 = vrot.slane %v380, 2
        %v387 = vsel %vm367, %v385, %v386
        %v388 = vrot.slane %v381, 2
        %v389 = vsel %vm367, %v386, %v388
        %390 = vrot.lane.b32.xlu0 %v387, 127
        %v391 = vpop.permute.xlu0 %390
        %392 = vrot.lane.b32.xlu0 %v389, 127
        %v393 = vpop.permute.xlu0 %392
        %v396 = vadd.f32 %v375, %v391
        %v397 = vadd.f32 %v376, %v393
        %s398 = sld [smem:[#allocation2 + $0x8]]
        %v399 = vstv %s398
        %v400 = vmul.f32 %v399, %v253
        %v401 = vmul.f32 %v399, %v254
        %v402 = vmul.f32 %v399, %v255
        %v406 = vrot.slane %v400, 2
        %v407 = vrot.slane %v401, 2
        %v408 = vsel %vm367, %v406, %v407
        %v409 = vrot.slane %v402, 2
        %v410 = vsel %vm367, %v407, %v409
        %411 = vrot.lane.b32.xlu0 %v408, 126
        %v412 = vpop.permute.xlu0 %411
        %413 = vrot.lane.b32.xlu0 %v410, 126
        %v414 = vpop.permute.xlu0 %413
        %v417 = vadd.f32 %v396, %v412
        %v418 = vadd.f32 %v397, %v414
        %s419 = sld [smem:[#allocation2 + $0x9]]
        %v420 = vstv %s419
        %v421 = vmul.f32 %v420, %v256
        %v422 = vmul.f32 %v420, %v257
        %v423 = vadd.f32 %v417, %v421
        %v424 = vadd.f32 %v418, %v422
        %s425 = sld [smem:[#allocation2 + $0xa]]
        %v426 = vstv %s425
        %v427 = vmul.f32 %v426, %v256
        %v428 = vmul.f32 %v426, %v257
        %431 = vrot.lane.b32.xlu0 %v427, 127
        %v432 = vpop.permute.xlu0 %431
        %433 = vrot.lane.b32.xlu0 %v428, 127
        %v434 = vpop.permute.xlu0 %433
        %v437 = vadd.f32 %v423, %v432
        %v438 = vadd.f32 %v424, %v434
        %s439 = sld [smem:[#allocation2 + $0xb]]
        %v440 = vstv %s439
        %v441 = vmul.f32 %v440, %v256
        %v442 = vmul.f32 %v440, %v257
        %445 = vrot.lane.b32.xlu0 %v441, 126
        %v446 = vpop.permute.xlu0 %445
        %447 = vrot.lane.b32.xlu0 %v442, 126
        %v448 = vpop.permute.xlu0 %447
        %v451 = vadd.f32 %v437, %v446
        %v452 = vadd.f32 %v438, %v448
        %s453 = sld [smem:[#allocation2 + $0xc]]
        %v454 = vstv %s453
        %v455 = vmul.f32 %v454, %v256
        %v456 = vmul.f32 %v454, %v257
        %v457 = vmul.f32 %v454, %v258
        %v461 = vrot.slane %v455, 1
        %v462 = vrot.slane %v456, 1
        %v463 = vsel %vm307, %v461, %v462
        %v464 = vrot.slane %v457, 1
        %v465 = vsel %vm307, %v462, %v464
        %v468 = vadd.f32 %v451, %v463
        %v469 = vadd.f32 %v452, %v465
        %s470 = sld [smem:[#allocation2 + $0xd]]
        %v471 = vstv %s470
        %v472 = vmul.f32 %v471, %v256
        %v473 = vmul.f32 %v471, %v257
        %v474 = vmul.f32 %v471, %v258
        %v478 = vrot.slane %v472, 1
        %v479 = vrot.slane %v473, 1
        %v480 = vsel %vm307, %v478, %v479
        %v481 = vrot.slane %v474, 1
        %v482 = vsel %vm307, %v479, %v481
        %483 = vrot.lane.b32.xlu0 %v480, 127
        %v484 = vpop.permute.xlu0 %483
        %485 = vrot.lane.b32.xlu0 %v482, 127
        %v486 = vpop.permute.xlu0 %485
        %v489 = vadd.f32 %v468, %v484
        %v490 = vadd.f32 %v469, %v486
        %s491 = sld [smem:[#allocation2 + $0xe]]
        %v492 = vstv %s491
        %v493 = vmul.f32 %v492, %v256
        %v494 = vmul.f32 %v492, %v257
        %v495 = vmul.f32 %v492, %v258
        %v499 = vrot.slane %v493, 1
        %v500 = vrot.slane %v494, 1
        %v501 = vsel %vm307, %v499, %v500
        %v502 = vrot.slane %v495, 1
        %v503 = vsel %vm307, %v500, %v502
        %504 = vrot.lane.b32.xlu0 %v501, 126
        %v505 = vpop.permute.xlu0 %504
        %506 = vrot.lane.b32.xlu0 %v503, 126
        %v507 = vpop.permute.xlu0 %506
        %v510 = vadd.f32 %v489, %v505
        %v511 = vadd.f32 %v490, %v507
        %s512 = sld [smem:[#allocation2 + $0xf]]
        %v513 = vstv %s512
        %v514 = vmul.f32 %v513, %v256
        %v515 = vmul.f32 %v513, %v257
        %v516 = vmul.f32 %v513, %v258
        %v520 = vrot.slane %v514, 2
        %v521 = vrot.slane %v515, 2
        %v522 = vsel %vm367, %v520, %v521
        %v523 = vrot.slane %v516, 2
        %v524 = vsel %vm367, %v521, %v523
        %v527 = vadd.f32 %v510, %v522
        %v528 = vadd.f32 %v511, %v524
        %s529 = sld [smem:[#allocation2 + $0x10]]
        %v530 = vstv %s529
        %v531 = vmul.f32 %v530, %v256
        %v532 = vmul.f32 %v530, %v257
        %v533 = vmul.f32 %v530, %v258
        %v537 = vrot.slane %v531, 2
        %v538 = vrot.slane %v532, 2
        %v539 = vsel %vm367, %v537, %v538
        %v540 = vrot.slane %v533, 2
        %v541 = vsel %vm367, %v538, %v540
        %542 = vrot.lane.b32.xlu0 %v539, 127
        %v543 = vpop.permute.xlu0 %542
        %544 = vrot.lane.b32.xlu0 %v541, 127
        %v545 = vpop.permute.xlu0 %544
        %v548 = vadd.f32 %v527, %v543
        %v549 = vadd.f32 %v528, %v545
        %s550 = sld [smem:[#allocation2 + $0x11]]
        %v551 = vstv %s550
        %v552 = vmul.f32 %v551, %v256
        %v553 = vmul.f32 %v551, %v257
        %v554 = vmul.f32 %v551, %v258
        %v558 = vrot.slane %v552, 2
        %v559 = vrot.slane %v553, 2
        %v560 = vsel %vm367, %v558, %v559
        %v561 = vrot.slane %v554, 2
        %v562 = vsel %vm367, %v559, %v561
        %563 = vrot.lane.b32.xlu0 %v560, 126
        %v564 = vpop.permute.xlu0 %563
        %565 = vrot.lane.b32.xlu0 %v562, 126
        %v566 = vpop.permute.xlu0 %565
        %v569 = vadd.f32 %v548, %v564
        %v570 = vadd.f32 %v549, %v566
        %s571 = sld [smem:[#allocation2 + $0x12]]
        %v572 = vstv %s571
        %v573 = vmul.f32 %v572, %v259
        %v574 = vmul.f32 %v572, %v260
        %v575 = vadd.f32 %v569, %v573
        %v576 = vadd.f32 %v570, %v574
        %s577 = sld [smem:[#allocation2 + $0x13]]
        %v578 = vstv %s577
        %v579 = vmul.f32 %v578, %v259
        %v580 = vmul.f32 %v578, %v260
        %583 = vrot.lane.b32.xlu0 %v579, 127
        %v584 = vpop.permute.xlu0 %583
        %585 = vrot.lane.b32.xlu0 %v580, 127
        %v586 = vpop.permute.xlu0 %585
        %v589 = vadd.f32 %v575, %v584
        %v590 = vadd.f32 %v576, %v586
        %s591 = sld [smem:[#allocation2 + $0x14]]
        %v592 = vstv %s591
        %v593 = vmul.f32 %v592, %v259
        %v594 = vmul.f32 %v592, %v260
        %597 = vrot.lane.b32.xlu0 %v593, 126
        %v598 = vpop.permute.xlu0 %597
        %599 = vrot.lane.b32.xlu0 %v594, 126
        %v600 = vpop.permute.xlu0 %599
        %v603 = vadd.f32 %v589, %v598
        %v604 = vadd.f32 %v590, %v600
        %s605 = sld [smem:[#allocation2 + $0x15]]
        %v606 = vstv %s605
        %v607 = vmul.f32 %v606, %v259
        %v608 = vmul.f32 %v606, %v260
        %v609 = vmul.f32 %v606, %v261
        %v613 = vrot.slane %v607, 1
        %v614 = vrot.slane %v608, 1
        %v615 = vsel %vm307, %v613, %v614
        %v616 = vrot.slane %v609, 1
        %v617 = vsel %vm307, %v614, %v616
        %v620 = vadd.f32 %v603, %v615
        %v621 = vadd.f32 %v604, %v617
        %s622 = sld [smem:[#allocation2 + $0x16]]
        %v623 = vstv %s622
        %v624 = vmul.f32 %v623, %v259
        %v625 = vmul.f32 %v623, %v260
        %v626 = vmul.f32 %v623, %v261
        %v630 = vrot.slane %v624, 1
        %v631 = vrot.slane %v625, 1
        %v632 = vsel %vm307, %v630, %v631
        %v633 = vrot.slane %v626, 1
        %v634 = vsel %vm307, %v631, %v633
        %635 = vrot.lane.b32.xlu0 %v632, 127
        %v636 = vpop.permute.xlu0 %635
        %637 = vrot.lane.b32.xlu0 %v634, 127
        %v638 = vpop.permute.xlu0 %637
        %v641 = vadd.f32 %v620, %v636
        %v642 = vadd.f32 %v621, %v638
        %s643 = sld [smem:[#allocation2 + $0x17]]
        %v644 = vstv %s643
        %v645 = vmul.f32 %v644, %v259
        %v646 = vmul.f32 %v644, %v260
        %v647 = vmul.f32 %v644, %v261
        %v651 = vrot.slane %v645, 1
        %v652 = vrot.slane %v646, 1
        %v653 = vsel %vm307, %v651, %v652
        %v654 = vrot.slane %v647, 1
        %v655 = vsel %vm307, %v652, %v654
        %656 = vrot.lane.b32.xlu0 %v653, 126
        %v657 = vpop.permute.xlu0 %656
        %658 = vrot.lane.b32.xlu0 %v655, 126
        %v659 = vpop.permute.xlu0 %658
        %v662 = vadd.f32 %v641, %v657
        %v663 = vadd.f32 %v642, %v659
        %s664 = sld [smem:[#allocation2 + $0x18]]
        %v665 = vstv %s664
        %v666 = vmul.f32 %v665, %v259
        %v667 = vmul.f32 %v665, %v260
        %v668 = vmul.f32 %v665, %v261
        %v672 = vrot.slane %v666, 2
        %v673 = vrot.slane %v667, 2
        %v674 = vsel %vm367, %v672, %v673
        %v675 = vrot.slane %v668, 2
        %v676 = vsel %vm367, %v673, %v675
        %v679 = vadd.f32 %v662, %v674
        %v680 = vadd.f32 %v663, %v676
        %s681 = sld [smem:[#allocation2 + $0x19]]
        %v682 = vstv %s681
        %v683 = vmul.f32 %v682, %v259
        %v684 = vmul.f32 %v682, %v260
        %v685 = vmul.f32 %v682, %v261
        %v689 = vrot.slane %v683, 2
        %v690 = vrot.slane %v684, 2
        %v691 = vsel %vm367, %v689, %v690
        %v692 = vrot.slane %v685, 2
        %v693 = vsel %vm367, %v690, %v692
        %694 = vrot.lane.b32.xlu0 %v691, 127
        %v695 = vpop.permute.xlu0 %694
        %696 = vrot.lane.b32.xlu0 %v693, 127
        %v697 = vpop.permute.xlu0 %696
        %v700 = vadd.f32 %v679, %v695
        %v701 = vadd.f32 %v680, %v697
        %s702 = sld [smem:[#allocation2 + $0x1a]]
        %v703 = vstv %s702
        %v704 = vmul.f32 %v703, %v259
        %v705 = vmul.f32 %v703, %v260
        %v706 = vmul.f32 %v703, %v261
        %v710 = vrot.slane %v704, 2
        %v711 = vrot.slane %v705, 2
        %v712 = vsel %vm367, %v710, %v711
        %v713 = vrot.slane %v706, 2
        %v714 = vsel %vm367, %v711, %v713
        %715 = vrot.lane.b32.xlu0 %v712, 126
        %v716 = vpop.permute.xlu0 %715
        %717 = vrot.lane.b32.xlu0 %v714, 126
        %v718 = vpop.permute.xlu0 %717
        %v721 = vadd.f32 %v700, %v716
        %v722 = vadd.f32 %v701, %v718
        %s723 = sld [smem:[#allocation2 + $0x1b]]
        %v724 = vstv %s723
        %v725 = vmul.f32 %v724, %v262
        %v726 = vmul.f32 %v724, %v263
        %v727 = vadd.f32 %v721, %v725
        %v728 = vadd.f32 %v722, %v726
        %s729 = sld [smem:[#allocation2 + $0x1c]]
        %v730 = vstv %s729
        %v731 = vmul.f32 %v730, %v262
        %v732 = vmul.f32 %v730, %v263
        %735 = vrot.lane.b32.xlu0 %v731, 127
        %v736 = vpop.permute.xlu0 %735
        %737 = vrot.lane.b32.xlu0 %v732, 127
        %v738 = vpop.permute.xlu0 %737
        %v741 = vadd.f32 %v727, %v736
        %v742 = vadd.f32 %v728, %v738
        %s743 = sld [smem:[#allocation2 + $0x1d]]
        %v744 = vstv %s743
        %v745 = vmul.f32 %v744, %v262
        %v746 = vmul.f32 %v744, %v263
        %749 = vrot.lane.b32.xlu0 %v745, 126
        %v750 = vpop.permute.xlu0 %749
        %751 = vrot.lane.b32.xlu0 %v746, 126
        %v752 = vpop.permute.xlu0 %751
        %v755 = vadd.f32 %v741, %v750
        %v756 = vadd.f32 %v742, %v752
        %s757 = sld [smem:[#allocation2 + $0x1e]]
        %v758 = vstv %s757
        %v759 = vmul.f32 %v758, %v262
        %v760 = vmul.f32 %v758, %v263
        %v761 = vmul.f32 %v758, %v264
        %v765 = vrot.slane %v759, 1
        %v766 = vrot.slane %v760, 1
        %v767 = vsel %vm307, %v765, %v766
        %v768 = vrot.slane %v761, 1
        %v769 = vsel %vm307, %v766, %v768
        %v772 = vadd.f32 %v755, %v767
        %v773 = vadd.f32 %v756, %v769
        %s774 = sld [smem:[#allocation2 + $0x1f]]
        %v775 = vstv %s774
        %v776 = vmul.f32 %v775, %v262
        %v777 = vmul.f32 %v775, %v263
        %v778 = vmul.f32 %v775, %v264
        %v782 = vrot.slane %v776, 1
        %v783 = vrot.slane %v777, 1
        %v784 = vsel %vm307, %v782, %v783
        %v785 = vrot.slane %v778, 1
        %v786 = vsel %vm307, %v783, %v785
        %787 = vrot.lane.b32.xlu0 %v784, 127
        %v788 = vpop.permute.xlu0 %787
        %789 = vrot.lane.b32.xlu0 %v786, 127
        %v790 = vpop.permute.xlu0 %789
        %v793 = vadd.f32 %v772, %v788
        %v794 = vadd.f32 %v773, %v790
        %s795 = sld [smem:[#allocation2 + $0x20]]
        %v796 = vstv %s795
        %v797 = vmul.f32 %v796, %v262
        %v798 = vmul.f32 %v796, %v263
        %v799 = vmul.f32 %v796, %v264
        %v803 = vrot.slane %v797, 1
        %v804 = vrot.slane %v798, 1
        %v805 = vsel %vm307, %v803, %v804
        %v806 = vrot.slane %v799, 1
        %v807 = vsel %vm307, %v804, %v806
        %808 = vrot.lane.b32.xlu0 %v805, 126
        %v809 = vpop.permute.xlu0 %808
        %810 = vrot.lane.b32.xlu0 %v807, 126
        %v811 = vpop.permute.xlu0 %810
        %v814 = vadd.f32 %v793, %v809
        %v815 = vadd.f32 %v794, %v811
        %s816 = sld [smem:[#allocation2 + $0x21]]
        %v817 = vstv %s816
        %v818 = vmul.f32 %v817, %v262
        %v819 = vmul.f32 %v817, %v263
        %v820 = vmul.f32 %v817, %v264
        %v824 = vrot.slane %v818, 2
        %v825 = vrot.slane %v819, 2
        %v826 = vsel %vm367, %v824, %v825
        %v827 = vrot.slane %v820, 2
        %v828 = vsel %vm367, %v825, %v827
        %v831 = vadd.f32 %v814, %v826
        %v832 = vadd.f32 %v815, %v828
        %s833 = sld [smem:[#allocation2 + $0x22]]
        %v834 = vstv %s833
        %v835 = vmul.f32 %v834, %v262
        %v836 = vmul.f32 %v834, %v263
        %v837 = vmul.f32 %v834, %v264
        %v841 = vrot.slane %v835, 2
        %v842 = vrot.slane %v836, 2
        %v843 = vsel %vm367, %v841, %v842
        %v844 = vrot.slane %v837, 2
        %v845 = vsel %vm367, %v842, %v844
        %846 = vrot.lane.b32.xlu0 %v843, 127
        %v847 = vpop.permute.xlu0 %846
        %848 = vrot.lane.b32.xlu0 %v845, 127
        %v849 = vpop.permute.xlu0 %848
        %v852 = vadd.f32 %v831, %v847
        %v853 = vadd.f32 %v832, %v849
        %s854 = sld [smem:[#allocation2 + $0x23]]
        %v855 = vstv %s854
        %v856 = vmul.f32 %v855, %v262
        %v857 = vmul.f32 %v855, %v263
        %v858 = vmul.f32 %v855, %v264
        %v862 = vrot.slane %v856, 2
        %v863 = vrot.slane %v857, 2
        %v864 = vsel %vm367, %v862, %v863
        %v865 = vrot.slane %v858, 2
        %v866 = vsel %vm367, %v863, %v865
        %867 = vrot.lane.b32.xlu0 %v864, 126
        %v868 = vpop.permute.xlu0 %867
        %869 = vrot.lane.b32.xlu0 %v866, 126
        %v870 = vpop.permute.xlu0 %869
        %v873 = vadd.f32 %v852, %v868
        %v874 = vadd.f32 %v853, %v870
        %s875 = sld [smem:[#allocation5]]
        %v876 = vstv %s875
        %v877 = vadd.f32 %v873, %v876
        %v878 = vadd.f32 %v874, %v876
        %vm879 = vcmp.ge.f32.partialorder %v877, 0.0
        %vm880 = vcmp.ge.f32.partialorder %v878, 0.0
        %v881 = vmul.f32 %v877, 0.2
        %v882 = vmul.f32 %v878, 0.2
        %v883 = vsel %vm879, %v877, %v881
        %v884 = vsel %vm880, %v878, %v882
        %vm885 = vcmask 130048
        %886 = vst.msk [vmem:[%s190] sm:$0xff] %vm885, %v883
        %887 = vst.msk [vmem:[%s190 + $0x8] sm:$0xff] %vm885, %v884
        %s888 = sld [smem:[#allocation2 + $0x24]]
        %v889 = vstv %s888
        %v890 = vmul.f32 %v889, %v253
        %v891 = vmul.f32 %v889, %v254
        %v892 = vadd.f32 %v890, 0.0
        %v893 = vadd.f32 %v891, 0.0
        %s894 = sld [smem:[#allocation2 + $0x25]]
        %v895 = vstv %s894
        %v896 = vmul.f32 %v895, %v253
        %v897 = vmul.f32 %v895, %v254
        %900 = vrot.lane.b32.xlu0 %v896, 127
        %v901 = vpop.permute.xlu0 %900
        %902 = vrot.lane.b32.xlu0 %v897, 127
        %v903 = vpop.permute.xlu0 %902
        %v906 = vadd.f32 %v892, %v901
        %v907 = vadd.f32 %v893, %v903
        %s908 = sld [smem:[#allocation2 + $0x26]]
        %v909 = vstv %s908
        %v910 = vmul.f32 %v909, %v253
        %v911 = vmul.f32 %v909, %v254
        %914 = vrot.lane.b32.xlu0 %v910, 126
        %v915 = vpop.permute.xlu0 %914
        %916 = vrot.lane.b32.xlu0 %v911, 126
        %v917 = vpop.permute.xlu0 %916
        %v920 = vadd.f32 %v906, %v915
        %v921 = vadd.f32 %v907, %v917
        %s922 = sld [smem:[#allocation2 + $0x27]]
        %v923 = vstv %s922
        %v924 = vmul.f32 %v923, %v253
        %v925 = vmul.f32 %v923, %v254
        %v926 = vmul.f32 %v923, %v255
        %v930 = vrot.slane %v924, 1
        %v931 = vrot.slane %v925, 1
        %v932 = vsel %vm307, %v930, %v931
        %v933 = vrot.slane %v926, 1
        %v934 = vsel %vm307, %v931, %v933
        %v937 = vadd.f32 %v920, %v932
        %v938 = vadd.f32 %v921, %v934
        %s939 = sld [smem:[#allocation2 + $0x28]]
        %v940 = vstv %s939
        %v941 = vmul.f32 %v940, %v253
        %v942 = vmul.f32 %v940, %v254
        %v943 = vmul.f32 %v940, %v255
        %v947 = vrot.slane %v941, 1
        %v948 = vrot.slane %v942, 1
        %v949 = vsel %vm307, %v947, %v948
        %v950 = vrot.slane %v943, 1
        %v951 = vsel %vm307, %v948, %v950
        %952 = vrot.lane.b32.xlu0 %v949, 127
        %v953 = vpop.permute.xlu0 %952
        %954 = vrot.lane.b32.xlu0 %v951, 127
        %v955 = vpop.permute.xlu0 %954
        %v958 = vadd.f32 %v937, %v953
        %v959 = vadd.f32 %v938, %v955
        %s960 = sld [smem:[#allocation2 + $0x29]]
        %v961 = vstv %s960
        %v962 = vmul.f32 %v961, %v253
        %v963 = vmul.f32 %v961, %v254
        %v964 = vmul.f32 %v961, %v255
        %v968 = vrot.slane %v962, 1
        %v969 = vrot.slane %v963, 1
        %v970 = vsel %vm307, %v968, %v969
        %v971 = vrot.slane %v964, 1
        %v972 = vsel %vm307, %v969, %v971
        %973 = vrot.lane.b32.xlu0 %v970, 126
        %v974 = vpop.permute.xlu0 %973
        %975 = vrot.lane.b32.xlu0 %v972, 126
        %v976 = vpop.permute.xlu0 %975
        %v979 = vadd.f32 %v958, %v974
        %v980 = vadd.f32 %v959, %v976
        %s981 = sld [smem:[#allocation2 + $0x2a]]
        %v982 = vstv %s981
        %v983 = vmul.f32 %v982, %v253
        %v984 = vmul.f32 %v982, %v254
        %v985 = vmul.f32 %v982, %v255
        %v989 = vrot.slane %v983, 2
        %v990 = vrot.slane %v984, 2
        %v991 = vsel %vm367, %v989, %v990
        %v992 = vrot.slane %v985, 2
        %v993 = vsel %vm367, %v990, %v992
        %v996 = vadd.f32 %v979, %v991
        %v997 = vadd.f32 %v980, %v993
        %s998 = sld [smem:[#allocation2 + $0x2b]]
        %v999 = vstv %s998
        %v1000 = vmul.f32 %v999, %v253
        %v1001 = vmul.f32 %v999, %v254
        %v1002 = vmul.f32 %v999, %v255
        %v1006 = vrot.slane %v1000, 2
        %v1007 = vrot.slane %v1001, 2
        %v1008 = vsel %vm367, %v1006, %v1007
        %v1009 = vrot.slane %v1002, 2
        %v1010 = vsel %vm367, %v1007, %v1009
        %1011 = vrot.lane.b32.xlu0 %v1008, 127
        %v1012 = vpop.permute.xlu0 %1011
        %1013 = vrot.lane.b32.xlu0 %v1010, 127
        %v1014 = vpop.permute.xlu0 %1013
        %v1017 = vadd.f32 %v996, %v1012
        %v1018 = vadd.f32 %v997, %v1014
        %s1019 = sld [smem:[#allocation2 + $0x2c]]
        %v1020 = vstv %s1019
        %v1021 = vmul.f32 %v1020, %v253
        %v1022 = vmul.f32 %v1020, %v254
        %v1023 = vmul.f32 %v1020, %v255
        %v1027 = vrot.slane %v1021, 2
        %v1028 = vrot.slane %v1022, 2
        %v1029 = vsel %vm367, %v1027, %v1028
        %v1030 = vrot.slane %v1023, 2
        %v1031 = vsel %vm367, %v1028, %v1030
        %1032 = vrot.lane.b32.xlu0 %v1029, 126
        %v1033 = vpop.permute.xlu0 %1032
        %1034 = vrot.lane.b32.xlu0 %v1031, 126
        %v1035 = vpop.permute.xlu0 %1034
        %v1038 = vadd.f32 %v1017, %v1033
        %v1039 = vadd.f32 %v1018, %v1035
        %s1040 = sld [smem:[#allocation2 + $0x2d]]
        %v1041 = vstv %s1040
        %v1042 = vmul.f32 %v1041, %v256
        %v1043 = vmul.f32 %v1041, %v257
        %v1044 = vadd.f32 %v1038, %v1042
        %v1045 = vadd.f32 %v1039, %v1043
        %s1046 = sld [smem:[#allocation2 + $0x2e]]
        %v1047 = vstv %s1046
        %v1048 = vmul.f32 %v1047, %v256
        %v1049 = vmul.f32 %v1047, %v257
        %1052 = vrot.lane.b32.xlu0 %v1048, 127
        %v1053 = vpop.permute.xlu0 %1052
        %1054 = vrot.lane.b32.xlu0 %v1049, 127
        %v1055 = vpop.permute.xlu0 %1054
        %v1058 = vadd.f32 %v1044, %v1053
        %v1059 = vadd.f32 %v1045, %v1055
        %s1060 = sld [smem:[#allocation2 + $0x2f]]
        %v1061 = vstv %s1060
        %v1062 = vmul.f32 %v1061, %v256
        %v1063 = vmul.f32 %v1061, %v257
        %1066 = vrot.lane.b32.xlu0 %v1062, 126
        %v1067 = vpop.permute.xlu0 %1066
        %1068 = vrot.lane.b32.xlu0 %v1063, 126
        %v1069 = vpop.permute.xlu0 %1068
        %v1072 = vadd.f32 %v1058, %v1067
        %v1073 = vadd.f32 %v1059, %v1069
        %s1074 = sld [smem:[#allocation2 + $0x30]]
        %v1075 = vstv %s1074
        %v1076 = vmul.f32 %v1075, %v256
        %v1077 = vmul.f32 %v1075, %v257
        %v1078 = vmul.f32 %v1075, %v258
        %v1082 = vrot.slane %v1076, 1
        %v1083 = vrot.slane %v1077, 1
        %v1084 = vsel %vm307, %v1082, %v1083
        %v1085 = vrot.slane %v1078, 1
        %v1086 = vsel %vm307, %v1083, %v1085
        %v1089 = vadd.f32 %v1072, %v1084
        %v1090 = vadd.f32 %v1073, %v1086
        %s1091 = sld [smem:[#allocation2 + $0x31]]
        %v1092 = vstv %s1091
        %v1093 = vmul.f32 %v1092, %v256
        %v1094 = vmul.f32 %v1092, %v257
        %v1095 = vmul.f32 %v1092, %v258
        %v1099 = vrot.slane %v1093, 1
        %v1100 = vrot.slane %v1094, 1
        %v1101 = vsel %vm307, %v1099, %v1100
        %v1102 = vrot.slane %v1095, 1
        %v1103 = vsel %vm307, %v1100, %v1102
        %1104 = vrot.lane.b32.xlu0 %v1101, 127
        %v1105 = vpop.permute.xlu0 %1104
        %1106 = vrot.lane.b32.xlu0 %v1103, 127
        %v1107 = vpop.permute.xlu0 %1106
        %v1110 = vadd.f32 %v1089, %v1105
        %v1111 = vadd.f32 %v1090, %v1107
        %s1112 = sld [smem:[#allocation2 + $0x32]]
        %v1113 = vstv %s1112
        %v1114 = vmul.f32 %v1113, %v256
        %v1115 = vmul.f32 %v1113, %v257
        %v1116 = vmul.f32 %v1113, %v258
        %v1120 = vrot.slane %v1114, 1
        %v1121 = vrot.slane %v1115, 1
        %v1122 = vsel %vm307, %v1120, %v1121
        %v1123 = vrot.slane %v1116, 1
        %v1124 = vsel %vm307, %v1121, %v1123
        %1125 = vrot.lane.b32.xlu0 %v1122, 126
        %v1126 = vpop.permute.xlu0 %1125
        %1127 = vrot.lane.b32.xlu0 %v1124, 126
        %v1128 = vpop.permute.xlu0 %1127
        %v1131 = vadd.f32 %v1110, %v1126
        %v1132 = vadd.f32 %v1111, %v1128
        %s1133 = sld [smem:[#allocation2 + $0x33]]
        %v1134 = vstv %s1133
        %v1135 = vmul.f32 %v1134, %v256
        %v1136 = vmul.f32 %v1134, %v257
        %v1137 = vmul.f32 %v1134, %v258
        %v1141 = vrot.slane %v1135, 2
        %v1142 = vrot.slane %v1136, 2
        %v1143 = vsel %vm367, %v1141, %v1142
        %v1144 = vrot.slane %v1137, 2
        %v1145 = vsel %vm367, %v1142, %v1144
        %v1148 = vadd.f32 %v1131, %v1143
        %v1149 = vadd.f32 %v1132, %v1145
        %s1150 = sld [smem:[#allocation2 + $0x34]]
        %v1151 = vstv %s1150
        %v1152 = vmul.f32 %v1151, %v256
        %v1153 = vmul.f32 %v1151, %v257
        %v1154 = vmul.f32 %v1151, %v258
        %v1158 = vrot.slane %v1152, 2
        %v1159 = vrot.slane %v1153, 2
        %v1160 = vsel %vm367, %v1158, %v1159
        %v1161 = vrot.slane %v1154, 2
        %v1162 = vsel %vm367, %v1159, %v1161
        %1163 = vrot.lane.b32.xlu0 %v1160, 127
        %v1164 = vpop.permute.xlu0 %1163
        %1165 = vrot.lane.b32.xlu0 %v1162, 127
        %v1166 = vpop.permute.xlu0 %1165
        %v1169 = vadd.f32 %v1148, %v1164
        %v1170 = vadd.f32 %v1149, %v1166
        %s1171 = sld [smem:[#allocation2 + $0x35]]
        %v1172 = vstv %s1171
        %v1173 = vmul.f32 %v1172, %v256
        %v1174 = vmul.f32 %v1172, %v257
        %v1175 = vmul.f32 %v1172, %v258
        %v1179 = vrot.slane %v1173, 2
        %v1180 = vrot.slane %v1174, 2
        %v1181 = vsel %vm367, %v1179, %v1180
        %v1182 = vrot.slane %v1175, 2
        %v1183 = vsel %vm367, %v1180, %v1182
        %1184 = vrot.lane.b32.xlu0 %v1181, 126
        %v1185 = vpop.permute.xlu0 %1184
        %1186 = vrot.lane.b32.xlu0 %v1183, 126
        %v1187 = vpop.permute.xlu0 %1186
        %v1190 = vadd.f32 %v1169, %v1185
        %v1191 = vadd.f32 %v1170, %v1187
        %s1192 = sld [smem:[#allocation2 + $0x36]]
        %v1193 = vstv %s1192
        %v1194 = vmul.f32 %v1193, %v259
        %v1195 = vmul.f32 %v1193, %v260
        %v1196 = vadd.f32 %v1190, %v1194
        %v1197 = vadd.f32 %v1191, %v1195
        %s1198 = sld [smem:[#allocation2 + $0x37]]
        %v1199 = vstv %s1198
        %v1200 = vmul.f32 %v1199, %v259
        %v1201 = vmul.f32 %v1199, %v260
        %1204 = vrot.lane.b32.xlu0 %v1200, 127
        %v1205 = vpop.permute.xlu0 %1204
        %1206 = vrot.lane.b32.xlu0 %v1201, 127
        %v1207 = vpop.permute.xlu0 %1206
        %v1210 = vadd.f32 %v1196, %v1205
        %v1211 = vadd.f32 %v1197, %v1207
        %s1212 = sld [smem:[#allocation2 + $0x38]]
        %v1213 = vstv %s1212
        %v1214 = vmul.f32 %v1213, %v259
        %v1215 = vmul.f32 %v1213, %v260
        %1218 = vrot.lane.b32.xlu0 %v1214, 126
        %v1219 = vpop.permute.xlu0 %1218
        %1220 = vrot.lane.b32.xlu0 %v1215, 126
        %v1221 = vpop.permute.xlu0 %1220
        %v1224 = vadd.f32 %v1210, %v1219
        %v1225 = vadd.f32 %v1211, %v1221
        %s1226 = sld [smem:[#allocation2 + $0x39]]
        %v1227 = vstv %s1226
        %v1228 = vmul.f32 %v1227, %v259
        %v1229 = vmul.f32 %v1227, %v260
        %v1230 = vmul.f32 %v1227, %v261
        %v1234 = vrot.slane %v1228, 1
        %v1235 = vrot.slane %v1229, 1
        %v1236 = vsel %vm307, %v1234, %v1235
        %v1237 = vrot.slane %v1230, 1
        %v1238 = vsel %vm307, %v1235, %v1237
        %v1241 = vadd.f32 %v1224, %v1236
        %v1242 = vadd.f32 %v1225, %v1238
        %s1243 = sld [smem:[#allocation2 + $0x3a]]
        %v1244 = vstv %s1243
        %v1245 = vmul.f32 %v1244, %v259
        %v1246 = vmul.f32 %v1244, %v260
        %v1247 = vmul.f32 %v1244, %v261
        %v1251 = vrot.slane %v1245, 1
        %v1252 = vrot.slane %v1246, 1
        %v1253 = vsel %vm307, %v1251, %v1252
        %v1254 = vrot.slane %v1247, 1
        %v1255 = vsel %vm307, %v1252, %v1254
        %1256 = vrot.lane.b32.xlu0 %v1253, 127
        %v1257 = vpop.permute.xlu0 %1256
        %1258 = vrot.lane.b32.xlu0 %v1255, 127
        %v1259 = vpop.permute.xlu0 %1258
        %v1262 = vadd.f32 %v1241, %v1257
        %v1263 = vadd.f32 %v1242, %v1259
        %s1264 = sld [smem:[#allocation2 + $0x3b]]
        %v1265 = vstv %s1264
        %v1266 = vmul.f32 %v1265, %v259
        %v1267 = vmul.f32 %v1265, %v260
        %v1268 = vmul.f32 %v1265, %v261
        %v1272 = vrot.slane %v1266, 1
        %v1273 = vrot.slane %v1267, 1
        %v1274 = vsel %vm307, %v1272, %v1273
        %v1275 = vrot.slane %v1268, 1
        %v1276 = vsel %vm307, %v1273, %v1275
        %1277 = vrot.lane.b32.xlu0 %v1274, 126
        %v1278 = vpop.permute.xlu0 %1277
        %1279 = vrot.lane.b32.xlu0 %v1276, 126
        %v1280 = vpop.permute.xlu0 %1279
        %v1283 = vadd.f32 %v1262, %v1278
        %v1284 = vadd.f32 %v1263, %v1280
        %s1285 = sld [smem:[#allocation2 + $0x3c]]
        %v1286 = vstv %s1285
        %v1287 = vmul.f32 %v1286, %v259
        %v1288 = vmul.f32 %v1286, %v260
        %v1289 = vmul.f32 %v1286, %v261
        %v1293 = vrot.slane %v1287, 2
        %v1294 = vrot.slane %v1288, 2
        %v1295 = vsel %vm367, %v1293, %v1294
        %v1296 = vrot.slane %v1289, 2
        %v1297 = vsel %vm367, %v1294, %v1296
        %v1300 = vadd.f32 %v1283, %v1295
        %v1301 = vadd.f32 %v1284, %v1297
        %s1302 = sld [smem:[#allocation2 + $0x3d]]
        %v1303 = vstv %s1302
        %v1304 = vmul.f32 %v1303, %v259
        %v1305 = vmul.f32 %v1303, %v260
        %v1306 = vmul.f32 %v1303, %v261
        %v1310 = vrot.slane %v1304, 2
        %v1311 = vrot.slane %v1305, 2
        %v1312 = vsel %vm367, %v1310, %v1311
        %v1313 = vrot.slane %v1306, 2
        %v1314 = vsel %vm367, %v1311, %v1313
        %1315 = vrot.lane.b32.xlu0 %v1312, 127
        %v1316 = vpop.permute.xlu0 %1315
        %1317 = vrot.lane.b32.xlu0 %v1314, 127
        %v1318 = vpop.permute.xlu0 %1317
        %v1321 = vadd.f32 %v1300, %v1316
        %v1322 = vadd.f32 %v1301, %v1318
        %s1323 = sld [smem:[#allocation2 + $0x3e]]
        %v1324 = vstv %s1323
        %v1325 = vmul.f32 %v1324, %v259
        %v1326 = vmul.f32 %v1324, %v260
        %v1327 = vmul.f32 %v1324, %v261
        %v1331 = vrot.slane %v1325, 2
        %v1332 = vrot.slane %v1326, 2
        %v1333 = vsel %vm367, %v1331, %v1332
        %v1334 = vrot.slane %v1327, 2
        %v1335 = vsel %vm367, %v1332, %v1334
        %1336 = vrot.lane.b32.xlu0 %v1333, 126
        %v1337 = vpop.permute.xlu0 %1336
        %1338 = vrot.lane.b32.xlu0 %v1335, 126
        %v1339 = vpop.permute.xlu0 %1338
        %v1342 = vadd.f32 %v1321, %v1337
        %v1343 = vadd.f32 %v1322, %v1339
        %s1344 = sld [smem:[#allocation2 + $0x3f]]
        %v1345 = vstv %s1344
        %v1346 = vmul.f32 %v1345, %v262
        %v1347 = vmul.f32 %v1345, %v263
        %v1348 = vadd.f32 %v1342, %v1346
        %v1349 = vadd.f32 %v1343, %v1347
        %s1350 = sld [smem:[#allocation2 + $0x40]]
        %v1351 = vstv %s1350
        %v1352 = vmul.f32 %v1351, %v262
        %v1353 = vmul.f32 %v1351, %v263
        %1356 = vrot.lane.b32.xlu0 %v1352, 127
        %v1357 = vpop.permute.xlu0 %1356
        %1358 = vrot.lane.b32.xlu0 %v1353, 127
        %v1359 = vpop.permute.xlu0 %1358
        %v1362 = vadd.f32 %v1348, %v1357
        %v1363 = vadd.f32 %v1349, %v1359
        %s1364 = sld [smem:[#allocation2 + $0x41]]
        %v1365 = vstv %s1364
        %v1366 = vmul.f32 %v1365, %v262
        %v1367 = vmul.f32 %v1365, %v263
        %1370 = vrot.lane.b32.xlu0 %v1366, 126
        %v1371 = vpop.permute.xlu0 %1370
        %1372 = vrot.lane.b32.xlu0 %v1367, 126
        %v1373 = vpop.permute.xlu0 %1372
        %v1376 = vadd.f32 %v1362, %v1371
        %v1377 = vadd.f32 %v1363, %v1373
        %s1378 = sld [smem:[#allocation2 + $0x42]]
        %v1379 = vstv %s1378
        %v1380 = vmul.f32 %v1379, %v262
        %v1381 = vmul.f32 %v1379, %v263
        %v1382 = vmul.f32 %v1379, %v264
        %v1386 = vrot.slane %v1380, 1
        %v1387 = vrot.slane %v1381, 1
        %v1388 = vsel %vm307, %v1386, %v1387
        %v1389 = vrot.slane %v1382, 1
        %v1390 = vsel %vm307, %v1387, %v1389
        %v1393 = vadd.f32 %v1376, %v1388
        %v1394 = vadd.f32 %v1377, %v1390
        %s1395 = sld [smem:[#allocation2 + $0x43]]
        %v1396 = vstv %s1395
        %v1397 = vmul.f32 %v1396, %v262
        %v1398 = vmul.f32 %v1396, %v263
        %v1399 = vmul.f32 %v1396, %v264
        %v1403 = vrot.slane %v1397, 1
        %v1404 = vrot.slane %v1398, 1
        %v1405 = vsel %vm307, %v1403, %v1404
        %v1406 = vrot.slane %v1399, 1
        %v1407 = vsel %vm307, %v1404, %v1406
        %1408 = vrot.lane.b32.xlu0 %v1405, 127
        %v1409 = vpop.permute.xlu0 %1408
        %1410 = vrot.lane.b32.xlu0 %v1407, 127
        %v1411 = vpop.permute.xlu0 %1410
        %v1414 = vadd.f32 %v1393, %v1409
        %v1415 = vadd.f32 %v1394, %v1411
        %s1416 = sld [smem:[#allocation2 + $0x44]]
        %v1417 = vstv %s1416
        %v1418 = vmul.f32 %v1417, %v262
        %v1419 = vmul.f32 %v1417, %v263
        %v1420 = vmul.f32 %v1417, %v264
        %v1424 = vrot.slane %v1418, 1
        %v1425 = vrot.slane %v1419, 1
        %v1426 = vsel %vm307, %v1424, %v1425
        %v1427 = vrot.slane %v1420, 1
        %v1428 = vsel %vm307, %v1425, %v1427
        %1429 = vrot.lane.b32.xlu0 %v1426, 126
        %v1430 = vpop.permute.xlu0 %1429
        %1431 = vrot.lane.b32.xlu0 %v1428, 126
        %v1432 = vpop.permute.xlu0 %1431
        %v1435 = vadd.f32 %v1414, %v1430
        %v1436 = vadd.f32 %v1415, %v1432
        %s1437 = sld [smem:[#allocation2 + $0x45]]
        %v1438 = vstv %s1437
        %v1439 = vmul.f32 %v1438, %v262
        %v1440 = vmul.f32 %v1438, %v263
        %v1441 = vmul.f32 %v1438, %v264
        %v1445 = vrot.slane %v1439, 2
        %v1446 = vrot.slane %v1440, 2
        %v1447 = vsel %vm367, %v1445, %v1446
        %v1448 = vrot.slane %v1441, 2
        %v1449 = vsel %vm367, %v1446, %v1448
        %v1452 = vadd.f32 %v1435, %v1447
        %v1453 = vadd.f32 %v1436, %v1449
        %s1454 = sld [smem:[#allocation2 + $0x46]]
        %v1455 = vstv %s1454
        %v1456 = vmul.f32 %v1455, %v262
        %v1457 = vmul.f32 %v1455, %v263
        %v1458 = vmul.f32 %v1455, %v264
        %v1462 = vrot.slane %v1456, 2
        %v1463 = vrot.slane %v1457, 2
        %v1464 = vsel %vm367, %v1462, %v1463
        %v1465 = vrot.slane %v1458, 2
        %v1466 = vsel %vm367, %v1463, %v1465
        %1467 = vrot.lane.b32.xlu0 %v1464, 127
        %v1468 = vpop.permute.xlu0 %1467
        %1469 = vrot.lane.b32.xlu0 %v1466, 127
        %v1470 = vpop.permute.xlu0 %1469
        %v1473 = vadd.f32 %v1452, %v1468
        %v1474 = vadd.f32 %v1453, %v1470
        %s1475 = sld [smem:[#allocation2 + $0x47]]
        %v1476 = vstv %s1475
        %v1477 = vmul.f32 %v1476, %v262
        %v1478 = vmul.f32 %v1476, %v263
        %v1479 = vmul.f32 %v1476, %v264
        %v1483 = vrot.slane %v1477, 2
        %v1484 = vrot.slane %v1478, 2
        %v1485 = vsel %vm367, %v1483, %v1484
        %v1486 = vrot.slane %v1479, 2
        %v1487 = vsel %vm367, %v1484, %v1486
        %1488 = vrot.lane.b32.xlu0 %v1485, 126
        %v1489 = vpop.permute.xlu0 %1488
        %1490 = vrot.lane.b32.xlu0 %v1487, 126
        %v1491 = vpop.permute.xlu0 %1490
        %v1494 = vadd.f32 %v1473, %v1489
        %v1495 = vadd.f32 %v1474, %v1491
        %s1496 = sld [smem:[#allocation5 + $0x1]]
        %v1497 = vstv %s1496
        %v1498 = vadd.f32 %v1494, %v1497
        %v1499 = vadd.f32 %v1495, %v1497
        %vm1500 = vcmp.ge.f32.partialorder %v1498, 0.0
        %vm1501 = vcmp.ge.f32.partialorder %v1499, 0.0
        %v1502 = vmul.f32 %v1498, 0.2
        %v1503 = vmul.f32 %v1499, 0.2
        %v1504 = vsel %vm1500, %v1498, %v1502
        %v1505 = vsel %vm1501, %v1499, %v1503
        %s1506 = scalar_lea.vmem %s190, 16 [#allocation7]
        %1507 = vst.msk [vmem:[%s1506] sm:$0xff] %vm885, %v1504
        %1508 = vst.msk [vmem:[%s1506 + $0x8] sm:$0xff] %vm885, %v1505
        %s1509 = sld [smem:[#allocation2 + $0x48]]
        %v1510 = vstv %s1509
        %v1511 = vmul.f32 %v1510, %v253
        %v1512 = vmul.f32 %v1510, %v254
        %v1513 = vadd.f32 %v1511, 0.0
        %v1514 = vadd.f32 %v1512, 0.0
        %s1515 = sld [smem:[#allocation2 + $0x49]]
        %v1516 = vstv %s1515
        %v1517 = vmul.f32 %v1516, %v253
        %v1518 = vmul.f32 %v1516, %v254
        %1521 = vrot.lane.b32.xlu0 %v1517, 127
        %v1522 = vpop.permute.xlu0 %1521
        %1523 = vrot.lane.b32.xlu0 %v1518, 127
        %v1524 = vpop.permute.xlu0 %1523
        %v1527 = vadd.f32 %v1513, %v1522
        %v1528 = vadd.f32 %v1514, %v1524
        %s1529 = sld [smem:[#allocation2 + $0x4a]]
        %v1530 = vstv %s1529
        %v1531 = vmul.f32 %v1530, %v253
        %v1532 = vmul.f32 %v1530, %v254
        %1535 = vrot.lane.b32.xlu0 %v1531, 126
        %v1536 = vpop.permute.xlu0 %1535
        %1537 = vrot.lane.b32.xlu0 %v1532, 126
        %v1538 = vpop.permute.xlu0 %1537
        %v1541 = vadd.f32 %v1527, %v1536
        %v1542 = vadd.f32 %v1528, %v1538
        %s1543 = sld [smem:[#allocation2 + $0x4b]]
        %v1544 = vstv %s1543
        %v1545 = vmul.f32 %v1544, %v253
        %v1546 = vmul.f32 %v1544, %v254
        %v1547 = vmul.f32 %v1544, %v255
        %v1551 = vrot.slane %v1545, 1
        %v1552 = vrot.slane %v1546, 1
        %v1553 = vsel %vm307, %v1551, %v1552
        %v1554 = vrot.slane %v1547, 1
        %v1555 = vsel %vm307, %v1552, %v1554
        %v1558 = vadd.f32 %v1541, %v1553
        %v1559 = vadd.f32 %v1542, %v1555
        %s1560 = sld [smem:[#allocation2 + $0x4c]]
        %v1561 = vstv %s1560
        %v1562 = vmul.f32 %v1561, %v253
        %v1563 = vmul.f32 %v1561, %v254
        %v1564 = vmul.f32 %v1561, %v255
        %v1568 = vrot.slane %v1562, 1
        %v1569 = vrot.slane %v1563, 1
        %v1570 = vsel %vm307, %v1568, %v1569
        %v1571 = vrot.slane %v1564, 1
        %v1572 = vsel %vm307, %v1569, %v1571
        %1573 = vrot.lane.b32.xlu0 %v1570, 127
        %v1574 = vpop.permute.xlu0 %1573
        %1575 = vrot.lane.b32.xlu0 %v1572, 127
        %v1576 = vpop.permute.xlu0 %1575
        %v1579 = vadd.f32 %v1558, %v1574
        %v1580 = vadd.f32 %v1559, %v1576
        %s1581 = sld [smem:[#allocation2 + $0x4d]]
        %v1582 = vstv %s1581
        %v1583 = vmul.f32 %v1582, %v253
        %v1584 = vmul.f32 %v1582, %v254
        %v1585 = vmul.f32 %v1582, %v255
        %v1589 = vrot.slane %v1583, 1
        %v1590 = vrot.slane %v1584, 1
        %v1591 = vsel %vm307, %v1589, %v1590
        %v1592 = vrot.slane %v1585, 1
        %v1593 = vsel %vm307, %v1590, %v1592
        %1594 = vrot.lane.b32.xlu0 %v1591, 126
        %v1595 = vpop.permute.xlu0 %1594
        %1596 = vrot.lane.b32.xlu0 %v1593, 126
        %v1597 = vpop.permute.xlu0 %1596
        %v1600 = vadd.f32 %v1579, %v1595
        %v1601 = vadd.f32 %v1580, %v1597
        %s1602 = sld [smem:[#allocation2 + $0x4e]]
        %v1603 = vstv %s1602
        %v1604 = vmul.f32 %v1603, %v253
        %v1605 = vmul.f32 %v1603, %v254
        %v1606 = vmul.f32 %v1603, %v255
        %v1610 = vrot.slane %v1604, 2
        %v1611 = vrot.slane %v1605, 2
        %v1612 = vsel %vm367, %v1610, %v1611
        %v1613 = vrot.slane %v1606, 2
        %v1614 = vsel %vm367, %v1611, %v1613
        %v1617 = vadd.f32 %v1600, %v1612
        %v1618 = vadd.f32 %v1601, %v1614
        %s1619 = sld [smem:[#allocation2 + $0x4f]]
        %v1620 = vstv %s1619
        %v1621 = vmul.f32 %v1620, %v253
        %v1622 = vmul.f32 %v1620, %v254
        %v1623 = vmul.f32 %v1620, %v255
        %v1627 = vrot.slane %v1621, 2
        %v1628 = vrot.slane %v1622, 2
        %v1629 = vsel %vm367, %v1627, %v1628
        %v1630 = vrot.slane %v1623, 2
        %v1631 = vsel %vm367, %v1628, %v1630
        %1632 = vrot.lane.b32.xlu0 %v1629, 127
        %v1633 = vpop.permute.xlu0 %1632
        %1634 = vrot.lane.b32.xlu0 %v1631, 127
        %v1635 = vpop.permute.xlu0 %1634
        %v1638 = vadd.f32 %v1617, %v1633
        %v1639 = vadd.f32 %v1618, %v1635
        %s1640 = sld [smem:[#allocation2 + $0x50]]
        %v1641 = vstv %s1640
        %v1642 = vmul.f32 %v1641, %v253
        %v1643 = vmul.f32 %v1641, %v254
        %v1644 = vmul.f32 %v1641, %v255
        %v1648 = vrot.slane %v1642, 2
        %v1649 = vrot.slane %v1643, 2
        %v1650 = vsel %vm367, %v1648, %v1649
        %v1651 = vrot.slane %v1644, 2
        %v1652 = vsel %vm367, %v1649, %v1651
        %1653 = vrot.lane.b32.xlu0 %v1650, 126
        %v1654 = vpop.permute.xlu0 %1653
        %1655 = vrot.lane.b32.xlu0 %v1652, 126
        %v1656 = vpop.permute.xlu0 %1655
        %v1659 = vadd.f32 %v1638, %v1654
        %v1660 = vadd.f32 %v1639, %v1656
        %s1661 = sld [smem:[#allocation2 + $0x51]]
        %v1662 = vstv %s1661
        %v1663 = vmul.f32 %v1662, %v256
        %v1664 = vmul.f32 %v1662, %v257
        %v1665 = vadd.f32 %v1659, %v1663
        %v1666 = vadd.f32 %v1660, %v1664
        %s1667 = sld [smem:[#allocation2 + $0x52]]
        %v1668 = vstv %s1667
        %v1669 = vmul.f32 %v1668, %v256
        %v1670 = vmul.f32 %v1668, %v257
        %1673 = vrot.lane.b32.xlu0 %v1669, 127
        %v1674 = vpop.permute.xlu0 %1673
        %1675 = vrot.lane.b32.xlu0 %v1670, 127
        %v1676 = vpop.permute.xlu0 %1675
        %v1679 = vadd.f32 %v1665, %v1674
        %v1680 = vadd.f32 %v1666, %v1676
        %s1681 = sld [smem:[#allocation2 + $0x53]]
        %v1682 = vstv %s1681
        %v1683 = vmul.f32 %v1682, %v256
        %v1684 = vmul.f32 %v1682, %v257
        %1687 = vrot.lane.b32.xlu0 %v1683, 126
        %v1688 = vpop.permute.xlu0 %1687
        %1689 = vrot.lane.b32.xlu0 %v1684, 126
        %v1690 = vpop.permute.xlu0 %1689
        %v1693 = vadd.f32 %v1679, %v1688
        %v1694 = vadd.f32 %v1680, %v1690
        %s1695 = sld [smem:[#allocation2 + $0x54]]
        %v1696 = vstv %s1695
        %v1697 = vmul.f32 %v1696, %v256
        %v1698 = vmul.f32 %v1696, %v257
        %v1699 = vmul.f32 %v1696, %v258
        %v1703 = vrot.slane %v1697, 1
        %v1704 = vrot.slane %v1698, 1
        %v1705 = vsel %vm307, %v1703, %v1704
        %v1706 = vrot.slane %v1699, 1
        %v1707 = vsel %vm307, %v1704, %v1706
        %v1710 = vadd.f32 %v1693, %v1705
        %v1711 = vadd.f32 %v1694, %v1707
        %s1712 = sld [smem:[#allocation2 + $0x55]]
        %v1713 = vstv %s1712
        %v1714 = vmul.f32 %v1713, %v256
        %v1715 = vmul.f32 %v1713, %v257
        %v1716 = vmul.f32 %v1713, %v258
        %v1720 = vrot.slane %v1714, 1
        %v1721 = vrot.slane %v1715, 1
        %v1722 = vsel %vm307, %v1720, %v1721
        %v1723 = vrot.slane %v1716, 1
        %v1724 = vsel %vm307, %v1721, %v1723
        %1725 = vrot.lane.b32.xlu0 %v1722, 127
        %v1726 = vpop.permute.xlu0 %1725
        %1727 = vrot.lane.b32.xlu0 %v1724, 127
        %v1728 = vpop.permute.xlu0 %1727
        %v1731 = vadd.f32 %v1710, %v1726
        %v1732 = vadd.f32 %v1711, %v1728
        %s1733 = sld [smem:[#allocation2 + $0x56]]
        %v1734 = vstv %s1733
        %v1735 = vmul.f32 %v1734, %v256
        %v1736 = vmul.f32 %v1734, %v257
        %v1737 = vmul.f32 %v1734, %v258
        %v1741 = vrot.slane %v1735, 1
        %v1742 = vrot.slane %v1736, 1
        %v1743 = vsel %vm307, %v1741, %v1742
        %v1744 = vrot.slane %v1737, 1
        %v1745 = vsel %vm307, %v1742, %v1744
        %1746 = vrot.lane.b32.xlu0 %v1743, 126
        %v1747 = vpop.permute.xlu0 %1746
        %1748 = vrot.lane.b32.xlu0 %v1745, 126
        %v1749 = vpop.permute.xlu0 %1748
        %v1752 = vadd.f32 %v1731, %v1747
        %v1753 = vadd.f32 %v1732, %v1749
        %s1754 = sld [smem:[#allocation2 + $0x57]]
        %v1755 = vstv %s1754
        %v1756 = vmul.f32 %v1755, %v256
        %v1757 = vmul.f32 %v1755, %v257
        %v1758 = vmul.f32 %v1755, %v258
        %v1762 = vrot.slane %v1756, 2
        %v1763 = vrot.slane %v1757, 2
        %v1764 = vsel %vm367, %v1762, %v1763
        %v1765 = vrot.slane %v1758, 2
        %v1766 = vsel %vm367, %v1763, %v1765
        %v1769 = vadd.f32 %v1752, %v1764
        %v1770 = vadd.f32 %v1753, %v1766
        %s1771 = sld [smem:[#allocation2 + $0x58]]
        %v1772 = vstv %s1771
        %v1773 = vmul.f32 %v1772, %v256
        %v1774 = vmul.f32 %v1772, %v257
        %v1775 = vmul.f32 %v1772, %v258
        %v1779 = vrot.slane %v1773, 2
        %v1780 = vrot.slane %v1774, 2
        %v1781 = vsel %vm367, %v1779, %v1780
        %v1782 = vrot.slane %v1775, 2
        %v1783 = vsel %vm367, %v1780, %v1782
        %1784 = vrot.lane.b32.xlu0 %v1781, 127
        %v1785 = vpop.permute.xlu0 %1784
        %1786 = vrot.lane.b32.xlu0 %v1783, 127
        %v1787 = vpop.permute.xlu0 %1786
        %v1790 = vadd.f32 %v1769, %v1785
        %v1791 = vadd.f32 %v1770, %v1787
        %s1792 = sld [smem:[#allocation2 + $0x59]]
        %v1793 = vstv %s1792
        %v1794 = vmul.f32 %v1793, %v256
        %v1795 = vmul.f32 %v1793, %v257
        %v1796 = vmul.f32 %v1793, %v258
        %v1800 = vrot.slane %v1794, 2
        %v1801 = vrot.slane %v1795, 2
        %v1802 = vsel %vm367, %v1800, %v1801
        %v1803 = vrot.slane %v1796, 2
        %v1804 = vsel %vm367, %v1801, %v1803
        %1805 = vrot.lane.b32.xlu0 %v1802, 126
        %v1806 = vpop.permute.xlu0 %1805
        %1807 = vrot.lane.b32.xlu0 %v1804, 126
        %v1808 = vpop.permute.xlu0 %1807
        %v1811 = vadd.f32 %v1790, %v1806
        %v1812 = vadd.f32 %v1791, %v1808
        %s1813 = sld [smem:[#allocation2 + $0x5a]]
        %v1814 = vstv %s1813
        %v1815 = vmul.f32 %v1814, %v259
        %v1816 = vmul.f32 %v1814, %v260
        %v1817 = vadd.f32 %v1811, %v1815
        %v1818 = vadd.f32 %v1812, %v1816
        %s1819 = sld [smem:[#allocation2 + $0x5b]]
        %v1820 = vstv %s1819
        %v1821 = vmul.f32 %v1820, %v259
        %v1822 = vmul.f32 %v1820, %v260
        %1825 = vrot.lane.b32.xlu0 %v1821, 127
        %v1826 = vpop.permute.xlu0 %1825
        %1827 = vrot.lane.b32.xlu0 %v1822, 127
        %v1828 = vpop.permute.xlu0 %1827
        %v1831 = vadd.f32 %v1817, %v1826
        %v1832 = vadd.f32 %v1818, %v1828
        %s1833 = sld [smem:[#allocation2 + $0x5c]]
        %v1834 = vstv %s1833
        %v1835 = vmul.f32 %v1834, %v259
        %v1836 = vmul.f32 %v1834, %v260
        %1839 = vrot.lane.b32.xlu0 %v1835, 126
        %v1840 = vpop.permute.xlu0 %1839
        %1841 = vrot.lane.b32.xlu0 %v1836, 126
        %v1842 = vpop.permute.xlu0 %1841
        %v1845 = vadd.f32 %v1831, %v1840
        %v1846 = vadd.f32 %v1832, %v1842
        %s1847 = sld [smem:[#allocation2 + $0x5d]]
        %v1848 = vstv %s1847
        %v1849 = vmul.f32 %v1848, %v259
        %v1850 = vmul.f32 %v1848, %v260
        %v1851 = vmul.f32 %v1848, %v261
        %v1855 = vrot.slane %v1849, 1
        %v1856 = vrot.slane %v1850, 1
        %v1857 = vsel %vm307, %v1855, %v1856
        %v1858 = vrot.slane %v1851, 1
        %v1859 = vsel %vm307, %v1856, %v1858
        %v1862 = vadd.f32 %v1845, %v1857
        %v1863 = vadd.f32 %v1846, %v1859
        %s1864 = sld [smem:[#allocation2 + $0x5e]]
        %v1865 = vstv %s1864
        %v1866 = vmul.f32 %v1865, %v259
        %v1867 = vmul.f32 %v1865, %v260
        %v1868 = vmul.f32 %v1865, %v261
        %v1872 = vrot.slane %v1866, 1
        %v1873 = vrot.slane %v1867, 1
        %v1874 = vsel %vm307, %v1872, %v1873
        %v1875 = vrot.slane %v1868, 1
        %v1876 = vsel %vm307, %v1873, %v1875
        %1877 = vrot.lane.b32.xlu0 %v1874, 127
        %v1878 = vpop.permute.xlu0 %1877
        %1879 = vrot.lane.b32.xlu0 %v1876, 127
        %v1880 = vpop.permute.xlu0 %1879
        %v1883 = vadd.f32 %v1862, %v1878
        %v1884 = vadd.f32 %v1863, %v1880
        %s1885 = sld [smem:[#allocation2 + $0x5f]]
        %v1886 = vstv %s1885
        %v1887 = vmul.f32 %v1886, %v259
        %v1888 = vmul.f32 %v1886, %v260
        %v1889 = vmul.f32 %v1886, %v261
        %v1893 = vrot.slane %v1887, 1
        %v1894 = vrot.slane %v1888, 1
        %v1895 = vsel %vm307, %v1893, %v1894
        %v1896 = vrot.slane %v1889, 1
        %v1897 = vsel %vm307, %v1894, %v1896
        %1898 = vrot.lane.b32.xlu0 %v1895, 126
        %v1899 = vpop.permute.xlu0 %1898
        %1900 = vrot.lane.b32.xlu0 %v1897, 126
        %v1901 = vpop.permute.xlu0 %1900
        %v1904 = vadd.f32 %v1883, %v1899
        %v1905 = vadd.f32 %v1884, %v1901
        %s1906 = sld [smem:[#allocation2 + $0x60]]
        %v1907 = vstv %s1906
        %v1908 = vmul.f32 %v1907, %v259
        %v1909 = vmul.f32 %v1907, %v260
        %v1910 = vmul.f32 %v1907, %v261
        %v1914 = vrot.slane %v1908, 2
        %v1915 = vrot.slane %v1909, 2
        %v1916 = vsel %vm367, %v1914, %v1915
        %v1917 = vrot.slane %v1910, 2
        %v1918 = vsel %vm367, %v1915, %v1917
        %v1921 = vadd.f32 %v1904, %v1916
        %v1922 = vadd.f32 %v1905, %v1918
        %s1923 = sld [smem:[#allocation2 + $0x61]]
        %v1924 = vstv %s1923
        %v1925 = vmul.f32 %v1924, %v259
        %v1926 = vmul.f32 %v1924, %v260
        %v1927 = vmul.f32 %v1924, %v261
        %v1931 = vrot.slane %v1925, 2
        %v1932 = vrot.slane %v1926, 2
        %v1933 = vsel %vm367, %v1931, %v1932
        %v1934 = vrot.slane %v1927, 2
        %v1935 = vsel %vm367, %v1932, %v1934
        %1936 = vrot.lane.b32.xlu0 %v1933, 127
        %v1937 = vpop.permute.xlu0 %1936
        %1938 = vrot.lane.b32.xlu0 %v1935, 127
        %v1939 = vpop.permute.xlu0 %1938
        %v1942 = vadd.f32 %v1921, %v1937
        %v1943 = vadd.f32 %v1922, %v1939
        %s1944 = sld [smem:[#allocation2 + $0x62]]
        %v1945 = vstv %s1944
        %v1946 = vmul.f32 %v1945, %v259
        %v1947 = vmul.f32 %v1945, %v260
        %v1948 = vmul.f32 %v1945, %v261
        %v1952 = vrot.slane %v1946, 2
        %v1953 = vrot.slane %v1947, 2
        %v1954 = vsel %vm367, %v1952, %v1953
        %v1955 = vrot.slane %v1948, 2
        %v1956 = vsel %vm367, %v1953, %v1955
        %1957 = vrot.lane.b32.xlu0 %v1954, 126
        %v1958 = vpop.permute.xlu0 %1957
        %1959 = vrot.lane.b32.xlu0 %v1956, 126
        %v1960 = vpop.permute.xlu0 %1959
        %v1963 = vadd.f32 %v1942, %v1958
        %v1964 = vadd.f32 %v1943, %v1960
        %s1965 = sld [smem:[#allocation2 + $0x63]]
        %v1966 = vstv %s1965
        %v1967 = vmul.f32 %v1966, %v262
        %v1968 = vmul.f32 %v1966, %v263
        %v1969 = vadd.f32 %v1963, %v1967
        %v1970 = vadd.f32 %v1964, %v1968
        %s1971 = sld [smem:[#allocation2 + $0x64]]
        %v1972 = vstv %s1971
        %v1973 = vmul.f32 %v1972, %v262
        %v1974 = vmul.f32 %v1972, %v263
        %1977 = vrot.lane.b32.xlu0 %v1973, 127
        %v1978 = vpop.permute.xlu0 %1977
        %1979 = vrot.lane.b32.xlu0 %v1974, 127
        %v1980 = vpop.permute.xlu0 %1979
        %v1983 = vadd.f32 %v1969, %v1978
        %v1984 = vadd.f32 %v1970, %v1980
        %s1985 = sld [smem:[#allocation2 + $0x65]]
        %v1986 = vstv %s1985
        %v1987 = vmul.f32 %v1986, %v262
        %v1988 = vmul.f32 %v1986, %v263
        %1991 = vrot.lane.b32.xlu0 %v1987, 126
        %v1992 = vpop.permute.xlu0 %1991
        %1993 = vrot.lane.b32.xlu0 %v1988, 126
        %v1994 = vpop.permute.xlu0 %1993
        %v1997 = vadd.f32 %v1983, %v1992
        %v1998 = vadd.f32 %v1984, %v1994
        %s1999 = sld [smem:[#allocation2 + $0x66]]
        %v2000 = vstv %s1999
        %v2001 = vmul.f32 %v2000, %v262
        %v2002 = vmul.f32 %v2000, %v263
        %v2003 = vmul.f32 %v2000, %v264
        %v2007 = vrot.slane %v2001, 1
        %v2008 = vrot.slane %v2002, 1
        %v2009 = vsel %vm307, %v2007, %v2008
        %v2010 = vrot.slane %v2003, 1
        %v2011 = vsel %vm307, %v2008, %v2010
        %v2014 = vadd.f32 %v1997, %v2009
        %v2015 = vadd.f32 %v1998, %v2011
        %s2016 = sld [smem:[#allocation2 + $0x67]]
        %v2017 = vstv %s2016
        %v2018 = vmul.f32 %v2017, %v262
        %v2019 = vmul.f32 %v2017, %v263
        %v2020 = vmul.f32 %v2017, %v264
        %v2024 = vrot.slane %v2018, 1
        %v2025 = vrot.slane %v2019, 1
        %v2026 = vsel %vm307, %v2024, %v2025
        %v2027 = vrot.slane %v2020, 1
        %v2028 = vsel %vm307, %v2025, %v2027
        %2029 = vrot.lane.b32.xlu0 %v2026, 127
        %v2030 = vpop.permute.xlu0 %2029
        %2031 = vrot.lane.b32.xlu0 %v2028, 127
        %v2032 = vpop.permute.xlu0 %2031
        %v2035 = vadd.f32 %v2014, %v2030
        %v2036 = vadd.f32 %v2015, %v2032
        %s2037 = sld [smem:[#allocation2 + $0x68]]
        %v2038 = vstv %s2037
        %v2039 = vmul.f32 %v2038, %v262
        %v2040 = vmul.f32 %v2038, %v263
        %v2041 = vmul.f32 %v2038, %v264
        %v2045 = vrot.slane %v2039, 1
        %v2046 = vrot.slane %v2040, 1
        %v2047 = vsel %vm307, %v2045, %v2046
        %v2048 = vrot.slane %v2041, 1
        %v2049 = vsel %vm307, %v2046, %v2048
        %2050 = vrot.lane.b32.xlu0 %v2047, 126
        %v2051 = vpop.permute.xlu0 %2050
        %2052 = vrot.lane.b32.xlu0 %v2049, 126
        %v2053 = vpop.permute.xlu0 %2052
        %v2056 = vadd.f32 %v2035, %v2051
        %v2057 = vadd.f32 %v2036, %v2053
        %s2058 = sld [smem:[#allocation2 + $0x69]]
        %v2059 = vstv %s2058
        %v2060 = vmul.f32 %v2059, %v262
        %v2061 = vmul.f32 %v2059, %v263
        %v2062 = vmul.f32 %v2059, %v264
        %v2066 = vrot.slane %v2060, 2
        %v2067 = vrot.slane %v2061, 2
        %v2068 = vsel %vm367, %v2066, %v2067
        %v2069 = vrot.slane %v2062, 2
        %v2070 = vsel %vm367, %v2067, %v2069
        %v2073 = vadd.f32 %v2056, %v2068
        %v2074 = vadd.f32 %v2057, %v2070
        %s2075 = sld [smem:[#allocation2 + $0x6a]]
        %v2076 = vstv %s2075
        %v2077 = vmul.f32 %v2076, %v262
        %v2078 = vmul.f32 %v2076, %v263
        %v2079 = vmul.f32 %v2076, %v264
        %v2083 = vrot.slane %v2077, 2
        %v2084 = vrot.slane %v2078, 2
        %v2085 = vsel %vm367, %v2083, %v2084
        %v2086 = vrot.slane %v2079, 2
        %v2087 = vsel %vm367, %v2084, %v2086
        %2088 = vrot.lane.b32.xlu0 %v2085, 127
        %v2089 = vpop.permute.xlu0 %2088
        %2090 = vrot.lane.b32.xlu0 %v2087, 127
        %v2091 = vpop.permute.xlu0 %2090
        %v2094 = vadd.f32 %v2073, %v2089
        %v2095 = vadd.f32 %v2074, %v2091
        %s2096 = sld [smem:[#allocation2 + $0x6b]]
        %v2097 = vstv %s2096
        %v2098 = vmul.f32 %v2097, %v262
        %v2099 = vmul.f32 %v2097, %v263
        %v2100 = vmul.f32 %v2097, %v264
        %v2104 = vrot.slane %v2098, 2
        %v2105 = vrot.slane %v2099, 2
        %v2106 = vsel %vm367, %v2104, %v2105
        %v2107 = vrot.slane %v2100, 2
        %v2108 = vsel %vm367, %v2105, %v2107
        %2109 = vrot.lane.b32.xlu0 %v2106, 126
        %v2110 = vpop.permute.xlu0 %2109
        %2111 = vrot.lane.b32.xlu0 %v2108, 126
        %v2112 = vpop.permute.xlu0 %2111
        %v2115 = vadd.f32 %v2094, %v2110
        %v2116 = vadd.f32 %v2095, %v2112
        %s2117 = sld [smem:[#allocation5 + $0x2]]
        %v2118 = vstv %s2117
        %v2119 = vadd.f32 %v2115, %v2118
        %v2120 = vadd.f32 %v2116, %v2118
        %vm2121 = vcmp.ge.f32.partialorder %v2119, 0.0
        %vm2122 = vcmp.ge.f32.partialorder %v2120, 0.0
        %v2123 = vmul.f32 %v2119, 0.2
        %v2124 = vmul.f32 %v2120, 0.2
        %v2125 = vsel %vm2121, %v2119, %v2123
        %v2126 = vsel %vm2122, %v2120, %v2124
        %s2127 = scalar_lea.vmem %s190, 32 [#allocation7]
        %2128 = vst.msk [vmem:[%s2127] sm:$0xff] %vm885, %v2125
        %2129 = vst.msk [vmem:[%s2127 + $0x8] sm:$0xff] %vm885, %v2126
        %s2130 = sld [smem:[#allocation2 + $0x6c]]
        %v2131 = vstv %s2130
        %v2132 = vmul.f32 %v2131, %v253
        %v2133 = vmul.f32 %v2131, %v254
        %v2134 = vadd.f32 %v2132, 0.0
        %v2135 = vadd.f32 %v2133, 0.0
        %s2136 = sld [smem:[#allocation2 + $0x6d]]
        %v2137 = vstv %s2136
        %v2138 = vmul.f32 %v2137, %v253
        %v2139 = vmul.f32 %v2137, %v254
        %2142 = vrot.lane.b32.xlu0 %v2138, 127
        %v2143 = vpop.permute.xlu0 %2142
        %2144 = vrot.lane.b32.xlu0 %v2139, 127
        %v2145 = vpop.permute.xlu0 %2144
        %v2148 = vadd.f32 %v2134, %v2143
        %v2149 = vadd.f32 %v2135, %v2145
        %s2150 = sld [smem:[#allocation2 + $0x6e]]
        %v2151 = vstv %s2150
        %v2152 = vmul.f32 %v2151, %v253
        %v2153 = vmul.f32 %v2151, %v254
        %2156 = vrot.lane.b32.xlu0 %v2152, 126
        %v2157 = vpop.permute.xlu0 %2156
        %2158 = vrot.lane.b32.xlu0 %v2153, 126
        %v2159 = vpop.permute.xlu0 %2158
        %v2162 = vadd.f32 %v2148, %v2157
        %v2163 = vadd.f32 %v2149, %v2159
        %s2164 = sld [smem:[#allocation2 + $0x6f]]
        %v2165 = vstv %s2164
        %v2166 = vmul.f32 %v2165, %v253
        %v2167 = vmul.f32 %v2165, %v254
        %v2168 = vmul.f32 %v2165, %v255
        %v2172 = vrot.slane %v2166, 1
        %v2173 = vrot.slane %v2167, 1
        %v2174 = vsel %vm307, %v2172, %v2173
        %v2175 = vrot.slane %v2168, 1
        %v2176 = vsel %vm307, %v2173, %v2175
        %v2179 = vadd.f32 %v2162, %v2174
        %v2180 = vadd.f32 %v2163, %v2176
        %s2181 = sld [smem:[#allocation2 + $0x70]]
        %v2182 = vstv %s2181
        %v2183 = vmul.f32 %v2182, %v253
        %v2184 = vmul.f32 %v2182, %v254
        %v2185 = vmul.f32 %v2182, %v255
        %v2189 = vrot.slane %v2183, 1
        %v2190 = vrot.slane %v2184, 1
        %v2191 = vsel %vm307, %v2189, %v2190
        %v2192 = vrot.slane %v2185, 1
        %v2193 = vsel %vm307, %v2190, %v2192
        %2194 = vrot.lane.b32.xlu0 %v2191, 127
        %v2195 = vpop.permute.xlu0 %2194
        %2196 = vrot.lane.b32.xlu0 %v2193, 127
        %v2197 = vpop.permute.xlu0 %2196
        %v2200 = vadd.f32 %v2179, %v2195
        %v2201 = vadd.f32 %v2180, %v2197
        %s2202 = sld [smem:[#allocation2 + $0x71]]
        %v2203 = vstv %s2202
        %v2204 = vmul.f32 %v2203, %v253
        %v2205 = vmul.f32 %v2203, %v254
        %v2206 = vmul.f32 %v2203, %v255
        %v2210 = vrot.slane %v2204, 1
        %v2211 = vrot.slane %v2205, 1
        %v2212 = vsel %vm307, %v2210, %v2211
        %v2213 = vrot.slane %v2206, 1
        %v2214 = vsel %vm307, %v2211, %v2213
        %2215 = vrot.lane.b32.xlu0 %v2212, 126
        %v2216 = vpop.permute.xlu0 %2215
        %2217 = vrot.lane.b32.xlu0 %v2214, 126
        %v2218 = vpop.permute.xlu0 %2217
        %v2221 = vadd.f32 %v2200, %v2216
        %v2222 = vadd.f32 %v2201, %v2218
        %s2223 = sld [smem:[#allocation2 + $0x72]]
        %v2224 = vstv %s2223
        %v2225 = vmul.f32 %v2224, %v253
        %v2226 = vmul.f32 %v2224, %v254
        %v2227 = vmul.f32 %v2224, %v255
        %v2231 = vrot.slane %v2225, 2
        %v2232 = vrot.slane %v2226, 2
        %v2233 = vsel %vm367, %v2231, %v2232
        %v2234 = vrot.slane %v2227, 2
        %v2235 = vsel %vm367, %v2232, %v2234
        %v2238 = vadd.f32 %v2221, %v2233
        %v2239 = vadd.f32 %v2222, %v2235
        %s2240 = sld [smem:[#allocation2 + $0x73]]
        %v2241 = vstv %s2240
        %v2242 = vmul.f32 %v2241, %v253
        %v2243 = vmul.f32 %v2241, %v254
        %v2244 = vmul.f32 %v2241, %v255
        %v2248 = vrot.slane %v2242, 2
        %v2249 = vrot.slane %v2243, 2
        %v2250 = vsel %vm367, %v2248, %v2249
        %v2251 = vrot.slane %v2244, 2
        %v2252 = vsel %vm367, %v2249, %v2251
        %2253 = vrot.lane.b32.xlu0 %v2250, 127
        %v2254 = vpop.permute.xlu0 %2253
        %2255 = vrot.lane.b32.xlu0 %v2252, 127
        %v2256 = vpop.permute.xlu0 %2255
        %v2259 = vadd.f32 %v2238, %v2254
        %v2260 = vadd.f32 %v2239, %v2256
        %s2261 = sld [smem:[#allocation2 + $0x74]]
        %v2262 = vstv %s2261
        %v2263 = vmul.f32 %v2262, %v253
        %v2264 = vmul.f32 %v2262, %v254
        %v2265 = vmul.f32 %v2262, %v255
        %v2269 = vrot.slane %v2263, 2
        %v2270 = vrot.slane %v2264, 2
        %v2271 = vsel %vm367, %v2269, %v2270
        %v2272 = vrot.slane %v2265, 2
        %v2273 = vsel %vm367, %v2270, %v2272
        %2274 = vrot.lane.b32.xlu0 %v2271, 126
        %v2275 = vpop.permute.xlu0 %2274
        %2276 = vrot.lane.b32.xlu0 %v2273, 126
        %v2277 = vpop.permute.xlu0 %2276
        %v2280 = vadd.f32 %v2259, %v2275
        %v2281 = vadd.f32 %v2260, %v2277
        %s2282 = sld [smem:[#allocation2 + $0x75]]
        %v2283 = vstv %s2282
        %v2284 = vmul.f32 %v2283, %v256
        %v2285 = vmul.f32 %v2283, %v257
        %v2286 = vadd.f32 %v2280, %v2284
        %v2287 = vadd.f32 %v2281, %v2285
        %s2288 = sld [smem:[#allocation2 + $0x76]]
        %v2289 = vstv %s2288
        %v2290 = vmul.f32 %v2289, %v256
        %v2291 = vmul.f32 %v2289, %v257
        %2294 = vrot.lane.b32.xlu0 %v2290, 127
        %v2295 = vpop.permute.xlu0 %2294
        %2296 = vrot.lane.b32.xlu0 %v2291, 127
        %v2297 = vpop.permute.xlu0 %2296
        %v2300 = vadd.f32 %v2286, %v2295
        %v2301 = vadd.f32 %v2287, %v2297
        %s2302 = sld [smem:[#allocation2 + $0x77]]
        %v2303 = vstv %s2302
        %v2304 = vmul.f32 %v2303, %v256
        %v2305 = vmul.f32 %v2303, %v257
        %2308 = vrot.lane.b32.xlu0 %v2304, 126
        %v2309 = vpop.permute.xlu0 %2308
        %2310 = vrot.lane.b32.xlu0 %v2305, 126
        %v2311 = vpop.permute.xlu0 %2310
        %v2314 = vadd.f32 %v2300, %v2309
        %v2315 = vadd.f32 %v2301, %v2311
        %s2316 = sld [smem:[#allocation2 + $0x78]]
        %v2317 = vstv %s2316
        %v2318 = vmul.f32 %v2317, %v256
        %v2319 = vmul.f32 %v2317, %v257
        %v2320 = vmul.f32 %v2317, %v258
        %v2324 = vrot.slane %v2318, 1
        %v2325 = vrot.slane %v2319, 1
        %v2326 = vsel %vm307, %v2324, %v2325
        %v2327 = vrot.slane %v2320, 1
        %v2328 = vsel %vm307, %v2325, %v2327
        %v2331 = vadd.f32 %v2314, %v2326
        %v2332 = vadd.f32 %v2315, %v2328
        %s2333 = sld [smem:[#allocation2 + $0x79]]
        %v2334 = vstv %s2333
        %v2335 = vmul.f32 %v2334, %v256
        %v2336 = vmul.f32 %v2334, %v257
        %v2337 = vmul.f32 %v2334, %v258
        %v2341 = vrot.slane %v2335, 1
        %v2342 = vrot.slane %v2336, 1
        %v2343 = vsel %vm307, %v2341, %v2342
        %v2344 = vrot.slane %v2337, 1
        %v2345 = vsel %vm307, %v2342, %v2344
        %2346 = vrot.lane.b32.xlu0 %v2343, 127
        %v2347 = vpop.permute.xlu0 %2346
        %2348 = vrot.lane.b32.xlu0 %v2345, 127
        %v2349 = vpop.permute.xlu0 %2348
        %v2352 = vadd.f32 %v2331, %v2347
        %v2353 = vadd.f32 %v2332, %v2349
        %s2354 = sld [smem:[#allocation2 + $0x7a]]
        %v2355 = vstv %s2354
        %v2356 = vmul.f32 %v2355, %v256
        %v2357 = vmul.f32 %v2355, %v257
        %v2358 = vmul.f32 %v2355, %v258
        %v2362 = vrot.slane %v2356, 1
        %v2363 = vrot.slane %v2357, 1
        %v2364 = vsel %vm307, %v2362, %v2363
        %v2365 = vrot.slane %v2358, 1
        %v2366 = vsel %vm307, %v2363, %v2365
        %2367 = vrot.lane.b32.xlu0 %v2364, 126
        %v2368 = vpop.permute.xlu0 %2367
        %2369 = vrot.lane.b32.xlu0 %v2366, 126
        %v2370 = vpop.permute.xlu0 %2369
        %v2373 = vadd.f32 %v2352, %v2368
        %v2374 = vadd.f32 %v2353, %v2370
        %s2375 = sld [smem:[#allocation2 + $0x7b]]
        %v2376 = vstv %s2375
        %v2377 = vmul.f32 %v2376, %v256
        %v2378 = vmul.f32 %v2376, %v257
        %v2379 = vmul.f32 %v2376, %v258
        %v2383 = vrot.slane %v2377, 2
        %v2384 = vrot.slane %v2378, 2
        %v2385 = vsel %vm367, %v2383, %v2384
        %v2386 = vrot.slane %v2379, 2
        %v2387 = vsel %vm367, %v2384, %v2386
        %v2390 = vadd.f32 %v2373, %v2385
        %v2391 = vadd.f32 %v2374, %v2387
        %s2392 = sld [smem:[#allocation2 + $0x7c]]
        %v2393 = vstv %s2392
        %v2394 = vmul.f32 %v2393, %v256
        %v2395 = vmul.f32 %v2393, %v257
        %v2396 = vmul.f32 %v2393, %v258
        %v2400 = vrot.slane %v2394, 2
        %v2401 = vrot.slane %v2395, 2
        %v2402 = vsel %vm367, %v2400, %v2401
        %v2403 = vrot.slane %v2396, 2
        %v2404 = vsel %vm367, %v2401, %v2403
        %2405 = vrot.lane.b32.xlu0 %v2402, 127
        %v2406 = vpop.permute.xlu0 %2405
        %2407 = vrot.lane.b32.xlu0 %v2404, 127
        %v2408 = vpop.permute.xlu0 %2407
        %v2411 = vadd.f32 %v2390, %v2406
        %v2412 = vadd.f32 %v2391, %v2408
        %s2413 = sld [smem:[#allocation2 + $0x7d]]
        %v2414 = vstv %s2413
        %v2415 = vmul.f32 %v2414, %v256
        %v2416 = vmul.f32 %v2414, %v257
        %v2417 = vmul.f32 %v2414, %v258
        %v2421 = vrot.slane %v2415, 2
        %v2422 = vrot.slane %v2416, 2
        %v2423 = vsel %vm367, %v2421, %v2422
        %v2424 = vrot.slane %v2417, 2
        %v2425 = vsel %vm367, %v2422, %v2424
        %2426 = vrot.lane.b32.xlu0 %v2423, 126
        %v2427 = vpop.permute.xlu0 %2426
        %2428 = vrot.lane.b32.xlu0 %v2425, 126
        %v2429 = vpop.permute.xlu0 %2428
        %v2432 = vadd.f32 %v2411, %v2427
        %v2433 = vadd.f32 %v2412, %v2429
        %s2434 = sld [smem:[#allocation2 + $0x7e]]
        %v2435 = vstv %s2434
        %v2436 = vmul.f32 %v2435, %v259
        %v2437 = vmul.f32 %v2435, %v260
        %v2438 = vadd.f32 %v2432, %v2436
        %v2439 = vadd.f32 %v2433, %v2437
        %s2440 = sld [smem:[#allocation2 + $0x7f]]
        %v2441 = vstv %s2440
        %v2442 = vmul.f32 %v2441, %v259
        %v2443 = vmul.f32 %v2441, %v260
        %2446 = vrot.lane.b32.xlu0 %v2442, 127
        %v2447 = vpop.permute.xlu0 %2446
        %2448 = vrot.lane.b32.xlu0 %v2443, 127
        %v2449 = vpop.permute.xlu0 %2448
        %v2452 = vadd.f32 %v2438, %v2447
        %v2453 = vadd.f32 %v2439, %v2449
        %s2454 = sld [smem:[#allocation2 + $0x80]]
        %v2455 = vstv %s2454
        %v2456 = vmul.f32 %v2455, %v259
        %v2457 = vmul.f32 %v2455, %v260
        %2460 = vrot.lane.b32.xlu0 %v2456, 126
        %v2461 = vpop.permute.xlu0 %2460
        %2462 = vrot.lane.b32.xlu0 %v2457, 126
        %v2463 = vpop.permute.xlu0 %2462
        %v2466 = vadd.f32 %v2452, %v2461
        %v2467 = vadd.f32 %v2453, %v2463
        %s2468 = sld [smem:[#allocation2 + $0x81]]
        %v2469 = vstv %s2468
        %v2470 = vmul.f32 %v2469, %v259
        %v2471 = vmul.f32 %v2469, %v260
        %v2472 = vmul.f32 %v2469, %v261
        %v2476 = vrot.slane %v2470, 1
        %v2477 = vrot.slane %v2471, 1
        %v2478 = vsel %vm307, %v2476, %v2477
        %v2479 = vrot.slane %v2472, 1
        %v2480 = vsel %vm307, %v2477, %v2479
        %v2483 = vadd.f32 %v2466, %v2478
        %v2484 = vadd.f32 %v2467, %v2480
        %s2485 = sld [smem:[#allocation2 + $0x82]]
        %v2486 = vstv %s2485
        %v2487 = vmul.f32 %v2486, %v259
        %v2488 = vmul.f32 %v2486, %v260
        %v2489 = vmul.f32 %v2486, %v261
        %v2493 = vrot.slane %v2487, 1
        %v2494 = vrot.slane %v2488, 1
        %v2495 = vsel %vm307, %v2493, %v2494
        %v2496 = vrot.slane %v2489, 1
        %v2497 = vsel %vm307, %v2494, %v2496
        %2498 = vrot.lane.b32.xlu0 %v2495, 127
        %v2499 = vpop.permute.xlu0 %2498
        %2500 = vrot.lane.b32.xlu0 %v2497, 127
        %v2501 = vpop.permute.xlu0 %2500
        %v2504 = vadd.f32 %v2483, %v2499
        %v2505 = vadd.f32 %v2484, %v2501
        %s2506 = sld [smem:[#allocation2 + $0x83]]
        %v2507 = vstv %s2506
        %v2508 = vmul.f32 %v2507, %v259
        %v2509 = vmul.f32 %v2507, %v260
        %v2510 = vmul.f32 %v2507, %v261
        %v2514 = vrot.slane %v2508, 1
        %v2515 = vrot.slane %v2509, 1
        %v2516 = vsel %vm307, %v2514, %v2515
        %v2517 = vrot.slane %v2510, 1
        %v2518 = vsel %vm307, %v2515, %v2517
        %2519 = vrot.lane.b32.xlu0 %v2516, 126
        %v2520 = vpop.permute.xlu0 %2519
        %2521 = vrot.lane.b32.xlu0 %v2518, 126
        %v2522 = vpop.permute.xlu0 %2521
        %v2525 = vadd.f32 %v2504, %v2520
        %v2526 = vadd.f32 %v2505, %v2522
        %s2527 = sld [smem:[#allocation2 + $0x84]]
        %v2528 = vstv %s2527
        %v2529 = vmul.f32 %v2528, %v259
        %v2530 = vmul.f32 %v2528, %v260
        %v2531 = vmul.f32 %v2528, %v261
        %v2535 = vrot.slane %v2529, 2
        %v2536 = vrot.slane %v2530, 2
        %v2537 = vsel %vm367, %v2535, %v2536
        %v2538 = vrot.slane %v2531, 2
        %v2539 = vsel %vm367, %v2536, %v2538
        %v2542 = vadd.f32 %v2525, %v2537
        %v2543 = vadd.f32 %v2526, %v2539
        %s2544 = sld [smem:[#allocation2 + $0x85]]
        %v2545 = vstv %s2544
        %v2546 = vmul.f32 %v2545, %v259
        %v2547 = vmul.f32 %v2545, %v260
        %v2548 = vmul.f32 %v2545, %v261
        %v2552 = vrot.slane %v2546, 2
        %v2553 = vrot.slane %v2547, 2
        %v2554 = vsel %vm367, %v2552, %v2553
        %v2555 = vrot.slane %v2548, 2
        %v2556 = vsel %vm367, %v2553, %v2555
        %2557 = vrot.lane.b32.xlu0 %v2554, 127
        %v2558 = vpop.permute.xlu0 %2557
        %2559 = vrot.lane.b32.xlu0 %v2556, 127
        %v2560 = vpop.permute.xlu0 %2559
        %v2563 = vadd.f32 %v2542, %v2558
        %v2564 = vadd.f32 %v2543, %v2560
        %s2565 = sld [smem:[#allocation2 + $0x86]]
        %v2566 = vstv %s2565
        %v2567 = vmul.f32 %v2566, %v259
        %v2568 = vmul.f32 %v2566, %v260
        %v2569 = vmul.f32 %v2566, %v261
        %v2573 = vrot.slane %v2567, 2
        %v2574 = vrot.slane %v2568, 2
        %v2575 = vsel %vm367, %v2573, %v2574
        %v2576 = vrot.slane %v2569, 2
        %v2577 = vsel %vm367, %v2574, %v2576
        %2578 = vrot.lane.b32.xlu0 %v2575, 126
        %v2579 = vpop.permute.xlu0 %2578
        %2580 = vrot.lane.b32.xlu0 %v2577, 126
        %v2581 = vpop.permute.xlu0 %2580
        %v2584 = vadd.f32 %v2563, %v2579
        %v2585 = vadd.f32 %v2564, %v2581
        %s2586 = sld [smem:[#allocation2 + $0x87]]
        %v2587 = vstv %s2586
        %v2588 = vmul.f32 %v2587, %v262
        %v2589 = vmul.f32 %v2587, %v263
        %v2590 = vadd.f32 %v2584, %v2588
        %v2591 = vadd.f32 %v2585, %v2589
        %s2592 = sld [smem:[#allocation2 + $0x88]]
        %v2593 = vstv %s2592
        %v2594 = vmul.f32 %v2593, %v262
        %v2595 = vmul.f32 %v2593, %v263
        %2598 = vrot.lane.b32.xlu0 %v2594, 127
        %v2599 = vpop.permute.xlu0 %2598
        %2600 = vrot.lane.b32.xlu0 %v2595, 127
        %v2601 = vpop.permute.xlu0 %2600
        %v2604 = vadd.f32 %v2590, %v2599
        %v2605 = vadd.f32 %v2591, %v2601
        %s2606 = sld [smem:[#allocation2 + $0x89]]
        %v2607 = vstv %s2606
        %v2608 = vmul.f32 %v2607, %v262
        %v2609 = vmul.f32 %v2607, %v263
        %2612 = vrot.lane.b32.xlu0 %v2608, 126
        %v2613 = vpop.permute.xlu0 %2612
        %2614 = vrot.lane.b32.xlu0 %v2609, 126
        %v2615 = vpop.permute.xlu0 %2614
        %v2618 = vadd.f32 %v2604, %v2613
        %v2619 = vadd.f32 %v2605, %v2615
        %s2620 = sld [smem:[#allocation2 + $0x8a]]
        %v2621 = vstv %s2620
        %v2622 = vmul.f32 %v2621, %v262
        %v2623 = vmul.f32 %v2621, %v263
        %v2624 = vmul.f32 %v2621, %v264
        %v2628 = vrot.slane %v2622, 1
        %v2629 = vrot.slane %v2623, 1
        %v2630 = vsel %vm307, %v2628, %v2629
        %v2631 = vrot.slane %v2624, 1
        %v2632 = vsel %vm307, %v2629, %v2631
        %v2635 = vadd.f32 %v2618, %v2630
        %v2636 = vadd.f32 %v2619, %v2632
        %s2637 = sld [smem:[#allocation2 + $0x8b]]
        %v2638 = vstv %s2637
        %v2639 = vmul.f32 %v2638, %v262
        %v2640 = vmul.f32 %v2638, %v263
        %v2641 = vmul.f32 %v2638, %v264
        %v2645 = vrot.slane %v2639, 1
        %v2646 = vrot.slane %v2640, 1
        %v2647 = vsel %vm307, %v2645, %v2646
        %v2648 = vrot.slane %v2641, 1
        %v2649 = vsel %vm307, %v2646, %v2648
        %2650 = vrot.lane.b32.xlu0 %v2647, 127
        %v2651 = vpop.permute.xlu0 %2650
        %2652 = vrot.lane.b32.xlu0 %v2649, 127
        %v2653 = vpop.permute.xlu0 %2652
        %v2656 = vadd.f32 %v2635, %v2651
        %v2657 = vadd.f32 %v2636, %v2653
        %s2658 = sld [smem:[#allocation2 + $0x8c]]
        %v2659 = vstv %s2658
        %v2660 = vmul.f32 %v2659, %v262
        %v2661 = vmul.f32 %v2659, %v263
        %v2662 = vmul.f32 %v2659, %v264
        %v2666 = vrot.slane %v2660, 1
        %v2667 = vrot.slane %v2661, 1
        %v2668 = vsel %vm307, %v2666, %v2667
        %v2669 = vrot.slane %v2662, 1
        %v2670 = vsel %vm307, %v2667, %v2669
        %2671 = vrot.lane.b32.xlu0 %v2668, 126
        %v2672 = vpop.permute.xlu0 %2671
        %2673 = vrot.lane.b32.xlu0 %v2670, 126
        %v2674 = vpop.permute.xlu0 %2673
        %v2677 = vadd.f32 %v2656, %v2672
        %v2678 = vadd.f32 %v2657, %v2674
        %s2679 = sld [smem:[#allocation2 + $0x8d]]
        %v2680 = vstv %s2679
        %v2681 = vmul.f32 %v2680, %v262
        %v2682 = vmul.f32 %v2680, %v263
        %v2683 = vmul.f32 %v2680, %v264
        %v2687 = vrot.slane %v2681, 2
        %v2688 = vrot.slane %v2682, 2
        %v2689 = vsel %vm367, %v2687, %v2688
        %v2690 = vrot.slane %v2683, 2
        %v2691 = vsel %vm367, %v2688, %v2690
        %v2694 = vadd.f32 %v2677, %v2689
        %v2695 = vadd.f32 %v2678, %v2691
        %s2696 = sld [smem:[#allocation2 + $0x8e]]
        %v2697 = vstv %s2696
        %v2698 = vmul.f32 %v2697, %v262
        %v2699 = vmul.f32 %v2697, %v263
        %v2700 = vmul.f32 %v2697, %v264
        %v2704 = vrot.slane %v2698, 2
        %v2705 = vrot.slane %v2699, 2
        %v2706 = vsel %vm367, %v2704, %v2705
        %v2707 = vrot.slane %v2700, 2
        %v2708 = vsel %vm367, %v2705, %v2707
        %2709 = vrot.lane.b32.xlu0 %v2706, 127
        %v2710 = vpop.permute.xlu0 %2709
        %2711 = vrot.lane.b32.xlu0 %v2708, 127
        %v2712 = vpop.permute.xlu0 %2711
        %v2715 = vadd.f32 %v2694, %v2710
        %v2716 = vadd.f32 %v2695, %v2712
        %s2717 = sld [smem:[#allocation2 + $0x8f]]
        %v2718 = vstv %s2717
        %v2719 = vmul.f32 %v2718, %v262
        %v2720 = vmul.f32 %v2718, %v263
        %v2721 = vmul.f32 %v2718, %v264
        %v2725 = vrot.slane %v2719, 2
        %v2726 = vrot.slane %v2720, 2
        %v2727 = vsel %vm367, %v2725, %v2726
        %v2728 = vrot.slane %v2721, 2
        %v2729 = vsel %vm367, %v2726, %v2728
        %2730 = vrot.lane.b32.xlu0 %v2727, 126
        %v2731 = vpop.permute.xlu0 %2730
        %2732 = vrot.lane.b32.xlu0 %v2729, 126
        %v2733 = vpop.permute.xlu0 %2732
        %v2736 = vadd.f32 %v2715, %v2731
        %v2737 = vadd.f32 %v2716, %v2733
        %s2738 = sld [smem:[#allocation5 + $0x3]]
        %v2739 = vstv %s2738
        %v2740 = vadd.f32 %v2736, %v2739
        %v2741 = vadd.f32 %v2737, %v2739
        %vm2742 = vcmp.ge.f32.partialorder %v2740, 0.0
        %vm2743 = vcmp.ge.f32.partialorder %v2741, 0.0
        %v2744 = vmul.f32 %v2740, 0.2
        %v2745 = vmul.f32 %v2741, 0.2
        %v2746 = vsel %vm2742, %v2740, %v2744
        %v2747 = vsel %vm2743, %v2741, %v2745
        %s2748 = scalar_lea.vmem %s190, 48 [#allocation7]
        %2749 = vst.msk [vmem:[%s2748] sm:$0xff] %vm885, %v2746
        %2750 = vst.msk [vmem:[%s2748 + $0x8] sm:$0xff] %vm885, %v2747
        %s2751 = sand.u32 %s95, 1
        %s2752 = scalar_lea.sflag [#allocation3], %s2751
        %s2753 = sand.u32 %s95, 1
        %s2754 = smul.addr %s2753, 64
        %s2755 = scalar_lea.vmem [#allocation7], %s2754
        // Predicated region
        $region41: #{tpu_custom_call.1} parent=31 // pred_check
          %p2756 = pneg %p105
        $region42: #{tpu_custom_call.1} parent=31 // pred_check_branch
          %2758 = sbr.rel (%p2756) target = $region44
        $region43: #{tpu_custom_call.1} parent=31 // pred_region
          %s2760 = ssub.s32 1024, 1024
          %2761 = vsyncadd %s2752, %s2760
          %s2762 = smul.addr %s19, 8
          %s2763 = smul.addr %s2762, 128
          %s2764 = scalar_lea.hbm %s3, %s2763
          %s2765 = sshll.u32 %s2755, 4
          %s2766 = int_to_ptr.vmem [resolvable:$true] %s2765
          %2771 = dma.vmem_to_hbm [thread:$0]  %s2766, 1024, %s2764, %s2752, 128, 128, 8
        $region44: #{tpu_custom_call.1} parent=31 // pred_fallthru
          _
      $region32: #{tpu_custom_call.1} parent=5 // pred_fallthru
        _
      %p2772 = scmp.le.s32.totalorder 2, %s14
      // Predicated region
      $region45: #{tpu_custom_call.1} parent=5 // pred_check
        %p2773 = pneg %p2772
      $region46: #{tpu_custom_call.1} parent=5 // pred_check_branch
        %2775 = sbr.rel (%p2773) target = $region48
      $region47: #{tpu_custom_call.1} parent=5 // pred_region
        %s2776 = ssub.s32 %s14, 2
        // Predicated region
        $region49: #{tpu_custom_call.1} parent=47 // pred_check
          %p2777 = pneg %p111
        $region50: #{tpu_custom_call.1} parent=47 // pred_check_branch
          %2779 = sbr.rel (%p2777) target = $region52
        $region51: #{tpu_custom_call.1} parent=47 // pred_region
          %s2780 = sand.u32 %s96, 1
          %s2781 = scalar_lea.sflag [#allocation3], %s2780
          %s2782 = sand.u32 %s96, 1
          %s2783 = smul.addr %s2782, 64
          %s2784 = scalar_lea.vmem [#allocation7], %s2783
          %2785 = dma.done %s2781, 1024
        $region52: #{tpu_custom_call.1} parent=47 // pred_fallthru
          _
      $region48: #{tpu_custom_call.1} parent=5 // pred_fallthru
        _
    $region6: #{tpu_custom_call.1} parent=1 // loop_footer
      %s18 = sadd.s32 1, %s14
    $region7: #{tpu_custom_call.1} parent=1 // loop_footer_branch
      %13 = sbr.rel target = $region3
    $region8: #{tpu_custom_call.1} parent=1 // loop_exit
      _
    %2786 = vsyncpa [#allocation3], 1
    %s2787 = scalar_lea.sflag [#allocation3], 1
    %2788 = vsyncpa %s2787, 1
    %2789 = vsyncpa [#allocation4], 1
    %s2790 = scalar_lea.sflag [#allocation4], 1
    %2791 = vsyncpa %s2790, 1
    %2792 = vsyncpa [#allocation6], 1

</llo_original>
